<compile_context>
chip_gen: v7x
topology: tpu7x:2x2x1
jax: 0.10.0
libtpu: 0.0.40
codegen_flags: <defaults>
</compile_context>

<pallas_src>
import math
import jax
import jax.numpy as jnp
from jax.experimental import pallas as pl
from jax.experimental.pallas import tpu as pltpu

# ----- small synthetic BERT-like config (bert-base is far too big for a demo) -----
VOCAB = 100       # vocab size
TYPE_VOCAB = 2
MAX_POS = 16
B = 2             # batch
S = 8             # sequence length
H = 32            # hidden size
NH = 4            # attention heads
HD = H // NH      # head dim
FFN = 64          # intermediate size
L = 2             # encoder layers
C = 20            # num topic labels (matches nn.Linear(hidden, 20))
LN_EPS = 1e-12
BS = B * S
G = NH * B        # batched-attention group count (head-major, batch-minor)

CDT = jnp.bfloat16   # MXU compute dtype (accumulation kept in f32)


def _layernorm(x, g, b):
    mu = jnp.mean(x, axis=-1, keepdims=True)
    var = jnp.mean((x - mu) ** 2, axis=-1, keepdims=True)
    return (x - mu) * jax.lax.rsqrt(var + LN_EPS) * g + b


def _gelu(x):
    # TODO(synk): BERT uses exact erf-GELU; tanh-approximate GELU is used here for a
    # robust TPU lowering (numerically very close).
    return jax.nn.gelu(x, approximate=True)


def _softmax_kernel(x):
    """Stable softmax; reciprocal goes to the (otherwise idle) EUP slot."""
    m = jnp.max(x, axis=-1, keepdims=True)
    e = jnp.exp(x - m)
    return e * pl.reciprocal(jnp.sum(e, axis=-1, keepdims=True), approx=True)


def _softmax_ref(x):
    m = jnp.max(x, axis=-1, keepdims=True)
    e = jnp.exp(x - m)
    return e / jnp.sum(e, axis=-1, keepdims=True)


def _mm(a, w_bf16):
    """bf16 MXU matmul with f32 accumulation; weight is already bf16 (prepped)."""
    return jnp.dot(a.astype(CDT), w_bf16, preferred_element_type=jnp.float32)


def _split_heads(t):
    """(BS, H) -> (NH*B, S, HD) with one reshape+transpose.

    (BS, NH, HD) --transpose(1,0,2)--> (NH, BS, HD); the final reshape to
    (NH*B, S, HD) is a row-major identity split of the BS dim, so group index
    g = h*B + b.
    """
    return jnp.transpose(t.reshape(BS, NH, HD), (1, 0, 2)).reshape(G, S, HD)


def _merge_heads(t):
    """(NH*B, S, HD) -> (BS, H); inverse of _split_heads (one transpose + reshape)."""
    return jnp.transpose(t.reshape(NH, BS, HD), (1, 0, 2)).reshape(BS, H)


def bert_topic_kernel(x_ref, bias_ref,
                      emb_g_ref, emb_b_ref,
                      wqkv_ref, bqkv_ref, wo_ref, bo_ref,
                      ln1_g_ref, ln1_b_ref,
                      w1_ref, b1_ref, w2_ref, b2_ref,
                      ln2_g_ref, ln2_b_ref,
                      pool_w_ref, pool_b_ref, fc_w_ref, fc_b_ref,
                      out_ref):
    # Embedding layernorm over the whole (B*S, H) slab (no per-batch loop).
    x = _layernorm(x_ref[...], emb_g_ref[...], emb_b_ref[...])          # (BS, H) f32

    # Key-padding additive bias per (head, batch) group; broadcast hoisted out of the
    # layer loop.  Shape (G, 1, S), broadcasts against (G, S, S) scores.
    bias = bias_ref[...]

    # TODO(synk): at larger L, move layers onto a grid axis / fori_loop instead of a
    # static unroll so live ranges stay bounded.  Harmless at L = 2.
    for l in range(L):                                                  # static, L = 2
        # --- self-attention ---
        # Fused QKV: one (BS,H)@(H,3H) bf16 MXU matmul (1/sqrt(HD) pre-folded into the
        # Q columns at parameter-prep time).
        qkv = _mm(x, wqkv_ref[l]) + bqkv_ref[l]                         # (BS, 3H) f32
        q = qkv[:, 0 * H:1 * H]
        k = qkv[:, 1 * H:2 * H]
        v = qkv[:, 2 * H:3 * H]

        qh = _split_heads(q)                                            # (G, S, HD)
        kh = _split_heads(k)
        vh = _split_heads(v)

        # Batched per-(batch,head) attention: only B*S^2 scores per head.
        s = jnp.einsum('gqd,gkd->gqk', qh.astype(CDT), kh.astype(CDT),
                       preferred_element_type=jnp.float32) + bias       # (G, S, S)
        p = _softmax_kernel(s)                                          # f32 (exact mask)
        ctx = jnp.einsum('gqk,gkd->gqd', p.astype(CDT), vh.astype(CDT),
                         preferred_element_type=jnp.float32)            # (G, S, HD)
        ctx = _merge_heads(ctx)                                         # (BS, H)

        attn_out = _mm(ctx, wo_ref[l]) + bo_ref[l]
        x = _layernorm(x + attn_out, ln1_g_ref[l], ln1_b_ref[l])

        # --- feed-forward ---
        hmid = _gelu(_mm(x, w1_ref[l]) + b1_ref[l])                     # (BS, FFN)
        ffn_out = _mm(hmid, w2_ref[l]) + b2_ref[l]                      # (BS, H)
        x = _layernorm(x + ffn_out, ln2_g_ref[l], ln2_b_ref[l])

    # Pooler + classifier: single row-select of the [CLS] rows into a (B, H) slab,
    # one tanh + two matmuls, one (B, C) store.
    cls = x.reshape(B, S, H)[:, 0, :]                                   # (B, H)
    pooled = jnp.tanh(_mm(cls, pool_w_ref[...]) + pool_b_ref[...])      # (B, H)
    out_ref[...] = _mm(pooled, fc_w_ref[...]) + fc_b_ref[...]           # (B, C)


def init_params(key):
    ks = jax.random.split(key, 16)

    def n(k, shape, scale=0.02):
        return (scale * jax.random.normal(k, shape)).astype(jnp.float32)

    return dict(
        word_emb=n(ks[0], (VOCAB, H)),
        pos_emb=n(ks[1], (MAX_POS, H)),
        type_emb=n(ks[2], (TYPE_VOCAB, H)),
        emb_g=jnp.ones((1, H), jnp.float32),
        emb_b=jnp.zeros((1, H), jnp.float32),
        # Fused QKV: columns [0:H]=Wq, [H:2H]=Wk, [2H:3H]=Wv (heads contiguous inside).
        wqkv=n(ks[3], (L, H, 3 * H)), bqkv=n(ks[4], (L, 1, 3 * H)),
        wo=n(ks[5], (L, H, H)),       bo=n(ks[6], (L, 1, H)),
        ln1_g=jnp.ones((L, 1, H), jnp.float32),
        ln1_b=jnp.zeros((L, 1, H), jnp.float32),
        w1=n(ks[7], (L, H, FFN)),     b1=n(ks[8], (L, 1, FFN)),
        w2=n(ks[9], (L, FFN, H)),     b2=n(ks[10], (L, 1, H)),
        ln2_g=jnp.ones((L, 1, H), jnp.float32),
        ln2_b=jnp.zeros((L, 1, H), jnp.float32),
        pool_w=n(ks[11], (H, H)),     pool_b=n(ks[12], (1, H)),
        fc_w=n(ks[13], (H, C)),       fc_b=n(ks[14], (1, C)),
    )


def prepare_params(params):
    """One-time parameter transform for the kernel:
       * fold 1/sqrt(HD) into the Q columns of wqkv / bqkv (f32, then cast),
       * convert all matmul weight matrices to bf16 (halves weight DMA, removes
         per-layer in-kernel casts). Biases / LN params stay f32."""
    scale = 1.0 / math.sqrt(HD)
    wqkv = params['wqkv'].at[:, :, :H].multiply(scale)
    bqkv = params['bqkv'].at[:, :, :H].multiply(scale)
    p = dict(params)
    p['wqkv'] = wqkv.astype(CDT)
    p['bqkv'] = bqkv
    p['wo'] = params['wo'].astype(CDT)
    p['w1'] = params['w1'].astype(CDT)
    p['w2'] = params['w2'].astype(CDT)
    p['pool_w'] = params['pool_w'].astype(CDT)
    p['fc_w'] = params['fc_w'].astype(CDT)
    return p


def _embed(input_ids, params):
    pos_ids = jnp.arange(S)
    return (params['word_emb'][input_ids]
            + params['pos_emb'][pos_ids][None, :, :]
            + params['type_emb'][0][None, None, :])


def _attention_bias(attention_mask):
    """Additive key-padding bias per (head, batch) group: (NH*B, 1, S), g = h*B + b."""
    key_bias = (1.0 - attention_mask.astype(jnp.float32)) * (-1e9)      # (B, S)
    return jnp.tile(key_bias, (NH, 1)).reshape(G, 1, S)


@jax.jit
def topic_model_forward(input_ids, attention_mask, prepped):
    emb = _embed(input_ids, prepped)                    # (B, S, H) — gather glue in JAX
    x = emb.reshape(BS, H).astype(jnp.float32)          # (BS, H) slab
    bias = _attention_bias(attention_mask)              # (G, 1, S) — mask glue in JAX

    args = (x, bias, prepped['emb_g'], prepped['emb_b'],
            prepped['wqkv'], prepped['bqkv'], prepped['wo'], prepped['bo'],
            prepped['ln1_g'], prepped['ln1_b'],
            prepped['w1'], prepped['b1'], prepped['w2'], prepped['b2'],
            prepped['ln2_g'], prepped['ln2_b'],
            prepped['pool_w'], prepped['pool_b'],
            prepped['fc_w'], prepped['fc_b'])

    vspec = pl.BlockSpec(memory_space=pltpu.MemorySpace.VMEM)
    return pl.pallas_call(
        bert_topic_kernel,
        out_shape=jax.ShapeDtypeStruct((B, C), jnp.float32),
        in_specs=[vspec] * len(args),
        out_specs=vspec,
    )(*args)


def reference_forward(input_ids, attention_mask, params):
    """Pure-JAX f32 reference mirroring the model math (per-batch, per-head loops)."""
    emb = _embed(input_ids, params)
    mask = attention_mask.astype(jnp.float32)
    scale = 1.0 / math.sqrt(HD)
    outs = []
    for b in range(B):
        x = _layernorm(emb[b], params['emb_g'], params['emb_b'])
        bias = (1.0 - mask[b:b + 1, :]) * (-1e9)                         # (1, S)
        for l in range(L):
            qkv = x @ params['wqkv'][l] + params['bqkv'][l]
            q = qkv[:, :H] * scale
            k = qkv[:, H:2 * H]
            v = qkv[:, 2 * H:]
            heads = []
            for h in range(NH):
                lo, hi = h * HD, (h + 1) * HD
                s = q[:, lo:hi] @ k[:, lo:hi].T + bias
                heads.append(_softmax_ref(s) @ v[:, lo:hi])
            ctx = jnp.concatenate(heads, axis=-1)
            x = _layernorm(x + ctx @ params['wo'][l] + params['bo'][l],
                           params['ln1_g'][l], params['ln1_b'][l])
            hmid = _gelu(x @ params['w1'][l] + params['b1'][l])
            x = _layernorm(x + hmid @ params['w2'][l] + params['b2'][l],
                           params['ln2_g'][l], params['ln2_b'][l])
        pooled = jnp.tanh(x[0:1, :] @ params['pool_w'] + params['pool_b'])
        outs.append(pooled @ params['fc_w'] + params['fc_b'])
    return jnp.concatenate(outs, axis=0)


if __name__ == "__main__":
    key = jax.random.PRNGKey(0)
    k_param, k_ids = jax.random.split(key)
    params = init_params(k_param)
    prepped = prepare_params(params)

    input_ids = jax.random.randint(k_ids, (B, S), 0, VOCAB, dtype=jnp.int32)
    attention_mask = jnp.array([[1, 1, 1, 1, 1, 1, 1, 1],
                                [1, 1, 1, 1, 1, 1, 0, 0]], dtype=jnp.int32)

    logits = topic_model_forward(input_ids, attention_mask, prepped)
    logits = jax.block_until_ready(logits)

    ref = reference_forward(input_ids, attention_mask, params)
    assert logits.shape == (B, C), logits.shape
    assert bool(jnp.all(jnp.isfinite(logits)))
    assert bool(jnp.allclose(logits, ref, atol=5e-2, rtol=5e-2)), (
        f"max abs diff {float(jnp.max(jnp.abs(logits - ref)))}")

    print("KERNEL_OK")
</pallas_src>

<mosaic_0001>
module attributes {stable_mosaic.version = 11 : i64} {
  func.func @bert_topic_kernel(%arg0: memref<16x32xf32, #tpu.memory_space<vmem>>, %arg1: memref<8x1x8xf32, #tpu.memory_space<vmem>>, %arg2: memref<1x32xf32, #tpu.memory_space<vmem>>, %arg3: memref<1x32xf32, #tpu.memory_space<vmem>>, %arg4: memref<2x32x96xbf16, #tpu.memory_space<vmem>>, %arg5: memref<2x1x96xf32, #tpu.memory_space<vmem>>, %arg6: memref<2x32x32xbf16, #tpu.memory_space<vmem>>, %arg7: memref<2x1x32xf32, #tpu.memory_space<vmem>>, %arg8: memref<2x1x32xf32, #tpu.memory_space<vmem>>, %arg9: memref<2x1x32xf32, #tpu.memory_space<vmem>>, %arg10: memref<2x32x64xbf16, #tpu.memory_space<vmem>>, %arg11: memref<2x1x64xf32, #tpu.memory_space<vmem>>, %arg12: memref<2x64x32xbf16, #tpu.memory_space<vmem>>, %arg13: memref<2x1x32xf32, #tpu.memory_space<vmem>>, %arg14: memref<2x1x32xf32, #tpu.memory_space<vmem>>, %arg15: memref<2x1x32xf32, #tpu.memory_space<vmem>>, %arg16: memref<32x32xbf16, #tpu.memory_space<vmem>>, %arg17: memref<1x32xf32, #tpu.memory_space<vmem>>, %arg18: memref<32x20xbf16, #tpu.memory_space<vmem>>, %arg19: memref<1x20xf32, #tpu.memory_space<vmem>>, %arg20: memref<2x20xf32, #tpu.memory_space<vmem>>) attributes {dimension_semantics = [], scalar_prefetch = 0 : i64, scratch_operands = 0 : i64, tpu.core_type = #tpu.core_type<tc>} {
    %c0 = arith.constant 0 : index
    %c0_0 = arith.constant 0 : index
    %0 = vector.load %arg0[%c0, %c0_0] : memref<16x32xf32, #tpu.memory_space<vmem>>, vector<16x32xf32>
    %c0_1 = arith.constant 0 : index
    %c0_2 = arith.constant 0 : index
    %1 = vector.load %arg2[%c0_1, %c0_2] : memref<1x32xf32, #tpu.memory_space<vmem>>, vector<1x32xf32>
    %c0_3 = arith.constant 0 : index
    %c0_4 = arith.constant 0 : index
    %2 = vector.load %arg3[%c0_3, %c0_4] : memref<1x32xf32, #tpu.memory_space<vmem>>, vector<1x32xf32>
    %cst = arith.constant dense<0.000000e+00> : vector<16xf32>
    %3 = vector.multi_reduction <add>, %0, %cst [1] : vector<16x32xf32> to vector<16xf32>
    %4 = vector.shape_cast %3 : vector<16xf32> to vector<16x1xf32>
    %cst_5 = arith.constant 3.200000e+01 : f32
    %5 = vector.broadcast %cst_5 : f32 to vector<16x1xf32>
    %6 = arith.divf %4, %5 : vector<16x1xf32>
    %7 = vector.broadcast %6 : vector<16x1xf32> to vector<16x32xf32>
    %8 = arith.subf %0, %7 : vector<16x32xf32>
    %9 = arith.mulf %8, %8 : vector<16x32xf32>
    %cst_6 = arith.constant dense<0.000000e+00> : vector<16xf32>
    %10 = vector.multi_reduction <add>, %9, %cst_6 [1] : vector<16x32xf32> to vector<16xf32>
    %11 = vector.shape_cast %10 : vector<16xf32> to vector<16x1xf32>
    %cst_7 = arith.constant 3.200000e+01 : f32
    %12 = vector.broadcast %cst_7 : f32 to vector<16x1xf32>
    %13 = arith.divf %11, %12 : vector<16x1xf32>
    %14 = vector.broadcast %6 : vector<16x1xf32> to vector<16x32xf32>
    %15 = arith.subf %0, %14 : vector<16x32xf32>
    %cst_8 = arith.constant 9.99999996E-13 : f32
    %16 = vector.broadcast %cst_8 : f32 to vector<16x1xf32>
    %17 = arith.addf %13, %16 : vector<16x1xf32>
    %18 = math.rsqrt %17 : vector<16x1xf32>
    %19 = vector.broadcast %18 : vector<16x1xf32> to vector<16x32xf32>
    %20 = arith.mulf %15, %19 : vector<16x32xf32>
    %21 = vector.broadcast %1 : vector<1x32xf32> to vector<16x32xf32>
    %22 = arith.mulf %20, %21 : vector<16x32xf32>
    %23 = vector.broadcast %2 : vector<1x32xf32> to vector<16x32xf32>
    %24 = arith.addf %22, %23 : vector<16x32xf32>
    %c0_9 = arith.constant 0 : index
    %c0_10 = arith.constant 0 : index
    %c0_11 = arith.constant 0 : index
    %25 = vector.load %arg1[%c0_9, %c0_10, %c0_11] : memref<8x1x8xf32, #tpu.memory_space<vmem>>, vector<8x1x8xf32>
    %c0_12 = arith.constant 0 : index
    %c0_13 = arith.constant 0 : index
    %c0_14 = arith.constant 0 : index
    %26 = vector.load %arg4[%c0_12, %c0_13, %c0_14] : memref<2x32x96xbf16, #tpu.memory_space<vmem>>, vector<1x32x96xbf16>
    %27 = vector.shape_cast %26 : vector<1x32x96xbf16> to vector<32x96xbf16>
    %28 = arith.truncf %24 : vector<16x32xf32> to vector<16x32xbf16>
    %cst_15 = arith.constant dense<0.000000e+00> : vector<16x96xf32>
    %29 = tpu.matmul %28, %27, %cst_15 {dimension_numbers = #tpu.dot_dimension_numbers<[1], [0], [0], [1], [0, 0, 1, 1], [], []>} : vector<16x32xbf16>, vector<32x96xbf16>, vector<16x96xf32> -> vector<16x96xf32>
    %c0_16 = arith.constant 0 : index
    %c0_17 = arith.constant 0 : index
    %c0_18 = arith.constant 0 : index
    %30 = vector.load %arg5[%c0_16, %c0_17, %c0_18] : memref<2x1x96xf32, #tpu.memory_space<vmem>>, vector<1x1x96xf32>
    %31 = vector.shape_cast %30 : vector<1x1x96xf32> to vector<1x96xf32>
    %32 = vector.broadcast %31 : vector<1x96xf32> to vector<16x96xf32>
    %33 = arith.addf %29, %32 : vector<16x96xf32>
    %34 = vector.extract_strided_slice %33 {offsets = [0, 0], sizes = [16, 32], strides = [1, 1]} : vector<16x96xf32> to vector<16x32xf32>
    %35 = vector.extract_strided_slice %33 {offsets = [0, 32], sizes = [16, 32], strides = [1, 1]} : vector<16x96xf32> to vector<16x32xf32>
    %36 = vector.extract_strided_slice %33 {offsets = [0, 64], sizes = [16, 32], strides = [1, 1]} : vector<16x96xf32> to vector<16x32xf32>
    %37 = vector.shape_cast %34 : vector<16x32xf32> to vector<16x4x8xf32>
    %38 = tpu.transpose %37, [1, 0, 2] : vector<16x4x8xf32> -> vector<4x16x8xf32>
    %39 = vector.shape_cast %38 : vector<4x16x8xf32> to vector<8x8x8xf32>
    %40 = vector.shape_cast %35 : vector<16x32xf32> to vector<16x4x8xf32>
    %41 = tpu.transpose %40, [1, 0, 2] : vector<16x4x8xf32> -> vector<4x16x8xf32>
    %42 = vector.shape_cast %41 : vector<4x16x8xf32> to vector<8x8x8xf32>
    %43 = vector.shape_cast %36 : vector<16x32xf32> to vector<16x4x8xf32>
    %44 = tpu.transpose %43, [1, 0, 2] : vector<16x4x8xf32> -> vector<4x16x8xf32>
    %45 = vector.shape_cast %44 : vector<4x16x8xf32> to vector<8x8x8xf32>
    %46 = arith.truncf %39 : vector<8x8x8xf32> to vector<8x8x8xbf16>
    %47 = arith.truncf %42 : vector<8x8x8xf32> to vector<8x8x8xbf16>
    "tpu.trace_start"() <{level = 10 : i32, message = "gqd,gkd->gqk"}> : () -> ()
    %cst_19 = arith.constant dense<0.000000e+00> : vector<8x8x8xf32>
    %48 = tpu.matmul %46, %47, %cst_19 {dimension_numbers = #tpu.dot_dimension_numbers<[2], [2], [1], [1], [0, 0, 0, 1, 1, 1], [0], [0]>} : vector<8x8x8xbf16>, vector<8x8x8xbf16>, vector<8x8x8xf32> -> vector<8x8x8xf32>
    "tpu.trace_stop"() : () -> ()
    %49 = vector.broadcast %25 : vector<8x1x8xf32> to vector<8x8x8xf32>
    %50 = arith.addf %48, %49 : vector<8x8x8xf32>
    %cst_20 = arith.constant dense<0xFF800000> : vector<8x8xf32>
    %51 = vector.multi_reduction <maximumf>, %50, %cst_20 [2] : vector<8x8x8xf32> to vector<8x8xf32>
    %52 = vector.shape_cast %51 : vector<8x8xf32> to vector<8x8x1xf32>
    %53 = vector.broadcast %52 : vector<8x8x1xf32> to vector<8x8x8xf32>
    %54 = arith.subf %50, %53 : vector<8x8x8xf32>
    %55 = math.exp %54 : vector<8x8x8xf32>
    %cst_21 = arith.constant dense<0.000000e+00> : vector<8x8xf32>
    %56 = vector.multi_reduction <add>, %55, %cst_21 [2] : vector<8x8x8xf32> to vector<8x8xf32>
    %57 = vector.shape_cast %56 : vector<8x8xf32> to vector<8x8x1xf32>
    %58 = tpu.reciprocal %57 {approx = true} : vector<8x8x1xf32> -> vector<8x8x1xf32>
    %59 = vector.broadcast %58 : vector<8x8x1xf32> to vector<8x8x8xf32>
    %60 = arith.mulf %55, %59 : vector<8x8x8xf32>
    %61 = arith.truncf %60 : vector<8x8x8xf32> to vector<8x8x8xbf16>
    %62 = arith.truncf %45 : vector<8x8x8xf32> to vector<8x8x8xbf16>
    "tpu.trace_start"() <{level = 10 : i32, message = "gqk,gkd->gqd"}> : () -> ()
    %cst_22 = arith.constant dense<0.000000e+00> : vector<8x8x8xf32>
    %63 = tpu.matmul %61, %62, %cst_22 {dimension_numbers = #tpu.dot_dimension_numbers<[2], [1], [1], [2], [0, 0, 0, 1, 1, 2], [0], [0]>} : vector<8x8x8xbf16>, vector<8x8x8xbf16>, vector<8x8x8xf32> -> vector<8x8x8xf32>
    "tpu.trace_stop"() : () -> ()
    %64 = vector.shape_cast %63 : vector<8x8x8xf32> to vector<4x16x8xf32>
    %65 = tpu.transpose %64, [1, 0, 2] : vector<4x16x8xf32> -> vector<16x4x8xf32>
    %66 = vector.shape_cast %65 : vector<16x4x8xf32> to vector<16x32xf32>
    %c0_23 = arith.constant 0 : index
    %c0_24 = arith.constant 0 : index
    %c0_25 = arith.constant 0 : index
    %67 = vector.load %arg6[%c0_23, %c0_24, %c0_25] : memref<2x32x32xbf16, #tpu.memory_space<vmem>>, vector<1x32x32xbf16>
    %68 = vector.shape_cast %67 : vector<1x32x32xbf16> to vector<32x32xbf16>
    %69 = arith.truncf %66 : vector<16x32xf32> to vector<16x32xbf16>
    %cst_26 = arith.constant dense<0.000000e+00> : vector<16x32xf32>
    %70 = tpu.matmul %69, %68, %cst_26 {dimension_numbers = #tpu.dot_dimension_numbers<[1], [0], [0], [1], [0, 0, 1, 1], [], []>} : vector<16x32xbf16>, vector<32x32xbf16>, vector<16x32xf32> -> vector<16x32xf32>
    %c0_27 = arith.constant 0 : index
    %c0_28 = arith.constant 0 : index
    %c0_29 = arith.constant 0 : index
    %71 = vector.load %arg7[%c0_27, %c0_28, %c0_29] : memref<2x1x32xf32, #tpu.memory_space<vmem>>, vector<1x1x32xf32>
    %72 = vector.shape_cast %71 : vector<1x1x32xf32> to vector<1x32xf32>
    %73 = vector.broadcast %72 : vector<1x32xf32> to vector<16x32xf32>
    %74 = arith.addf %70, %73 : vector<16x32xf32>
    %75 = arith.addf %24, %74 : vector<16x32xf32>
    %c0_30 = arith.constant 0 : index
    %c0_31 = arith.constant 0 : index
    %c0_32 = arith.constant 0 : index
    %76 = vector.load %arg8[%c0_30, %c0_31, %c0_32] : memref<2x1x32xf32, #tpu.memory_space<vmem>>, vector<1x1x32xf32>
    %77 = vector.shape_cast %76 : vector<1x1x32xf32> to vector<1x32xf32>
    %c0_33 = arith.constant 0 : index
    %c0_34 = arith.constant 0 : index
    %c0_35 = arith.constant 0 : index
    %78 = vector.load %arg9[%c0_33, %c0_34, %c0_35] : memref<2x1x32xf32, #tpu.memory_space<vmem>>, vector<1x1x32xf32>
    %79 = vector.shape_cast %78 : vector<1x1x32xf32> to vector<1x32xf32>
    %cst_36 = arith.constant dense<0.000000e+00> : vector<16xf32>
    %80 = vector.multi_reduction <add>, %75, %cst_36 [1] : vector<16x32xf32> to vector<16xf32>
    %81 = vector.shape_cast %80 : vector<16xf32> to vector<16x1xf32>
    %cst_37 = arith.constant 3.200000e+01 : f32
    %82 = vector.broadcast %cst_37 : f32 to vector<16x1xf32>
    %83 = arith.divf %81, %82 : vector<16x1xf32>
    %84 = vector.broadcast %83 : vector<16x1xf32> to vector<16x32xf32>
    %85 = arith.subf %75, %84 : vector<16x32xf32>
    %86 = arith.mulf %85, %85 : vector<16x32xf32>
    %cst_38 = arith.constant dense<0.000000e+00> : vector<16xf32>
    %87 = vector.multi_reduction <add>, %86, %cst_38 [1] : vector<16x32xf32> to vector<16xf32>
    %88 = vector.shape_cast %87 : vector<16xf32> to vector<16x1xf32>
    %cst_39 = arith.constant 3.200000e+01 : f32
    %89 = vector.broadcast %cst_39 : f32 to vector<16x1xf32>
    %90 = arith.divf %88, %89 : vector<16x1xf32>
    %91 = vector.broadcast %83 : vector<16x1xf32> to vector<16x32xf32>
    %92 = arith.subf %75, %91 : vector<16x32xf32>
    %cst_40 = arith.constant 9.99999996E-13 : f32
    %93 = vector.broadcast %cst_40 : f32 to vector<16x1xf32>
    %94 = arith.addf %90, %93 : vector<16x1xf32>
    %95 = math.rsqrt %94 : vector<16x1xf32>
    %96 = vector.broadcast %95 : vector<16x1xf32> to vector<16x32xf32>
    %97 = arith.mulf %92, %96 : vector<16x32xf32>
    %98 = vector.broadcast %77 : vector<1x32xf32> to vector<16x32xf32>
    %99 = arith.mulf %97, %98 : vector<16x32xf32>
    %100 = vector.broadcast %79 : vector<1x32xf32> to vector<16x32xf32>
    %101 = arith.addf %99, %100 : vector<16x32xf32>
    %c0_41 = arith.constant 0 : index
    %c0_42 = arith.constant 0 : index
    %c0_43 = arith.constant 0 : index
    %102 = vector.load %arg10[%c0_41, %c0_42, %c0_43] : memref<2x32x64xbf16, #tpu.memory_space<vmem>>, vector<1x32x64xbf16>
    %103 = vector.shape_cast %102 : vector<1x32x64xbf16> to vector<32x64xbf16>
    %104 = arith.truncf %101 : vector<16x32xf32> to vector<16x32xbf16>
    %cst_44 = arith.constant dense<0.000000e+00> : vector<16x64xf32>
    %105 = tpu.matmul %104, %103, %cst_44 {dimension_numbers = #tpu.dot_dimension_numbers<[1], [0], [0], [1], [0, 0, 1, 1], [], []>} : vector<16x32xbf16>, vector<32x64xbf16>, vector<16x64xf32> -> vector<16x64xf32>
    %c0_45 = arith.constant 0 : index
    %c0_46 = arith.constant 0 : index
    %c0_47 = arith.constant 0 : index
    %106 = vector.load %arg11[%c0_45, %c0_46, %c0_47] : memref<2x1x64xf32, #tpu.memory_space<vmem>>, vector<1x1x64xf32>
    %107 = vector.shape_cast %106 : vector<1x1x64xf32> to vector<1x64xf32>
    %108 = vector.broadcast %107 : vector<1x64xf32> to vector<16x64xf32>
    %109 = arith.addf %105, %108 : vector<16x64xf32>
    %110 = arith.mulf %109, %109 : vector<16x64xf32>
    %111 = arith.mulf %109, %110 : vector<16x64xf32>
    %cst_48 = arith.constant 4.471500e-02 : f32
    %112 = vector.broadcast %cst_48 : f32 to vector<16x64xf32>
    %113 = arith.mulf %112, %111 : vector<16x64xf32>
    %114 = arith.addf %109, %113 : vector<16x64xf32>
    %cst_49 = arith.constant 0.797884583 : f32
    %115 = vector.broadcast %cst_49 : f32 to vector<16x64xf32>
    %116 = arith.mulf %115, %114 : vector<16x64xf32>
    %117 = math.tanh %116 : vector<16x64xf32>
    %cst_50 = arith.constant 1.000000e+00 : f32
    %118 = vector.broadcast %cst_50 : f32 to vector<16x64xf32>
    %119 = arith.addf %118, %117 : vector<16x64xf32>
    %cst_51 = arith.constant 5.000000e-01 : f32
    %120 = vector.broadcast %cst_51 : f32 to vector<16x64xf32>
    %121 = arith.mulf %120, %119 : vector<16x64xf32>
    %122 = arith.mulf %109, %121 : vector<16x64xf32>
    %c0_52 = arith.constant 0 : index
    %c0_53 = arith.constant 0 : index
    %c0_54 = arith.constant 0 : index
    %123 = vector.load %arg12[%c0_52, %c0_53, %c0_54] : memref<2x64x32xbf16, #tpu.memory_space<vmem>>, vector<1x64x32xbf16>
    %124 = vector.shape_cast %123 : vector<1x64x32xbf16> to vector<64x32xbf16>
    %125 = arith.truncf %122 : vector<16x64xf32> to vector<16x64xbf16>
    %cst_55 = arith.constant dense<0.000000e+00> : vector<16x32xf32>
    %126 = tpu.matmul %125, %124, %cst_55 {dimension_numbers = #tpu.dot_dimension_numbers<[1], [0], [0], [1], [0, 0, 1, 1], [], []>} : vector<16x64xbf16>, vector<64x32xbf16>, vector<16x32xf32> -> vector<16x32xf32>
    %c0_56 = arith.constant 0 : index
    %c0_57 = arith.constant 0 : index
    %c0_58 = arith.constant 0 : index
    %127 = vector.load %arg13[%c0_56, %c0_57, %c0_58] : memref<2x1x32xf32, #tpu.memory_space<vmem>>, vector<1x1x32xf32>
    %128 = vector.shape_cast %127 : vector<1x1x32xf32> to vector<1x32xf32>
    %129 = vector.broadcast %128 : vector<1x32xf32> to vector<16x32xf32>
    %130 = arith.addf %126, %129 : vector<16x32xf32>
    %131 = arith.addf %101, %130 : vector<16x32xf32>
    %c0_59 = arith.constant 0 : index
    %c0_60 = arith.constant 0 : index
    %c0_61 = arith.constant 0 : index
    %132 = vector.load %arg14[%c0_59, %c0_60, %c0_61] : memref<2x1x32xf32, #tpu.memory_space<vmem>>, vector<1x1x32xf32>
    %133 = vector.shape_cast %132 : vector<1x1x32xf32> to vector<1x32xf32>
    %c0_62 = arith.constant 0 : index
    %c0_63 = arith.constant 0 : index
    %c0_64 = arith.constant 0 : index
    %134 = vector.load %arg15[%c0_62, %c0_63, %c0_64] : memref<2x1x32xf32, #tpu.memory_space<vmem>>, vector<1x1x32xf32>
    %135 = vector.shape_cast %134 : vector<1x1x32xf32> to vector<1x32xf32>
    %cst_65 = arith.constant dense<0.000000e+00> : vector<16xf32>
    %136 = vector.multi_reduction <add>, %131, %cst_65 [1] : vector<16x32xf32> to vector<16xf32>
    %137 = vector.shape_cast %136 : vector<16xf32> to vector<16x1xf32>
    %cst_66 = arith.constant 3.200000e+01 : f32
    %138 = vector.broadcast %cst_66 : f32 to vector<16x1xf32>
    %139 = arith.divf %137, %138 : vector<16x1xf32>
    %140 = vector.broadcast %139 : vector<16x1xf32> to vector<16x32xf32>
    %141 = arith.subf %131, %140 : vector<16x32xf32>
    %142 = arith.mulf %141, %141 : vector<16x32xf32>
    %cst_67 = arith.constant dense<0.000000e+00> : vector<16xf32>
    %143 = vector.multi_reduction <add>, %142, %cst_67 [1] : vector<16x32xf32> to vector<16xf32>
    %144 = vector.shape_cast %143 : vector<16xf32> to vector<16x1xf32>
    %cst_68 = arith.constant 3.200000e+01 : f32
    %145 = vector.broadcast %cst_68 : f32 to vector<16x1xf32>
    %146 = arith.divf %144, %145 : vector<16x1xf32>
    %147 = vector.broadcast %139 : vector<16x1xf32> to vector<16x32xf32>
    %148 = arith.subf %131, %147 : vector<16x32xf32>
    %cst_69 = arith.constant 9.99999996E-13 : f32
    %149 = vector.broadcast %cst_69 : f32 to vector<16x1xf32>
    %150 = arith.addf %146, %149 : vector<16x1xf32>
    %151 = math.rsqrt %150 : vector<16x1xf32>
    %152 = vector.broadcast %151 : vector<16x1xf32> to vector<16x32xf32>
    %153 = arith.mulf %148, %152 : vector<16x32xf32>
    %154 = vector.broadcast %133 : vector<1x32xf32> to vector<16x32xf32>
    %155 = arith.mulf %153, %154 : vector<16x32xf32>
    %156 = vector.broadcast %135 : vector<1x32xf32> to vector<16x32xf32>
    %157 = arith.addf %155, %156 : vector<16x32xf32>
    %c1 = arith.constant 1 : index
    %c0_70 = arith.constant 0 : index
    %c0_71 = arith.constant 0 : index
    %158 = vector.load %arg4[%c1, %c0_70, %c0_71] : memref<2x32x96xbf16, #tpu.memory_space<vmem>>, vector<1x32x96xbf16>
    %159 = vector.shape_cast %158 : vector<1x32x96xbf16> to vector<32x96xbf16>
    %160 = arith.truncf %157 : vector<16x32xf32> to vector<16x32xbf16>
    %cst_72 = arith.constant dense<0.000000e+00> : vector<16x96xf32>
    %161 = tpu.matmul %160, %159, %cst_72 {dimension_numbers = #tpu.dot_dimension_numbers<[1], [0], [0], [1], [0, 0, 1, 1], [], []>} : vector<16x32xbf16>, vector<32x96xbf16>, vector<16x96xf32> -> vector<16x96xf32>
    %c1_73 = arith.constant 1 : index
    %c0_74 = arith.constant 0 : index
    %c0_75 = arith.constant 0 : index
    %162 = vector.load %arg5[%c1_73, %c0_74, %c0_75] : memref<2x1x96xf32, #tpu.memory_space<vmem>>, vector<1x1x96xf32>
    %163 = vector.shape_cast %162 : vector<1x1x96xf32> to vector<1x96xf32>
    %164 = vector.broadcast %163 : vector<1x96xf32> to vector<16x96xf32>
    %165 = arith.addf %161, %164 : vector<16x96xf32>
    %166 = vector.extract_strided_slice %165 {offsets = [0, 0], sizes = [16, 32], strides = [1, 1]} : vector<16x96xf32> to vector<16x32xf32>
    %167 = vector.extract_strided_slice %165 {offsets = [0, 32], sizes = [16, 32], strides = [1, 1]} : vector<16x96xf32> to vector<16x32xf32>
    %168 = vector.extract_strided_slice %165 {offsets = [0, 64], sizes = [16, 32], strides = [1, 1]} : vector<16x96xf32> to vector<16x32xf32>
    %169 = vector.shape_cast %166 : vector<16x32xf32> to vector<16x4x8xf32>
    %170 = tpu.transpose %169, [1, 0, 2] : vector<16x4x8xf32> -> vector<4x16x8xf32>
    %171 = vector.shape_cast %170 : vector<4x16x8xf32> to vector<8x8x8xf32>
    %172 = vector.shape_cast %167 : vector<16x32xf32> to vector<16x4x8xf32>
    %173 = tpu.transpose %172, [1, 0, 2] : vector<16x4x8xf32> -> vector<4x16x8xf32>
    %174 = vector.shape_cast %173 : vector<4x16x8xf32> to vector<8x8x8xf32>
    %175 = vector.shape_cast %168 : vector<16x32xf32> to vector<16x4x8xf32>
    %176 = tpu.transpose %175, [1, 0, 2] : vector<16x4x8xf32> -> vector<4x16x8xf32>
    %177 = vector.shape_cast %176 : vector<4x16x8xf32> to vector<8x8x8xf32>
    %178 = arith.truncf %171 : vector<8x8x8xf32> to vector<8x8x8xbf16>
    %179 = arith.truncf %174 : vector<8x8x8xf32> to vector<8x8x8xbf16>
    "tpu.trace_start"() <{level = 10 : i32, message = "gqd,gkd->gqk"}> : () -> ()
    %cst_76 = arith.constant dense<0.000000e+00> : vector<8x8x8xf32>
    %180 = tpu.matmul %178, %179, %cst_76 {dimension_numbers = #tpu.dot_dimension_numbers<[2], [2], [1], [1], [0, 0, 0, 1, 1, 1], [0], [0]>} : vector<8x8x8xbf16>, vector<8x8x8xbf16>, vector<8x8x8xf32> -> vector<8x8x8xf32>
    "tpu.trace_stop"() : () -> ()
    %181 = vector.broadcast %25 : vector<8x1x8xf32> to vector<8x8x8xf32>
    %182 = arith.addf %180, %181 : vector<8x8x8xf32>
    %cst_77 = arith.constant dense<0xFF800000> : vector<8x8xf32>
    %183 = vector.multi_reduction <maximumf>, %182, %cst_77 [2] : vector<8x8x8xf32> to vector<8x8xf32>
    %184 = vector.shape_cast %183 : vector<8x8xf32> to vector<8x8x1xf32>
    %185 = vector.broadcast %184 : vector<8x8x1xf32> to vector<8x8x8xf32>
    %186 = arith.subf %182, %185 : vector<8x8x8xf32>
    %187 = math.exp %186 : vector<8x8x8xf32>
    %cst_78 = arith.constant dense<0.000000e+00> : vector<8x8xf32>
    %188 = vector.multi_reduction <add>, %187, %cst_78 [2] : vector<8x8x8xf32> to vector<8x8xf32>
    %189 = vector.shape_cast %188 : vector<8x8xf32> to vector<8x8x1xf32>
    %190 = tpu.reciprocal %189 {approx = true} : vector<8x8x1xf32> -> vector<8x8x1xf32>
    %191 = vector.broadcast %190 : vector<8x8x1xf32> to vector<8x8x8xf32>
    %192 = arith.mulf %187, %191 : vector<8x8x8xf32>
    %193 = arith.truncf %192 : vector<8x8x8xf32> to vector<8x8x8xbf16>
    %194 = arith.truncf %177 : vector<8x8x8xf32> to vector<8x8x8xbf16>
    "tpu.trace_start"() <{level = 10 : i32, message = "gqk,gkd->gqd"}> : () -> ()
    %cst_79 = arith.constant dense<0.000000e+00> : vector<8x8x8xf32>
    %195 = tpu.matmul %193, %194, %cst_79 {dimension_numbers = #tpu.dot_dimension_numbers<[2], [1], [1], [2], [0, 0, 0, 1, 1, 2], [0], [0]>} : vector<8x8x8xbf16>, vector<8x8x8xbf16>, vector<8x8x8xf32> -> vector<8x8x8xf32>
    "tpu.trace_stop"() : () -> ()
    %196 = vector.shape_cast %195 : vector<8x8x8xf32> to vector<4x16x8xf32>
    %197 = tpu.transpose %196, [1, 0, 2] : vector<4x16x8xf32> -> vector<16x4x8xf32>
    %198 = vector.shape_cast %197 : vector<16x4x8xf32> to vector<16x32xf32>
    %c1_80 = arith.constant 1 : index
    %c0_81 = arith.constant 0 : index
    %c0_82 = arith.constant 0 : index
    %199 = vector.load %arg6[%c1_80, %c0_81, %c0_82] : memref<2x32x32xbf16, #tpu.memory_space<vmem>>, vector<1x32x32xbf16>
    %200 = vector.shape_cast %199 : vector<1x32x32xbf16> to vector<32x32xbf16>
    %201 = arith.truncf %198 : vector<16x32xf32> to vector<16x32xbf16>
    %cst_83 = arith.constant dense<0.000000e+00> : vector<16x32xf32>
    %202 = tpu.matmul %201, %200, %cst_83 {dimension_numbers = #tpu.dot_dimension_numbers<[1], [0], [0], [1], [0, 0, 1, 1], [], []>} : vector<16x32xbf16>, vector<32x32xbf16>, vector<16x32xf32> -> vector<16x32xf32>
    %c1_84 = arith.constant 1 : index
    %c0_85 = arith.constant 0 : index
    %c0_86 = arith.constant 0 : index
    %203 = vector.load %arg7[%c1_84, %c0_85, %c0_86] : memref<2x1x32xf32, #tpu.memory_space<vmem>>, vector<1x1x32xf32>
    %204 = vector.shape_cast %203 : vector<1x1x32xf32> to vector<1x32xf32>
    %205 = vector.broadcast %204 : vector<1x32xf32> to vector<16x32xf32>
    %206 = arith.addf %202, %205 : vector<16x32xf32>
    %207 = arith.addf %157, %206 : vector<16x32xf32>
    %c1_87 = arith.constant 1 : index
    %c0_88 = arith.constant 0 : index
    %c0_89 = arith.constant 0 : index
    %208 = vector.load %arg8[%c1_87, %c0_88, %c0_89] : memref<2x1x32xf32, #tpu.memory_space<vmem>>, vector<1x1x32xf32>
    %209 = vector.shape_cast %208 : vector<1x1x32xf32> to vector<1x32xf32>
    %c1_90 = arith.constant 1 : index
    %c0_91 = arith.constant 0 : index
    %c0_92 = arith.constant 0 : index
    %210 = vector.load %arg9[%c1_90, %c0_91, %c0_92] : memref<2x1x32xf32, #tpu.memory_space<vmem>>, vector<1x1x32xf32>
    %211 = vector.shape_cast %210 : vector<1x1x32xf32> to vector<1x32xf32>
    %cst_93 = arith.constant dense<0.000000e+00> : vector<16xf32>
    %212 = vector.multi_reduction <add>, %207, %cst_93 [1] : vector<16x32xf32> to vector<16xf32>
    %213 = vector.shape_cast %212 : vector<16xf32> to vector<16x1xf32>
    %cst_94 = arith.constant 3.200000e+01 : f32
    %214 = vector.broadcast %cst_94 : f32 to vector<16x1xf32>
    %215 = arith.divf %213, %214 : vector<16x1xf32>
    %216 = vector.broadcast %215 : vector<16x1xf32> to vector<16x32xf32>
    %217 = arith.subf %207, %216 : vector<16x32xf32>
    %218 = arith.mulf %217, %217 : vector<16x32xf32>
    %cst_95 = arith.constant dense<0.000000e+00> : vector<16xf32>
    %219 = vector.multi_reduction <add>, %218, %cst_95 [1] : vector<16x32xf32> to vector<16xf32>
    %220 = vector.shape_cast %219 : vector<16xf32> to vector<16x1xf32>
    %cst_96 = arith.constant 3.200000e+01 : f32
    %221 = vector.broadcast %cst_96 : f32 to vector<16x1xf32>
    %222 = arith.divf %220, %221 : vector<16x1xf32>
    %223 = vector.broadcast %215 : vector<16x1xf32> to vector<16x32xf32>
    %224 = arith.subf %207, %223 : vector<16x32xf32>
    %cst_97 = arith.constant 9.99999996E-13 : f32
    %225 = vector.broadcast %cst_97 : f32 to vector<16x1xf32>
    %226 = arith.addf %222, %225 : vector<16x1xf32>
    %227 = math.rsqrt %226 : vector<16x1xf32>
    %228 = vector.broadcast %227 : vector<16x1xf32> to vector<16x32xf32>
    %229 = arith.mulf %224, %228 : vector<16x32xf32>
    %230 = vector.broadcast %209 : vector<1x32xf32> to vector<16x32xf32>
    %231 = arith.mulf %229, %230 : vector<16x32xf32>
    %232 = vector.broadcast %211 : vector<1x32xf32> to vector<16x32xf32>
    %233 = arith.addf %231, %232 : vector<16x32xf32>
    %c1_98 = arith.constant 1 : index
    %c0_99 = arith.constant 0 : index
    %c0_100 = arith.constant 0 : index
    %234 = vector.load %arg10[%c1_98, %c0_99, %c0_100] : memref<2x32x64xbf16, #tpu.memory_space<vmem>>, vector<1x32x64xbf16>
    %235 = vector.shape_cast %234 : vector<1x32x64xbf16> to vector<32x64xbf16>
    %236 = arith.truncf %233 : vector<16x32xf32> to vector<16x32xbf16>
    %cst_101 = arith.constant dense<0.000000e+00> : vector<16x64xf32>
    %237 = tpu.matmul %236, %235, %cst_101 {dimension_numbers = #tpu.dot_dimension_numbers<[1], [0], [0], [1], [0, 0, 1, 1], [], []>} : vector<16x32xbf16>, vector<32x64xbf16>, vector<16x64xf32> -> vector<16x64xf32>
    %c1_102 = arith.constant 1 : index
    %c0_103 = arith.constant 0 : index
    %c0_104 = arith.constant 0 : index
    %238 = vector.load %arg11[%c1_102, %c0_103, %c0_104] : memref<2x1x64xf32, #tpu.memory_space<vmem>>, vector<1x1x64xf32>
    %239 = vector.shape_cast %238 : vector<1x1x64xf32> to vector<1x64xf32>
    %240 = vector.broadcast %239 : vector<1x64xf32> to vector<16x64xf32>
    %241 = arith.addf %237, %240 : vector<16x64xf32>
    %242 = arith.mulf %241, %241 : vector<16x64xf32>
    %243 = arith.mulf %241, %242 : vector<16x64xf32>
    %cst_105 = arith.constant 4.471500e-02 : f32
    %244 = vector.broadcast %cst_105 : f32 to vector<16x64xf32>
    %245 = arith.mulf %244, %243 : vector<16x64xf32>
    %246 = arith.addf %241, %245 : vector<16x64xf32>
    %cst_106 = arith.constant 0.797884583 : f32
    %247 = vector.broadcast %cst_106 : f32 to vector<16x64xf32>
    %248 = arith.mulf %247, %246 : vector<16x64xf32>
    %249 = math.tanh %248 : vector<16x64xf32>
    %cst_107 = arith.constant 1.000000e+00 : f32
    %250 = vector.broadcast %cst_107 : f32 to vector<16x64xf32>
    %251 = arith.addf %250, %249 : vector<16x64xf32>
    %cst_108 = arith.constant 5.000000e-01 : f32
    %252 = vector.broadcast %cst_108 : f32 to vector<16x64xf32>
    %253 = arith.mulf %252, %251 : vector<16x64xf32>
    %254 = arith.mulf %241, %253 : vector<16x64xf32>
    %c1_109 = arith.constant 1 : index
    %c0_110 = arith.constant 0 : index
    %c0_111 = arith.constant 0 : index
    %255 = vector.load %arg12[%c1_109, %c0_110, %c0_111] : memref<2x64x32xbf16, #tpu.memory_space<vmem>>, vector<1x64x32xbf16>
    %256 = vector.shape_cast %255 : vector<1x64x32xbf16> to vector<64x32xbf16>
    %257 = arith.truncf %254 : vector<16x64xf32> to vector<16x64xbf16>
    %cst_112 = arith.constant dense<0.000000e+00> : vector<16x32xf32>
    %258 = tpu.matmul %257, %256, %cst_112 {dimension_numbers = #tpu.dot_dimension_numbers<[1], [0], [0], [1], [0, 0, 1, 1], [], []>} : vector<16x64xbf16>, vector<64x32xbf16>, vector<16x32xf32> -> vector<16x32xf32>
    %c1_113 = arith.constant 1 : index
    %c0_114 = arith.constant 0 : index
    %c0_115 = arith.constant 0 : index
    %259 = vector.load %arg13[%c1_113, %c0_114, %c0_115] : memref<2x1x32xf32, #tpu.memory_space<vmem>>, vector<1x1x32xf32>
    %260 = vector.shape_cast %259 : vector<1x1x32xf32> to vector<1x32xf32>
    %261 = vector.broadcast %260 : vector<1x32xf32> to vector<16x32xf32>
    %262 = arith.addf %258, %261 : vector<16x32xf32>
    %263 = arith.addf %233, %262 : vector<16x32xf32>
    %c1_116 = arith.constant 1 : index
    %c0_117 = arith.constant 0 : index
    %c0_118 = arith.constant 0 : index
    %264 = vector.load %arg14[%c1_116, %c0_117, %c0_118] : memref<2x1x32xf32, #tpu.memory_space<vmem>>, vector<1x1x32xf32>
    %265 = vector.shape_cast %264 : vector<1x1x32xf32> to vector<1x32xf32>
    %c1_119 = arith.constant 1 : index
    %c0_120 = arith.constant 0 : index
    %c0_121 = arith.constant 0 : index
    %266 = vector.load %arg15[%c1_119, %c0_120, %c0_121] : memref<2x1x32xf32, #tpu.memory_space<vmem>>, vector<1x1x32xf32>
    %267 = vector.shape_cast %266 : vector<1x1x32xf32> to vector<1x32xf32>
    %cst_122 = arith.constant dense<0.000000e+00> : vector<16xf32>
    %268 = vector.multi_reduction <add>, %263, %cst_122 [1] : vector<16x32xf32> to vector<16xf32>
    %269 = vector.shape_cast %268 : vector<16xf32> to vector<16x1xf32>
    %cst_123 = arith.constant 3.200000e+01 : f32
    %270 = vector.broadcast %cst_123 : f32 to vector<16x1xf32>
    %271 = arith.divf %269, %270 : vector<16x1xf32>
    %272 = vector.broadcast %271 : vector<16x1xf32> to vector<16x32xf32>
    %273 = arith.subf %263, %272 : vector<16x32xf32>
    %274 = arith.mulf %273, %273 : vector<16x32xf32>
    %cst_124 = arith.constant dense<0.000000e+00> : vector<16xf32>
    %275 = vector.multi_reduction <add>, %274, %cst_124 [1] : vector<16x32xf32> to vector<16xf32>
    %276 = vector.shape_cast %275 : vector<16xf32> to vector<16x1xf32>
    %cst_125 = arith.constant 3.200000e+01 : f32
    %277 = vector.broadcast %cst_125 : f32 to vector<16x1xf32>
    %278 = arith.divf %276, %277 : vector<16x1xf32>
    %279 = vector.broadcast %271 : vector<16x1xf32> to vector<16x32xf32>
    %280 = arith.subf %263, %279 : vector<16x32xf32>
    %cst_126 = arith.constant 9.99999996E-13 : f32
    %281 = vector.broadcast %cst_126 : f32 to vector<16x1xf32>
    %282 = arith.addf %278, %281 : vector<16x1xf32>
    %283 = math.rsqrt %282 : vector<16x1xf32>
    %284 = vector.broadcast %283 : vector<16x1xf32> to vector<16x32xf32>
    %285 = arith.mulf %280, %284 : vector<16x32xf32>
    %286 = vector.broadcast %265 : vector<1x32xf32> to vector<16x32xf32>
    %287 = arith.mulf %285, %286 : vector<16x32xf32>
    %288 = vector.broadcast %267 : vector<1x32xf32> to vector<16x32xf32>
    %289 = arith.addf %287, %288 : vector<16x32xf32>
    %290 = vector.shape_cast %289 : vector<16x32xf32> to vector<2x8x32xf32>
    %291 = vector.extract_strided_slice %290 {offsets = [0, 0, 0], sizes = [2, 1, 32], strides = [1, 1, 1]} : vector<2x8x32xf32> to vector<2x1x32xf32>
    %292 = vector.shape_cast %291 : vector<2x1x32xf32> to vector<2x32xf32>
    %c0_127 = arith.constant 0 : index
    %c0_128 = arith.constant 0 : index
    %293 = vector.load %arg16[%c0_127, %c0_128] : memref<32x32xbf16, #tpu.memory_space<vmem>>, vector<32x32xbf16>
    %294 = arith.truncf %292 : vector<2x32xf32> to vector<2x32xbf16>
    %cst_129 = arith.constant dense<0.000000e+00> : vector<2x32xf32>
    %295 = tpu.matmul %294, %293, %cst_129 {dimension_numbers = #tpu.dot_dimension_numbers<[1], [0], [0], [1], [0, 0, 1, 1], [], []>} : vector<2x32xbf16>, vector<32x32xbf16>, vector<2x32xf32> -> vector<2x32xf32>
    %c0_130 = arith.constant 0 : index
    %c0_131 = arith.constant 0 : index
    %296 = vector.load %arg17[%c0_130, %c0_131] : memref<1x32xf32, #tpu.memory_space<vmem>>, vector<1x32xf32>
    %297 = vector.broadcast %296 : vector<1x32xf32> to vector<2x32xf32>
    %298 = arith.addf %295, %297 : vector<2x32xf32>
    %299 = math.tanh %298 : vector<2x32xf32>
    %c0_132 = arith.constant 0 : index
    %c0_133 = arith.constant 0 : index
    %300 = vector.load %arg18[%c0_132, %c0_133] : memref<32x20xbf16, #tpu.memory_space<vmem>>, vector<32x20xbf16>
    %301 = arith.truncf %299 : vector<2x32xf32> to vector<2x32xbf16>
    %cst_134 = arith.constant dense<0.000000e+00> : vector<2x20xf32>
    %302 = tpu.matmul %301, %300, %cst_134 {dimension_numbers = #tpu.dot_dimension_numbers<[1], [0], [0], [1], [0, 0, 1, 1], [], []>} : vector<2x32xbf16>, vector<32x20xbf16>, vector<2x20xf32> -> vector<2x20xf32>
    %c0_135 = arith.constant 0 : index
    %c0_136 = arith.constant 0 : index
    %303 = vector.load %arg19[%c0_135, %c0_136] : memref<1x20xf32, #tpu.memory_space<vmem>>, vector<1x20xf32>
    %304 = vector.broadcast %303 : vector<1x20xf32> to vector<2x20xf32>
    %305 = arith.addf %302, %304 : vector<2x20xf32>
    %c0_137 = arith.constant 0 : index
    %c0_138 = arith.constant 0 : index
    %306 = vector.load %arg20[%c0_137, %c0_138] : memref<2x20xf32, #tpu.memory_space<vmem>>, vector<2x20xf32>
    tpu.vector_store %arg20[%c0_137, %c0_138], %305 {strides = array<i32>} : memref<2x20xf32, #tpu.memory_space<vmem>>, vector<2x20xf32>,
    return
  }
}

</mosaic_0001>

<llo_original>
// kernel: topic_model_forward.1
$region0: #{topic_model_forward.1}
  #allocation0 [shape = 'u32[]', space=smem, size = 0x4, offset = 0x4, fixed_abs, tag = 'smem constant byte address 0x4 - core index']
  #allocation1 [shape = 'u32[144,128]{1,0:T(1,128)}', space=vmem, size = 0x12000, scoped, tag = 'internal scratch']
  %s0 = inlined_call_operand.vmem [shape: f32[16,32], index: 0, kind: input, shape index: {}]
  %s1 = inlined_call_operand.vmem [shape: f32[8,1,8], index: 1, kind: input, shape index: {}]
  %s2 = inlined_call_operand.vmem [shape: f32[1,32], index: 2, kind: input, shape index: {}]
  %s3 = inlined_call_operand.vmem [shape: f32[1,32], index: 3, kind: input, shape index: {}]
  %s4 = inlined_call_operand.vmem [shape: bf16[2,32,96], index: 4, kind: input, shape index: {}]
  %s5 = inlined_call_operand.vmem [shape: f32[2,1,96], index: 5, kind: input, shape index: {}]
  %s6 = inlined_call_operand.vmem [shape: bf16[2,32,32], index: 6, kind: input, shape index: {}]
  %s7 = inlined_call_operand.vmem [shape: f32[2,1,32], index: 7, kind: input, shape index: {}]
  %s8 = inlined_call_operand.vmem [shape: f32[2,1,32], index: 8, kind: input, shape index: {}]
  %s9 = inlined_call_operand.vmem [shape: f32[2,1,32], index: 9, kind: input, shape index: {}]
  %s10 = inlined_call_operand.vmem [shape: bf16[2,32,64], index: 10, kind: input, shape index: {}]
  %s11 = inlined_call_operand.vmem [shape: f32[2,1,64], index: 11, kind: input, shape index: {}]
  %s12 = inlined_call_operand.vmem [shape: bf16[2,64,32], index: 12, kind: input, shape index: {}]
  %s13 = inlined_call_operand.vmem [shape: f32[2,1,32], index: 13, kind: input, shape index: {}]
  %s14 = inlined_call_operand.vmem [shape: f32[2,1,32], index: 14, kind: input, shape index: {}]
  %s15 = inlined_call_operand.vmem [shape: f32[2,1,32], index: 15, kind: input, shape index: {}]
  %s16 = inlined_call_operand.vmem [shape: bf16[32,32], index: 16, kind: input, shape index: {}]
  %s17 = inlined_call_operand.vmem [shape: f32[1,32], index: 17, kind: input, shape index: {}]
  %s18 = inlined_call_operand.vmem [shape: bf16[32,20], index: 18, kind: input, shape index: {}]
  %s19 = inlined_call_operand.vmem [shape: f32[1,20], index: 19, kind: input, shape index: {}]
  %s20 = inlined_call_operand.hbm [shape: f32[2,20], index: 20, kind: output, shape index: {}]
  %s21 = sld [smem:[#allocation0]]
  $region90: #{topic_model_forward.1} parent=0
    _
  %s23 = ssub.s32 1, %s21
  %s24 = scalar_select 0, %s23, %s21
  $region1: #{topic_model_forward.1} parent=0
    #allocation2 [shape = 'u8[1024]{0}', space=vmem, size = 0x400, scoped, tag = 'output window, operand 0, single buffered']
    #allocation3 [shape = 's32[1]{0}', space=sflag, size = 0x4, scoped, tag = 'scoped memory for topic_model_forward.1']
    %25 = vsyncpa [#allocation3], 0
    // Predicated region
    $region2: #{topic_model_forward.1} parent=1 // pred_check
      _
    $region3: #{topic_model_forward.1} parent=1 // pred_check_branch
      %27 = sbr.rel (0) target = $region5
    $region4: #{topic_model_forward.1} parent=1 // pred_region
      _
    $region5: #{topic_model_forward.1} parent=1 // pred_fallthru
      _
    // Predicated region
    $region6: #{topic_model_forward.1} parent=1 // pred_check
      _
    $region7: #{topic_model_forward.1} parent=1 // pred_check_branch
      %29 = sbr.rel (0) target = $region9
    $region8: #{topic_model_forward.1} parent=1 // pred_region
      _
    $region9: #{topic_model_forward.1} parent=1 // pred_fallthru
      _
    // Predicated region
    $region10: #{topic_model_forward.1} parent=1 // pred_check
      _
    $region11: #{topic_model_forward.1} parent=1 // pred_check_branch
      %31 = sbr.rel (0) target = $region13
    $region12: #{topic_model_forward.1} parent=1 // pred_region
      _
    $region13: #{topic_model_forward.1} parent=1 // pred_fallthru
      _
    // Predicated region
    $region14: #{topic_model_forward.1} parent=1 // pred_check
      _
    $region15: #{topic_model_forward.1} parent=1 // pred_check_branch
      %33 = sbr.rel (0) target = $region17
    $region16: #{topic_model_forward.1} parent=1 // pred_region
      _
    $region17: #{topic_model_forward.1} parent=1 // pred_fallthru
      _
    // Predicated region
    $region18: #{topic_model_forward.1} parent=1 // pred_check
      _
    $region19: #{topic_model_forward.1} parent=1 // pred_check_branch
      %35 = sbr.rel (0) target = $region21
    $region20: #{topic_model_forward.1} parent=1 // pred_region
      _
    $region21: #{topic_model_forward.1} parent=1 // pred_fallthru
      _
    // Predicated region
    $region22: #{topic_model_forward.1} parent=1 // pred_check
      _
    $region23: #{topic_model_forward.1} parent=1 // pred_check_branch
      %37 = sbr.rel (0) target = $region25
    $region24: #{topic_model_forward.1} parent=1 // pred_region
      _
    $region25: #{topic_model_forward.1} parent=1 // pred_fallthru
      _
    // Predicated region
    $region26: #{topic_model_forward.1} parent=1 // pred_check
      _
    $region27: #{topic_model_forward.1} parent=1 // pred_check_branch
      %39 = sbr.rel (0) target = $region29
    $region28: #{topic_model_forward.1} parent=1 // pred_region
      _
    $region29: #{topic_model_forward.1} parent=1 // pred_fallthru
      _
    // Predicated region
    $region30: #{topic_model_forward.1} parent=1 // pred_check
      _
    $region31: #{topic_model_forward.1} parent=1 // pred_check_branch
      %41 = sbr.rel (0) target = $region33
    $region32: #{topic_model_forward.1} parent=1 // pred_region
      _
    $region33: #{topic_model_forward.1} parent=1 // pred_fallthru
      _
    // Predicated region
    $region34: #{topic_model_forward.1} parent=1 // pred_check
      _
    $region35: #{topic_model_forward.1} parent=1 // pred_check_branch
      %43 = sbr.rel (0) target = $region37
    $region36: #{topic_model_forward.1} parent=1 // pred_region
      _
    $region37: #{topic_model_forward.1} parent=1 // pred_fallthru
      _
    // Predicated region
    $region38: #{topic_model_forward.1} parent=1 // pred_check
      _
    $region39: #{topic_model_forward.1} parent=1 // pred_check_branch
      %45 = sbr.rel (0) target = $region41
    $region40: #{topic_model_forward.1} parent=1 // pred_region
      _
    $region41: #{topic_model_forward.1} parent=1 // pred_fallthru
      _
    // Predicated region
    $region42: #{topic_model_forward.1} parent=1 // pred_check
      _
    $region43: #{topic_model_forward.1} parent=1 // pred_check_branch
      %47 = sbr.rel (0) target = $region45
    $region44: #{topic_model_forward.1} parent=1 // pred_region
      _
    $region45: #{topic_model_forward.1} parent=1 // pred_fallthru
      _
    // Predicated region
    $region46: #{topic_model_forward.1} parent=1 // pred_check
      _
    $region47: #{topic_model_forward.1} parent=1 // pred_check_branch
      %49 = sbr.rel (0) target = $region49
    $region48: #{topic_model_forward.1} parent=1 // pred_region
      _
    $region49: #{topic_model_forward.1} parent=1 // pred_fallthru
      _
    // Predicated region
    $region50: #{topic_model_forward.1} parent=1 // pred_check
      _
    $region51: #{topic_model_forward.1} parent=1 // pred_check_branch
      %51 = sbr.rel (0) target = $region53
    $region52: #{topic_model_forward.1} parent=1 // pred_region
      _
    $region53: #{topic_model_forward.1} parent=1 // pred_fallthru
      _
    // Predicated region
    $region54: #{topic_model_forward.1} parent=1 // pred_check
      _
    $region55: #{topic_model_forward.1} parent=1 // pred_check_branch
      %53 = sbr.rel (0) target = $region57
    $region56: #{topic_model_forward.1} parent=1 // pred_region
      _
    $region57: #{topic_model_forward.1} parent=1 // pred_fallthru
      _
    // Predicated region
    $region58: #{topic_model_forward.1} parent=1 // pred_check
      _
    $region59: #{topic_model_forward.1} parent=1 // pred_check_branch
      %55 = sbr.rel (0) target = $region61
    $region60: #{topic_model_forward.1} parent=1 // pred_region
      _
    $region61: #{topic_model_forward.1} parent=1 // pred_fallthru
      _
    // Predicated region
    $region62: #{topic_model_forward.1} parent=1 // pred_check
      _
    $region63: #{topic_model_forward.1} parent=1 // pred_check_branch
      %57 = sbr.rel (0) target = $region65
    $region64: #{topic_model_forward.1} parent=1 // pred_region
      _
    $region65: #{topic_model_forward.1} parent=1 // pred_fallthru
      _
    // Predicated region
    $region66: #{topic_model_forward.1} parent=1 // pred_check
      _
    $region67: #{topic_model_forward.1} parent=1 // pred_check_branch
      %59 = sbr.rel (0) target = $region69
    $region68: #{topic_model_forward.1} parent=1 // pred_region
      _
    $region69: #{topic_model_forward.1} parent=1 // pred_fallthru
      _
    // Predicated region
    $region70: #{topic_model_forward.1} parent=1 // pred_check
      _
    $region71: #{topic_model_forward.1} parent=1 // pred_check_branch
      %61 = sbr.rel (0) target = $region73
    $region72: #{topic_model_forward.1} parent=1 // pred_region
      _
    $region73: #{topic_model_forward.1} parent=1 // pred_fallthru
      _
    // Predicated region
    $region74: #{topic_model_forward.1} parent=1 // pred_check
      _
    $region75: #{topic_model_forward.1} parent=1 // pred_check_branch
      %63 = sbr.rel (0) target = $region77
    $region76: #{topic_model_forward.1} parent=1 // pred_region
      _
    $region77: #{topic_model_forward.1} parent=1 // pred_fallthru
      _
    // Predicated region
    $region78: #{topic_model_forward.1} parent=1 // pred_check
      _
    $region79: #{topic_model_forward.1} parent=1 // pred_check_branch
      %65 = sbr.rel (0) target = $region81
    $region80: #{topic_model_forward.1} parent=1 // pred_region
      _
    $region81: #{topic_model_forward.1} parent=1 // pred_fallthru
      _
    %v67 = vld [vmem:[%s0] sm:$0xff]
    %v68 = vld [vmem:[%s0 + $0x8] sm:$0xff]
    %v69 = vld [vmem:[%s2] sm:$0x1]
    %v70 = vld [vmem:[%s3] sm:$0x1]
    %vm71 = vcmask 261120
    %v72 = vsel %vm71, %v67, 0.0
    %73 = vadd.xlane.f32.xlu0 %v72
    %v74 = vpop.xlane.xlu0 %73
    %v75 = vsel %vm71, %v68, 0.0
    %76 = vadd.xlane.f32.xlu0 %v75
    %v77 = vpop.xlane.xlu0 %76
    %v78 = vrcp.pop 32.0
    %v79 = vmul.f32 %v74, %v78
    %v80 = vmul.f32 %v77, %v78
    %v81 = vsub.f32 %v67, %v79
    %v82 = vsub.f32 %v68, %v80
    %v83 = vmul.f32 %v81, %v81
    %v84 = vmul.f32 %v82, %v82
    %v85 = vsel %vm71, %v83, 0.0
    %86 = vadd.xlane.f32.xlu0 %v85
    %v87 = vpop.xlane.xlu0 %86
    %v88 = vsel %vm71, %v84, 0.0
    %89 = vadd.xlane.f32.xlu0 %v88
    %v90 = vpop.xlane.xlu0 %89
    %v91 = vmul.f32 %v87, %v78
    %v92 = vmul.f32 %v90, %v78
    %v93 = vadd.f32 %v91, 1e-12
    %v94 = vadd.f32 %v92, 1e-12
    %v95 = vrsqrt.pop %v93
    %v96 = vrsqrt.pop %v94
    %v97 = vmul.f32 %v81, %v95
    %v98 = vmul.f32 %v82, %v96
    %v100 = vlaneseq
    %v101 = vshrl.u32 %v100, 7
    %v102 = vsub.s32 0, %v101
    %v103 = vrot.slane %v69, %v102
    %v105 = vmul.f32 %v97, %v103
    %v106 = vmul.f32 %v98, %v103
    %v108 = vlaneseq
    %v109 = vshrl.u32 %v108, 7
    %v110 = vsub.s32 0, %v109
    %v111 = vrot.slane %v70, %v110
    %v113 = vadd.f32 %v105, %v111
    %v114 = vadd.f32 %v106, %v111
    %v115 = vld [vmem:[%s1] sm:$0x1]
    %v116 = vld [vmem:[%s1 + $0x1] sm:$0x1]
    %v117 = vld [vmem:[%s1 + $0x2] sm:$0x1]
    %v118 = vld [vmem:[%s1 + $0x3] sm:$0x1]
    %v119 = vld [vmem:[%s1 + $0x4] sm:$0x1]
    %v120 = vld [vmem:[%s1 + $0x5] sm:$0x1]
    %v121 = vld [vmem:[%s1 + $0x6] sm:$0x1]
    %v122 = vld [vmem:[%s1 + $0x7] sm:$0x1]
    %v123 = vld [vmem:[%s4] sm:$0xf]
    %v124 = vld [vmem:[%s4 + $0x4] sm:$0xf]
    %v125 = vld [vmem:[%s4 + $0x8] sm:$0xf]
    %v126 = vld [vmem:[%s4 + $0xc] sm:$0xf]
    %v127 = vpack.c.bf16 %v114, %v113
    %v128 = vld [vmem:[%s5] sm:$0x1]
    %v130 = vlaneseq
    %v131 = vshrl.u32 %v130, 7
    %v132 = vsub.s32 0, %v131
    %v133 = vrot.slane %v128, %v132
    %v139 = vunpack.c.l.b16 %v123
    %v140 = vunpack.c.l.b16 %v124
    %v141 = vunpack.c.l.b16 %v125
    %v142 = vunpack.c.l.b16 %v126
    %v143 = vpack.c.b16 %v140, %v139
    %v144 = vpack.c.b16 %v142, %v141
    %v148 = vsel %vm71, %v127, 0
    %150 = vmatprep.subr.bf16.mxu0 0
    %151 = vmatpush1.bf16.msra.mxu0 %v143
    %152 = vmatprep.subr.bf16.mxu0 0
    %153 = vmatpush1.bf16.msra.mxu0 %v144
    %154 = vmatprep.subr.bf16.mxu0 0
    %155 = vmatpush1.bf16.msra.mxu0 0
    %156 = vmatprep.subr.bf16.mxu0 0
    %157 = vmatpush1.bf16.msra.mxu0 0
    %158 = vmatprep.subr.bf16.mxu0 0
    %159 = vmatpush1.bf16.msra.mxu0 0
    %160 = vmatprep.subr.bf16.mxu0 0
    %161 = vmatpush1.bf16.msra.mxu0 0
    %162 = vmatprep.subr.bf16.mxu0 0
    %163 = vmatpush1.bf16.msra.mxu0 0
    %164 = vmatprep.subr.bf16.mxu0 0
    %165 = vmatpush1.bf16.msra.mxu0 0
    %166 = vmatprep.subr.bf16.mxu0 0
    %167 = vmatpush1.bf16.msra.mxu0 0
    %168 = vmatprep.subr.bf16.mxu0 0
    %169 = vmatpush1.bf16.msra.mxu0 0
    %170 = vmatprep.subr.bf16.mxu0 0
    %171 = vmatpush1.bf16.msra.mxu0 0
    %172 = vmatprep.subr.bf16.mxu0 0
    %173 = vmatpush1.bf16.msra.mxu0 0
    %174 = vmatprep.subr.bf16.mxu0 0
    %175 = vmatpush1.bf16.msra.mxu0 0
    %176 = vmatprep.subr.bf16.mxu0 0
    %177 = vmatpush1.bf16.msra.mxu0 0
    %178 = vmatprep.subr.bf16.mxu0 0
    %179 = vmatpush1.bf16.msra.mxu0 0
    %180 = vmatprep.subr.bf16.mxu0 0
    %181 = vmatpush1.bf16.msra.mxu0 0
    %182 = vmatprep.mubr.bf16.mxu0 0
    %183 = vmatmul.mubr.bf16.gmra.mrb[0].mxu0 %v148
    %v184 = vpop.f32.mrb[0].mxu0
    %v185 = vadd.f32 %v133, %v184
    %v186 = vpop.f32.mrb[0].mxu0
    %v187 = vpop.f32.mrb[0].mxu0
    %v188 = vadd.f32 %v133, %v187
    %v189 = vpop.f32.mrb[0].mxu0
    %190 = vdwg.mxu0
    %193 = vrot.lane.b32.xlu0 %v185, 120
    %v194 = vpop.permute.xlu0 %193
    %195 = vrot.lane.b32.xlu0 %v188, 120
    %v196 = vpop.permute.xlu0 %195
    %199 = vrot.lane.b32.xlu0 %v185, 112
    %v200 = vpop.permute.xlu0 %199
    %201 = vrot.lane.b32.xlu0 %v188, 112
    %v202 = vpop.permute.xlu0 %201
    %205 = vrot.lane.b32.xlu0 %v185, 104
    %v206 = vpop.permute.xlu0 %205
    %207 = vrot.lane.b32.xlu0 %v188, 104
    %v208 = vpop.permute.xlu0 %207
    %v211 = vcombine.low %v185, %v200
    %v212 = vcombine.high %v185, %v200
    %v214 = vunpack.c.l.s4 1983009808
    %v215 = vunpack.c.0.s8 %v214
    %v216 = vlaneseq
    %v217 = vshrl.u32 %v216, 7
    %v218 = vsub.s32 %v215, %v217
    %v219 = vrot.slane %v211, %v218
    %v221 = vunpack.c.l.s4 1983009808
    %v222 = vunpack.c.0.s8 %v221
    %v223 = vlaneseq
    %v224 = vshrl.u32 %v223, 7
    %v225 = vsub.s32 %v222, %v224
    %v226 = vrot.slane %v212, %v225
    %v227 = vcombine.low %v194, %v206
    %v228 = vcombine.high %v194, %v206
    %v230 = vunpack.c.l.s4 1983009808
    %v231 = vunpack.c.0.s8 %v230
    %v232 = vlaneseq
    %v233 = vshrl.u32 %v232, 7
    %v234 = vsub.s32 %v231, %v233
    %v235 = vrot.slane %v227, %v234
    %v237 = vunpack.c.l.s4 1983009808
    %v238 = vunpack.c.0.s8 %v237
    %v239 = vlaneseq
    %v240 = vshrl.u32 %v239, 7
    %v241 = vsub.s32 %v238, %v240
    %v242 = vrot.slane %v228, %v241
    %v243 = vcombine.low %v219, %v235
    %v244 = vcombine.high %v219, %v235
    %v246 = vunpack.c.l.s4 1934713408
    %v247 = vunpack.c.0.s8 %v246
    %v248 = vlaneseq
    %v249 = vshrl.u32 %v248, 7
    %v250 = vsub.s32 %v247, %v249
    %v251 = vrot.slane %v243, %v250
    %v253 = vunpack.c.l.s4 1934713408
    %v254 = vunpack.c.0.s8 %v253
    %v255 = vlaneseq
    %v256 = vshrl.u32 %v255, 7
    %v257 = vsub.s32 %v254, %v256
    %v258 = vrot.slane %v244, %v257
    %v259 = vcombine.low %v226, %v242
    %v260 = vcombine.high %v226, %v242
    %v262 = vunpack.c.l.s4 1934713408
    %v263 = vunpack.c.0.s8 %v262
    %v264 = vlaneseq
    %v265 = vshrl.u32 %v264, 7
    %v266 = vsub.s32 %v263, %v265
    %v267 = vrot.slane %v259, %v266
    %v269 = vunpack.c.l.s4 1934713408
    %v270 = vunpack.c.0.s8 %v269
    %v271 = vlaneseq
    %v272 = vshrl.u32 %v271, 7
    %v273 = vsub.s32 %v270, %v272
    %v274 = vrot.slane %v260, %v273
    %v275 = vcombine.high %v251, 0.0
    %v276 = vcombine.high %v258, 0.0
    %v277 = vcombine.high %v267, 0.0
    %v278 = vcombine.high %v274, 0.0
    %v279 = vcombine.low %v188, %v202
    %v280 = vcombine.high %v188, %v202
    %v282 = vunpack.c.l.s4 1983009808
    %v283 = vunpack.c.0.s8 %v282
    %v284 = vlaneseq
    %v285 = vshrl.u32 %v284, 7
    %v286 = vsub.s32 %v283, %v285
    %v287 = vrot.slane %v279, %v286
    %v289 = vunpack.c.l.s4 1983009808
    %v290 = vunpack.c.0.s8 %v289
    %v291 = vlaneseq
    %v292 = vshrl.u32 %v291, 7
    %v293 = vsub.s32 %v290, %v292
    %v294 = vrot.slane %v280, %v293
    %v295 = vcombine.low %v196, %v208
    %v296 = vcombine.high %v196, %v208
    %v298 = vunpack.c.l.s4 1983009808
    %v299 = vunpack.c.0.s8 %v298
    %v300 = vlaneseq
    %v301 = vshrl.u32 %v300, 7
    %v302 = vsub.s32 %v299, %v301
    %v303 = vrot.slane %v295, %v302
    %v305 = vunpack.c.l.s4 1983009808
    %v306 = vunpack.c.0.s8 %v305
    %v307 = vlaneseq
    %v308 = vshrl.u32 %v307, 7
    %v309 = vsub.s32 %v306, %v308
    %v310 = vrot.slane %v296, %v309
    %v311 = vcombine.low %v287, %v303
    %v312 = vcombine.high %v287, %v303
    %v314 = vunpack.c.l.s4 1934713408
    %v315 = vunpack.c.0.s8 %v314
    %v316 = vlaneseq
    %v317 = vshrl.u32 %v316, 7
    %v318 = vsub.s32 %v315, %v317
    %v319 = vrot.slane %v311, %v318
    %v321 = vunpack.c.l.s4 1934713408
    %v322 = vunpack.c.0.s8 %v321
    %v323 = vlaneseq
    %v324 = vshrl.u32 %v323, 7
    %v325 = vsub.s32 %v322, %v324
    %v326 = vrot.slane %v312, %v325
    %v327 = vcombine.low %v294, %v310
    %v328 = vcombine.high %v294, %v310
    %v330 = vunpack.c.l.s4 1934713408
    %v331 = vunpack.c.0.s8 %v330
    %v332 = vlaneseq
    %v333 = vshrl.u32 %v332, 7
    %v334 = vsub.s32 %v331, %v333
    %v335 = vrot.slane %v327, %v334
    %v337 = vunpack.c.l.s4 1934713408
    %v338 = vunpack.c.0.s8 %v337
    %v339 = vlaneseq
    %v340 = vshrl.u32 %v339, 7
    %v341 = vsub.s32 %v338, %v340
    %v342 = vrot.slane %v328, %v341
    %v343 = vcombine.high %v319, 0.0
    %v344 = vcombine.high %v326, 0.0
    %v345 = vcombine.high %v335, 0.0
    %v346 = vcombine.high %v342, 0.0
    %v347 = vcombine.low %v251, %v258
    %v349 = vunpack.c.l.s4 1983009808
    %v350 = vunpack.c.0.s8 %v349
    %v351 = vlaneseq
    %v352 = vshrl.u32 %v351, 7
    %v353 = vsub.s32 %v350, %v352
    %v354 = vrot.slane %v347, %v353
    %v355 = vcombine.low %v275, %v276
    %v357 = vunpack.c.l.s4 1983009808
    %v358 = vunpack.c.0.s8 %v357
    %v359 = vlaneseq
    %v360 = vshrl.u32 %v359, 7
    %v361 = vsub.s32 %v358, %v360
    %v362 = vrot.slane %v355, %v361
    %v363 = vcombine.low %v267, %v274
    %v365 = vunpack.c.l.s4 1983009808
    %v366 = vunpack.c.0.s8 %v365
    %v367 = vlaneseq
    %v368 = vshrl.u32 %v367, 7
    %v369 = vsub.s32 %v366, %v368
    %v370 = vrot.slane %v363, %v369
    %v371 = vcombine.low %v277, %v278
    %v373 = vunpack.c.l.s4 1983009808
    %v374 = vunpack.c.0.s8 %v373
    %v375 = vlaneseq
    %v376 = vshrl.u32 %v375, 7
    %v377 = vsub.s32 %v374, %v376
    %v378 = vrot.slane %v371, %v377
    %v379 = vcombine.low %v354, %v362
    %v380 = vcombine.high %v354, %v362
    %v382 = vunpack.c.l.s4 1934713408
    %v383 = vunpack.c.0.s8 %v382
    %v384 = vlaneseq
    %v385 = vshrl.u32 %v384, 7
    %v386 = vsub.s32 %v383, %v385
    %v387 = vrot.slane %v379, %v386
    %v389 = vunpack.c.l.s4 1934713408
    %v390 = vunpack.c.0.s8 %v389
    %v391 = vlaneseq
    %v392 = vshrl.u32 %v391, 7
    %v393 = vsub.s32 %v390, %v392
    %v394 = vrot.slane %v380, %v393
    %v395 = vcombine.low %v370, %v378
    %v396 = vcombine.high %v370, %v378
    %v398 = vunpack.c.l.s4 1934713408
    %v399 = vunpack.c.0.s8 %v398
    %v400 = vlaneseq
    %v401 = vshrl.u32 %v400, 7
    %v402 = vsub.s32 %v399, %v401
    %v403 = vrot.slane %v395, %v402
    %v405 = vunpack.c.l.s4 1934713408
    %v406 = vunpack.c.0.s8 %v405
    %v407 = vlaneseq
    %v408 = vshrl.u32 %v407, 7
    %v409 = vsub.s32 %v406, %v408
    %v410 = vrot.slane %v396, %v409
    %v411 = vcombine.low %v387, %v403
    %v412 = vcombine.high %v387, %v403
    %v413 = vcombine.low %v394, %v410
    %v414 = vcombine.high %v394, %v410
    %v415 = vcombine.low %v319, %v326
    %v417 = vunpack.c.l.s4 1983009808
    %v418 = vunpack.c.0.s8 %v417
    %v419 = vlaneseq
    %v420 = vshrl.u32 %v419, 7
    %v421 = vsub.s32 %v418, %v420
    %v422 = vrot.slane %v415, %v421
    %v423 = vcombine.low %v343, %v344
    %v425 = vunpack.c.l.s4 1983009808
    %v426 = vunpack.c.0.s8 %v425
    %v427 = vlaneseq
    %v428 = vshrl.u32 %v427, 7
    %v429 = vsub.s32 %v426, %v428
    %v430 = vrot.slane %v423, %v429
    %v431 = vcombine.low %v335, %v342
    %v433 = vunpack.c.l.s4 1983009808
    %v434 = vunpack.c.0.s8 %v433
    %v435 = vlaneseq
    %v436 = vshrl.u32 %v435, 7
    %v437 = vsub.s32 %v434, %v436
    %v438 = vrot.slane %v431, %v437
    %v439 = vcombine.low %v345, %v346
    %v441 = vunpack.c.l.s4 1983009808
    %v442 = vunpack.c.0.s8 %v441
    %v443 = vlaneseq
    %v444 = vshrl.u32 %v443, 7
    %v445 = vsub.s32 %v442, %v444
    %v446 = vrot.slane %v439, %v445
    %v447 = vcombine.low %v422, %v430
    %v448 = vcombine.high %v422, %v430
    %v450 = vunpack.c.l.s4 1934713408
    %v451 = vunpack.c.0.s8 %v450
    %v452 = vlaneseq
    %v453 = vshrl.u32 %v452, 7
    %v454 = vsub.s32 %v451, %v453
    %v455 = vrot.slane %v447, %v454
    %v457 = vunpack.c.l.s4 1934713408
    %v458 = vunpack.c.0.s8 %v457
    %v459 = vlaneseq
    %v460 = vshrl.u32 %v459, 7
    %v461 = vsub.s32 %v458, %v460
    %v462 = vrot.slane %v448, %v461
    %v463 = vcombine.low %v438, %v446
    %v464 = vcombine.high %v438, %v446
    %v466 = vunpack.c.l.s4 1934713408
    %v467 = vunpack.c.0.s8 %v466
    %v468 = vlaneseq
    %v469 = vshrl.u32 %v468, 7
    %v470 = vsub.s32 %v467, %v469
    %v471 = vrot.slane %v463, %v470
    %v473 = vunpack.c.l.s4 1934713408
    %v474 = vunpack.c.0.s8 %v473
    %v475 = vlaneseq
    %v476 = vshrl.u32 %v475, 7
    %v477 = vsub.s32 %v474, %v476
    %v478 = vrot.slane %v464, %v477
    %v479 = vcombine.low %v455, %v471
    %v480 = vcombine.high %v455, %v471
    %v481 = vcombine.low %v462, %v478
    %v482 = vcombine.high %v462, %v478
    %483 = vrot.lane.b32.xlu0 %v185, 96
    %v484 = vpop.permute.xlu0 %483
    %485 = vrot.lane.b32.xlu0 %v188, 96
    %v486 = vpop.permute.xlu0 %485
    %487 = vrot.lane.b32.xlu0 %v194, 96
    %v488 = vpop.permute.xlu0 %487
    %489 = vrot.lane.b32.xlu0 %v196, 96
    %v490 = vpop.permute.xlu0 %489
    %491 = vrot.lane.b32.xlu0 %v200, 96
    %v492 = vpop.permute.xlu0 %491
    %493 = vrot.lane.b32.xlu0 %v202, 96
    %v494 = vpop.permute.xlu0 %493
    %495 = vrot.lane.b32.xlu0 %v206, 96
    %v496 = vpop.permute.xlu0 %495
    %497 = vrot.lane.b32.xlu0 %v208, 96
    %v498 = vpop.permute.xlu0 %497
    %v507 = vcombine.low %v484, %v492
    %v508 = vcombine.high %v484, %v492
    %v510 = vunpack.c.l.s4 1983009808
    %v511 = vunpack.c.0.s8 %v510
    %v512 = vlaneseq
    %v513 = vshrl.u32 %v512, 7
    %v514 = vsub.s32 %v511, %v513
    %v515 = vrot.slane %v507, %v514
    %v517 = vunpack.c.l.s4 1983009808
    %v518 = vunpack.c.0.s8 %v517
    %v519 = vlaneseq
    %v520 = vshrl.u32 %v519, 7
    %v521 = vsub.s32 %v518, %v520
    %v522 = vrot.slane %v508, %v521
    %v523 = vcombine.low %v488, %v496
    %v524 = vcombine.high %v488, %v496
    %v526 = vunpack.c.l.s4 1983009808
    %v527 = vunpack.c.0.s8 %v526
    %v528 = vlaneseq
    %v529 = vshrl.u32 %v528, 7
    %v530 = vsub.s32 %v527, %v529
    %v531 = vrot.slane %v523, %v530
    %v533 = vunpack.c.l.s4 1983009808
    %v534 = vunpack.c.0.s8 %v533
    %v535 = vlaneseq
    %v536 = vshrl.u32 %v535, 7
    %v537 = vsub.s32 %v534, %v536
    %v538 = vrot.slane %v524, %v537
    %v539 = vcombine.low %v515, %v531
    %v540 = vcombine.high %v515, %v531
    %v542 = vunpack.c.l.s4 1934713408
    %v543 = vunpack.c.0.s8 %v542
    %v544 = vlaneseq
    %v545 = vshrl.u32 %v544, 7
    %v546 = vsub.s32 %v543, %v545
    %v547 = vrot.slane %v539, %v546
    %v549 = vunpack.c.l.s4 1934713408
    %v550 = vunpack.c.0.s8 %v549
    %v551 = vlaneseq
    %v552 = vshrl.u32 %v551, 7
    %v553 = vsub.s32 %v550, %v552
    %v554 = vrot.slane %v540, %v553
    %v555 = vcombine.low %v522, %v538
    %v556 = vcombine.high %v522, %v538
    %v558 = vunpack.c.l.s4 1934713408
    %v559 = vunpack.c.0.s8 %v558
    %v560 = vlaneseq
    %v561 = vshrl.u32 %v560, 7
    %v562 = vsub.s32 %v559, %v561
    %v563 = vrot.slane %v555, %v562
    %v565 = vunpack.c.l.s4 1934713408
    %v566 = vunpack.c.0.s8 %v565
    %v567 = vlaneseq
    %v568 = vshrl.u32 %v567, 7
    %v569 = vsub.s32 %v566, %v568
    %v570 = vrot.slane %v556, %v569
    %v571 = vcombine.high %v547, 0.0
    %v572 = vcombine.high %v554, 0.0
    %v573 = vcombine.high %v563, 0.0
    %v574 = vcombine.high %v570, 0.0
    %v575 = vcombine.low %v486, %v494
    %v576 = vcombine.high %v486, %v494
    %v578 = vunpack.c.l.s4 1983009808
    %v579 = vunpack.c.0.s8 %v578
    %v580 = vlaneseq
    %v581 = vshrl.u32 %v580, 7
    %v582 = vsub.s32 %v579, %v581
    %v583 = vrot.slane %v575, %v582
    %v585 = vunpack.c.l.s4 1983009808
    %v586 = vunpack.c.0.s8 %v585
    %v587 = vlaneseq
    %v588 = vshrl.u32 %v587, 7
    %v589 = vsub.s32 %v586, %v588
    %v590 = vrot.slane %v576, %v589
    %v591 = vcombine.low %v490, %v498
    %v592 = vcombine.high %v490, %v498
    %v594 = vunpack.c.l.s4 1983009808
    %v595 = vunpack.c.0.s8 %v594
    %v596 = vlaneseq
    %v597 = vshrl.u32 %v596, 7
    %v598 = vsub.s32 %v595, %v597
    %v599 = vrot.slane %v591, %v598
    %v601 = vunpack.c.l.s4 1983009808
    %v602 = vunpack.c.0.s8 %v601
    %v603 = vlaneseq
    %v604 = vshrl.u32 %v603, 7
    %v605 = vsub.s32 %v602, %v604
    %v606 = vrot.slane %v592, %v605
    %v607 = vcombine.low %v583, %v599
    %v608 = vcombine.high %v583, %v599
    %v610 = vunpack.c.l.s4 1934713408
    %v611 = vunpack.c.0.s8 %v610
    %v612 = vlaneseq
    %v613 = vshrl.u32 %v612, 7
    %v614 = vsub.s32 %v611, %v613
    %v615 = vrot.slane %v607, %v614
    %v617 = vunpack.c.l.s4 1934713408
    %v618 = vunpack.c.0.s8 %v617
    %v619 = vlaneseq
    %v620 = vshrl.u32 %v619, 7
    %v621 = vsub.s32 %v618, %v620
    %v622 = vrot.slane %v608, %v621
    %v623 = vcombine.low %v590, %v606
    %v624 = vcombine.high %v590, %v606
    %v626 = vunpack.c.l.s4 1934713408
    %v627 = vunpack.c.0.s8 %v626
    %v628 = vlaneseq
    %v629 = vshrl.u32 %v628, 7
    %v630 = vsub.s32 %v627, %v629
    %v631 = vrot.slane %v623, %v630
    %v633 = vunpack.c.l.s4 1934713408
    %v634 = vunpack.c.0.s8 %v633
    %v635 = vlaneseq
    %v636 = vshrl.u32 %v635, 7
    %v637 = vsub.s32 %v634, %v636
    %v638 = vrot.slane %v624, %v637
    %v639 = vcombine.high %v615, 0.0
    %v640 = vcombine.high %v622, 0.0
    %v641 = vcombine.high %v631, 0.0
    %v642 = vcombine.high %v638, 0.0
    %v643 = vcombine.low %v547, %v554
    %v645 = vunpack.c.l.s4 1983009808
    %v646 = vunpack.c.0.s8 %v645
    %v647 = vlaneseq
    %v648 = vshrl.u32 %v647, 7
    %v649 = vsub.s32 %v646, %v648
    %v650 = vrot.slane %v643, %v649
    %v651 = vcombine.low %v571, %v572
    %v653 = vunpack.c.l.s4 1983009808
    %v654 = vunpack.c.0.s8 %v653
    %v655 = vlaneseq
    %v656 = vshrl.u32 %v655, 7
    %v657 = vsub.s32 %v654, %v656
    %v658 = vrot.slane %v651, %v657
    %v659 = vcombine.low %v563, %v570
    %v661 = vunpack.c.l.s4 1983009808
    %v662 = vunpack.c.0.s8 %v661
    %v663 = vlaneseq
    %v664 = vshrl.u32 %v663, 7
    %v665 = vsub.s32 %v662, %v664
    %v666 = vrot.slane %v659, %v665
    %v667 = vcombine.low %v573, %v574
    %v669 = vunpack.c.l.s4 1983009808
    %v670 = vunpack.c.0.s8 %v669
    %v671 = vlaneseq
    %v672 = vshrl.u32 %v671, 7
    %v673 = vsub.s32 %v670, %v672
    %v674 = vrot.slane %v667, %v673
    %v675 = vcombine.low %v650, %v658
    %v676 = vcombine.high %v650, %v658
    %v678 = vunpack.c.l.s4 1934713408
    %v679 = vunpack.c.0.s8 %v678
    %v680 = vlaneseq
    %v681 = vshrl.u32 %v680, 7
    %v682 = vsub.s32 %v679, %v681
    %v683 = vrot.slane %v675, %v682
    %v685 = vunpack.c.l.s4 1934713408
    %v686 = vunpack.c.0.s8 %v685
    %v687 = vlaneseq
    %v688 = vshrl.u32 %v687, 7
    %v689 = vsub.s32 %v686, %v688
    %v690 = vrot.slane %v676, %v689
    %v691 = vcombine.low %v666, %v674
    %v692 = vcombine.high %v666, %v674
    %v694 = vunpack.c.l.s4 1934713408
    %v695 = vunpack.c.0.s8 %v694
    %v696 = vlaneseq
    %v697 = vshrl.u32 %v696, 7
    %v698 = vsub.s32 %v695, %v697
    %v699 = vrot.slane %v691, %v698
    %v701 = vunpack.c.l.s4 1934713408
    %v702 = vunpack.c.0.s8 %v701
    %v703 = vlaneseq
    %v704 = vshrl.u32 %v703, 7
    %v705 = vsub.s32 %v702, %v704
    %v706 = vrot.slane %v692, %v705
    %v707 = vcombine.low %v683, %v699
    %v708 = vcombine.high %v683, %v699
    %v709 = vcombine.low %v690, %v706
    %v710 = vcombine.high %v690, %v706
    %v711 = vcombine.low %v615, %v622
    %v713 = vunpack.c.l.s4 1983009808
    %v714 = vunpack.c.0.s8 %v713
    %v715 = vlaneseq
    %v716 = vshrl.u32 %v715, 7
    %v717 = vsub.s32 %v714, %v716
    %v718 = vrot.slane %v711, %v717
    %v719 = vcombine.low %v639, %v640
    %v721 = vunpack.c.l.s4 1983009808
    %v722 = vunpack.c.0.s8 %v721
    %v723 = vlaneseq
    %v724 = vshrl.u32 %v723, 7
    %v725 = vsub.s32 %v722, %v724
    %v726 = vrot.slane %v719, %v725
    %v727 = vcombine.low %v631, %v638
    %v729 = vunpack.c.l.s4 1983009808
    %v730 = vunpack.c.0.s8 %v729
    %v731 = vlaneseq
    %v732 = vshrl.u32 %v731, 7
    %v733 = vsub.s32 %v730, %v732
    %v734 = vrot.slane %v727, %v733
    %v735 = vcombine.low %v641, %v642
    %v737 = vunpack.c.l.s4 1983009808
    %v738 = vunpack.c.0.s8 %v737
    %v739 = vlaneseq
    %v740 = vshrl.u32 %v739, 7
    %v741 = vsub.s32 %v738, %v740
    %v742 = vrot.slane %v735, %v741
    %v743 = vcombine.low %v718, %v726
    %v744 = vcombine.high %v718, %v726
    %v746 = vunpack.c.l.s4 1934713408
    %v747 = vunpack.c.0.s8 %v746
    %v748 = vlaneseq
    %v749 = vshrl.u32 %v748, 7
    %v750 = vsub.s32 %v747, %v749
    %v751 = vrot.slane %v743, %v750
    %v753 = vunpack.c.l.s4 1934713408
    %v754 = vunpack.c.0.s8 %v753
    %v755 = vlaneseq
    %v756 = vshrl.u32 %v755, 7
    %v757 = vsub.s32 %v754, %v756
    %v758 = vrot.slane %v744, %v757
    %v759 = vcombine.low %v734, %v742
    %v760 = vcombine.high %v734, %v742
    %v762 = vunpack.c.l.s4 1934713408
    %v763 = vunpack.c.0.s8 %v762
    %v764 = vlaneseq
    %v765 = vshrl.u32 %v764, 7
    %v766 = vsub.s32 %v763, %v765
    %v767 = vrot.slane %v759, %v766
    %v769 = vunpack.c.l.s4 1934713408
    %v770 = vunpack.c.0.s8 %v769
    %v771 = vlaneseq
    %v772 = vshrl.u32 %v771, 7
    %v773 = vsub.s32 %v770, %v772
    %v774 = vrot.slane %v760, %v773
    %v775 = vcombine.low %v751, %v767
    %v776 = vcombine.high %v751, %v767
    %v777 = vcombine.low %v758, %v774
    %v778 = vcombine.high %v758, %v774
    %779 = vrot.lane.b32.xlu0 %v185, 64
    %v780 = vpop.permute.xlu0 %779
    %781 = vrot.lane.b32.xlu0 %v188, 64
    %v782 = vpop.permute.xlu0 %781
    %783 = vrot.lane.b32.xlu0 %v194, 64
    %v784 = vpop.permute.xlu0 %783
    %785 = vrot.lane.b32.xlu0 %v196, 64
    %v786 = vpop.permute.xlu0 %785
    %787 = vrot.lane.b32.xlu0 %v200, 64
    %v788 = vpop.permute.xlu0 %787
    %789 = vrot.lane.b32.xlu0 %v202, 64
    %v790 = vpop.permute.xlu0 %789
    %791 = vrot.lane.b32.xlu0 %v206, 64
    %v792 = vpop.permute.xlu0 %791
    %793 = vrot.lane.b32.xlu0 %v208, 64
    %v794 = vpop.permute.xlu0 %793
    %v803 = vcombine.low %v780, %v788
    %v804 = vcombine.high %v780, %v788
    %v806 = vunpack.c.l.s4 1983009808
    %v807 = vunpack.c.0.s8 %v806
    %v808 = vlaneseq
    %v809 = vshrl.u32 %v808, 7
    %v810 = vsub.s32 %v807, %v809
    %v811 = vrot.slane %v803, %v810
    %v813 = vunpack.c.l.s4 1983009808
    %v814 = vunpack.c.0.s8 %v813
    %v815 = vlaneseq
    %v816 = vshrl.u32 %v815, 7
    %v817 = vsub.s32 %v814, %v816
    %v818 = vrot.slane %v804, %v817
    %v819 = vcombine.low %v784, %v792
    %v820 = vcombine.high %v784, %v792
    %v822 = vunpack.c.l.s4 1983009808
    %v823 = vunpack.c.0.s8 %v822
    %v824 = vlaneseq
    %v825 = vshrl.u32 %v824, 7
    %v826 = vsub.s32 %v823, %v825
    %v827 = vrot.slane %v819, %v826
    %v829 = vunpack.c.l.s4 1983009808
    %v830 = vunpack.c.0.s8 %v829
    %v831 = vlaneseq
    %v832 = vshrl.u32 %v831, 7
    %v833 = vsub.s32 %v830, %v832
    %v834 = vrot.slane %v820, %v833
    %v835 = vcombine.low %v811, %v827
    %v836 = vcombine.high %v811, %v827
    %v838 = vunpack.c.l.s4 1934713408
    %v839 = vunpack.c.0.s8 %v838
    %v840 = vlaneseq
    %v841 = vshrl.u32 %v840, 7
    %v842 = vsub.s32 %v839, %v841
    %v843 = vrot.slane %v835, %v842
    %v845 = vunpack.c.l.s4 1934713408
    %v846 = vunpack.c.0.s8 %v845
    %v847 = vlaneseq
    %v848 = vshrl.u32 %v847, 7
    %v849 = vsub.s32 %v846, %v848
    %v850 = vrot.slane %v836, %v849
    %v851 = vcombine.low %v818, %v834
    %v852 = vcombine.high %v818, %v834
    %v854 = vunpack.c.l.s4 1934713408
    %v855 = vunpack.c.0.s8 %v854
    %v856 = vlaneseq
    %v857 = vshrl.u32 %v856, 7
    %v858 = vsub.s32 %v855, %v857
    %v859 = vrot.slane %v851, %v858
    %v861 = vunpack.c.l.s4 1934713408
    %v862 = vunpack.c.0.s8 %v861
    %v863 = vlaneseq
    %v864 = vshrl.u32 %v863, 7
    %v865 = vsub.s32 %v862, %v864
    %v866 = vrot.slane %v852, %v865
    %v867 = vcombine.high %v843, 0.0
    %v868 = vcombine.high %v850, 0.0
    %v869 = vcombine.high %v859, 0.0
    %v870 = vcombine.high %v866, 0.0
    %v871 = vcombine.low %v782, %v790
    %v872 = vcombine.high %v782, %v790
    %v874 = vunpack.c.l.s4 1983009808
    %v875 = vunpack.c.0.s8 %v874
    %v876 = vlaneseq
    %v877 = vshrl.u32 %v876, 7
    %v878 = vsub.s32 %v875, %v877
    %v879 = vrot.slane %v871, %v878
    %v881 = vunpack.c.l.s4 1983009808
    %v882 = vunpack.c.0.s8 %v881
    %v883 = vlaneseq
    %v884 = vshrl.u32 %v883, 7
    %v885 = vsub.s32 %v882, %v884
    %v886 = vrot.slane %v872, %v885
    %v887 = vcombine.low %v786, %v794
    %v888 = vcombine.high %v786, %v794
    %v890 = vunpack.c.l.s4 1983009808
    %v891 = vunpack.c.0.s8 %v890
    %v892 = vlaneseq
    %v893 = vshrl.u32 %v892, 7
    %v894 = vsub.s32 %v891, %v893
    %v895 = vrot.slane %v887, %v894
    %v897 = vunpack.c.l.s4 1983009808
    %v898 = vunpack.c.0.s8 %v897
    %v899 = vlaneseq
    %v900 = vshrl.u32 %v899, 7
    %v901 = vsub.s32 %v898, %v900
    %v902 = vrot.slane %v888, %v901
    %v903 = vcombine.low %v879, %v895
    %v904 = vcombine.high %v879, %v895
    %v906 = vunpack.c.l.s4 1934713408
    %v907 = vunpack.c.0.s8 %v906
    %v908 = vlaneseq
    %v909 = vshrl.u32 %v908, 7
    %v910 = vsub.s32 %v907, %v909
    %v911 = vrot.slane %v903, %v910
    %v913 = vunpack.c.l.s4 1934713408
    %v914 = vunpack.c.0.s8 %v913
    %v915 = vlaneseq
    %v916 = vshrl.u32 %v915, 7
    %v917 = vsub.s32 %v914, %v916
    %v918 = vrot.slane %v904, %v917
    %v919 = vcombine.low %v886, %v902
    %v920 = vcombine.high %v886, %v902
    %v922 = vunpack.c.l.s4 1934713408
    %v923 = vunpack.c.0.s8 %v922
    %v924 = vlaneseq
    %v925 = vshrl.u32 %v924, 7
    %v926 = vsub.s32 %v923, %v925
    %v927 = vrot.slane %v919, %v926
    %v929 = vunpack.c.l.s4 1934713408
    %v930 = vunpack.c.0.s8 %v929
    %v931 = vlaneseq
    %v932 = vshrl.u32 %v931, 7
    %v933 = vsub.s32 %v930, %v932
    %v934 = vrot.slane %v920, %v933
    %v935 = vcombine.high %v911, 0.0
    %v936 = vcombine.high %v918, 0.0
    %v937 = vcombine.high %v927, 0.0
    %v938 = vcombine.high %v934, 0.0
    %v939 = vcombine.low %v843, %v850
    %v941 = vunpack.c.l.s4 1983009808
    %v942 = vunpack.c.0.s8 %v941
    %v943 = vlaneseq
    %v944 = vshrl.u32 %v943, 7
    %v945 = vsub.s32 %v942, %v944
    %v946 = vrot.slane %v939, %v945
    %v947 = vcombine.low %v867, %v868
    %v949 = vunpack.c.l.s4 1983009808
    %v950 = vunpack.c.0.s8 %v949
    %v951 = vlaneseq
    %v952 = vshrl.u32 %v951, 7
    %v953 = vsub.s32 %v950, %v952
    %v954 = vrot.slane %v947, %v953
    %v955 = vcombine.low %v859, %v866
    %v957 = vunpack.c.l.s4 1983009808
    %v958 = vunpack.c.0.s8 %v957
    %v959 = vlaneseq
    %v960 = vshrl.u32 %v959, 7
    %v961 = vsub.s32 %v958, %v960
    %v962 = vrot.slane %v955, %v961
    %v963 = vcombine.low %v869, %v870
    %v965 = vunpack.c.l.s4 1983009808
    %v966 = vunpack.c.0.s8 %v965
    %v967 = vlaneseq
    %v968 = vshrl.u32 %v967, 7
    %v969 = vsub.s32 %v966, %v968
    %v970 = vrot.slane %v963, %v969
    %v971 = vcombine.low %v946, %v954
    %v972 = vcombine.high %v946, %v954
    %v974 = vunpack.c.l.s4 1934713408
    %v975 = vunpack.c.0.s8 %v974
    %v976 = vlaneseq
    %v977 = vshrl.u32 %v976, 7
    %v978 = vsub.s32 %v975, %v977
    %v979 = vrot.slane %v971, %v978
    %v981 = vunpack.c.l.s4 1934713408
    %v982 = vunpack.c.0.s8 %v981
    %v983 = vlaneseq
    %v984 = vshrl.u32 %v983, 7
    %v985 = vsub.s32 %v982, %v984
    %v986 = vrot.slane %v972, %v985
    %v987 = vcombine.low %v962, %v970
    %v988 = vcombine.high %v962, %v970
    %v990 = vunpack.c.l.s4 1934713408
    %v991 = vunpack.c.0.s8 %v990
    %v992 = vlaneseq
    %v993 = vshrl.u32 %v992, 7
    %v994 = vsub.s32 %v991, %v993
    %v995 = vrot.slane %v987, %v994
    %v997 = vunpack.c.l.s4 1934713408
    %v998 = vunpack.c.0.s8 %v997
    %v999 = vlaneseq
    %v1000 = vshrl.u32 %v999, 7
    %v1001 = vsub.s32 %v998, %v1000
    %v1002 = vrot.slane %v988, %v1001
    %v1003 = vcombine.low %v979, %v995
    %v1004 = vcombine.high %v979, %v995
    %v1005 = vcombine.low %v986, %v1002
    %v1006 = vcombine.high %v986, %v1002
    %v1007 = vcombine.low %v911, %v918
    %v1009 = vunpack.c.l.s4 1983009808
    %v1010 = vunpack.c.0.s8 %v1009
    %v1011 = vlaneseq
    %v1012 = vshrl.u32 %v1011, 7
    %v1013 = vsub.s32 %v1010, %v1012
    %v1014 = vrot.slane %v1007, %v1013
    %v1015 = vcombine.low %v935, %v936
    %v1017 = vunpack.c.l.s4 1983009808
    %v1018 = vunpack.c.0.s8 %v1017
    %v1019 = vlaneseq
    %v1020 = vshrl.u32 %v1019, 7
    %v1021 = vsub.s32 %v1018, %v1020
    %v1022 = vrot.slane %v1015, %v1021
    %v1023 = vcombine.low %v927, %v934
    %v1025 = vunpack.c.l.s4 1983009808
    %v1026 = vunpack.c.0.s8 %v1025
    %v1027 = vlaneseq
    %v1028 = vshrl.u32 %v1027, 7
    %v1029 = vsub.s32 %v1026, %v1028
    %v1030 = vrot.slane %v1023, %v1029
    %v1031 = vcombine.low %v937, %v938
    %v1033 = vunpack.c.l.s4 1983009808
    %v1034 = vunpack.c.0.s8 %v1033
    %v1035 = vlaneseq
    %v1036 = vshrl.u32 %v1035, 7
    %v1037 = vsub.s32 %v1034, %v1036
    %v1038 = vrot.slane %v1031, %v1037
    %v1039 = vcombine.low %v1014, %v1022
    %v1040 = vcombine.high %v1014, %v1022
    %v1042 = vunpack.c.l.s4 1934713408
    %v1043 = vunpack.c.0.s8 %v1042
    %v1044 = vlaneseq
    %v1045 = vshrl.u32 %v1044, 7
    %v1046 = vsub.s32 %v1043, %v1045
    %v1047 = vrot.slane %v1039, %v1046
    %v1049 = vunpack.c.l.s4 1934713408
    %v1050 = vunpack.c.0.s8 %v1049
    %v1051 = vlaneseq
    %v1052 = vshrl.u32 %v1051, 7
    %v1053 = vsub.s32 %v1050, %v1052
    %v1054 = vrot.slane %v1040, %v1053
    %v1055 = vcombine.low %v1030, %v1038
    %v1056 = vcombine.high %v1030, %v1038
    %v1058 = vunpack.c.l.s4 1934713408
    %v1059 = vunpack.c.0.s8 %v1058
    %v1060 = vlaneseq
    %v1061 = vshrl.u32 %v1060, 7
    %v1062 = vsub.s32 %v1059, %v1061
    %v1063 = vrot.slane %v1055, %v1062
    %v1065 = vunpack.c.l.s4 1934713408
    %v1066 = vunpack.c.0.s8 %v1065
    %v1067 = vlaneseq
    %v1068 = vshrl.u32 %v1067, 7
    %v1069 = vsub.s32 %v1066, %v1068
    %v1070 = vrot.slane %v1056, %v1069
    %v1071 = vcombine.low %v1047, %v1063
    %v1072 = vcombine.high %v1047, %v1063
    %v1073 = vcombine.low %v1054, %v1070
    %v1074 = vcombine.high %v1054, %v1070
    %v1075 = vpack.c.bf16 %v411, %v411
    %v1076 = vpack.c.bf16 %v479, %v479
    %v1077 = vpack.c.bf16 %v412, %v412
    %v1078 = vpack.c.bf16 %v480, %v480
    %v1079 = vpack.c.bf16 %v413, %v413
    %v1080 = vpack.c.bf16 %v481, %v481
    %v1081 = vpack.c.bf16 %v414, %v414
    %v1082 = vpack.c.bf16 %v482, %v482
    %v1083 = vpack.c.bf16 %v707, %v707
    %v1084 = vpack.c.bf16 %v775, %v775
    %v1085 = vpack.c.bf16 %v708, %v708
    %v1086 = vpack.c.bf16 %v776, %v776
    %v1087 = vpack.c.bf16 %v709, %v709
    %v1088 = vpack.c.bf16 %v777, %v777
    %v1089 = vpack.c.bf16 %v710, %v710
    %v1090 = vpack.c.bf16 %v778, %v778
    %v1099 = vlaneseq
    %v1100 = vshrl.u32 %v1099, 7
    %v1101 = vsub.s32 0, %v1100
    %v1102 = vrot.slane %v115, %v1101
    %v1103 = vlaneseq
    %v1104 = vshrl.u32 %v1103, 7
    %v1105 = vsub.s32 0, %v1104
    %v1106 = vrot.slane %v116, %v1105
    %v1107 = vlaneseq
    %v1108 = vshrl.u32 %v1107, 7
    %v1109 = vsub.s32 0, %v1108
    %v1110 = vrot.slane %v117, %v1109
    %v1111 = vlaneseq
    %v1112 = vshrl.u32 %v1111, 7
    %v1113 = vsub.s32 0, %v1112
    %v1114 = vrot.slane %v118, %v1113
    %v1115 = vlaneseq
    %v1116 = vshrl.u32 %v1115, 7
    %v1117 = vsub.s32 0, %v1116
    %v1118 = vrot.slane %v119, %v1117
    %v1119 = vlaneseq
    %v1120 = vshrl.u32 %v1119, 7
    %v1121 = vsub.s32 0, %v1120
    %v1122 = vrot.slane %v120, %v1121
    %v1123 = vlaneseq
    %v1124 = vshrl.u32 %v1123, 7
    %v1125 = vsub.s32 0, %v1124
    %v1126 = vrot.slane %v121, %v1125
    %v1127 = vlaneseq
    %v1128 = vshrl.u32 %v1127, 7
    %v1129 = vsub.s32 0, %v1128
    %v1130 = vrot.slane %v122, %v1129
    %vm1139 = vcmask 64512
    %v1141 = vsel %vm1139, %v1075, 0
    %v1144 = vsel %vm1139, %v1083, 0
    %1146 = vmatprep.subr.bf16.mxu0 0
    %1147 = vmatpush1.bf16.xpose.msra.mxu0 %v1144
    %1148 = vmatprep.subr.bf16.mxu0 0
    %1149 = vmatpush1.bf16.xpose.msra.mxu0 0
    %1150 = vmatprep.subr.bf16.mxu0 0
    %1151 = vmatpush1.bf16.xpose.msra.mxu0 0
    %1152 = vmatprep.subr.bf16.mxu0 0
    %1153 = vmatpush1.bf16.xpose.msra.mxu0 0
    %1154 = vmatprep.subr.bf16.mxu0 0
    %1155 = vmatpush1.bf16.xpose.msra.mxu0 0
    %1156 = vmatprep.subr.bf16.mxu0 0
    %1157 = vmatpush1.bf16.xpose.msra.mxu0 0
    %1158 = vmatprep.subr.bf16.mxu0 0
    %1159 = vmatpush1.bf16.xpose.msra.mxu0 0
    %1160 = vmatprep.subr.bf16.mxu0 0
    %1161 = vmatpush1.bf16.xpose.msra.mxu0 0
    %1162 = vmatprep.subr.bf16.mxu0 0
    %1163 = vmatpush1.bf16.xpose.msra.mxu0 0
    %1164 = vmatprep.subr.bf16.mxu0 0
    %1165 = vmatpush1.bf16.xpose.msra.mxu0 0
    %1166 = vmatprep.subr.bf16.mxu0 0
    %1167 = vmatpush1.bf16.xpose.msra.mxu0 0
    %1168 = vmatprep.subr.bf16.mxu0 0
    %1169 = vmatpush1.bf16.xpose.msra.mxu0 0
    %1170 = vmatprep.subr.bf16.mxu0 0
    %1171 = vmatpush1.bf16.xpose.msra.mxu0 0
    %1172 = vmatprep.subr.bf16.mxu0 0
    %1173 = vmatpush1.bf16.xpose.msra.mxu0 0
    %1174 = vmatprep.subr.bf16.mxu0 0
    %1175 = vmatpush1.bf16.xpose.msra.mxu0 0
    %1176 = vmatprep.subr.bf16.mxu0 0
    %1177 = vmatpush1.bf16.xpose.msra.mxu0 0
    %1178 = vmatprep.mubr.bf16.mxu0 0
    %1179 = vmatmul.mubr.bf16.gmra.mrb[0].mxu0 %v1141
    %v1180 = vpop.f32.mrb[0].mxu0
    %v1181 = vadd.f32 %v1102, %v1180
    %v1182 = vpop.f32.mrb[0].mxu0
    %v1183 = vpop.f32.mrb[0].mxu0
    %v1184 = vpop.f32.mrb[0].mxu0
    %1185 = vdwg.mxu0
    %v1187 = vsel %vm1139, %v1076, 0
    %v1190 = vsel %vm1139, %v1084, 0
    %1192 = vmatprep.subr.bf16.mxu0 0
    %1193 = vmatpush1.bf16.xpose.msra.mxu0 %v1190
    %1194 = vmatprep.subr.bf16.mxu0 0
    %1195 = vmatpush1.bf16.xpose.msra.mxu0 0
    %1196 = vmatprep.subr.bf16.mxu0 0
    %1197 = vmatpush1.bf16.xpose.msra.mxu0 0
    %1198 = vmatprep.subr.bf16.mxu0 0
    %1199 = vmatpush1.bf16.xpose.msra.mxu0 0
    %1200 = vmatprep.subr.bf16.mxu0 0
    %1201 = vmatpush1.bf16.xpose.msra.mxu0 0
    %1202 = vmatprep.subr.bf16.mxu0 0
    %1203 = vmatpush1.bf16.xpose.msra.mxu0 0
    %1204 = vmatprep.subr.bf16.mxu0 0
    %1205 = vmatpush1.bf16.xpose.msra.mxu0 0
    %1206 = vmatprep.subr.bf16.mxu0 0
    %1207 = vmatpush1.bf16.xpose.msra.mxu0 0
    %1208 = vmatprep.subr.bf16.mxu0 0
    %1209 = vmatpush1.bf16.xpose.msra.mxu0 0
    %1210 = vmatprep.subr.bf16.mxu0 0
    %1211 = vmatpush1.bf16.xpose.msra.mxu0 0
    %1212 = vmatprep.subr.bf16.mxu0 0
    %1213 = vmatpush1.bf16.xpose.msra.mxu0 0
    %1214 = vmatprep.subr.bf16.mxu0 0
    %1215 = vmatpush1.bf16.xpose.msra.mxu0 0
    %1216 = vmatprep.subr.bf16.mxu0 0
    %1217 = vmatpush1.bf16.xpose.msra.mxu0 0
    %1218 = vmatprep.subr.bf16.mxu0 0
    %1219 = vmatpush1.bf16.xpose.msra.mxu0 0
    %1220 = vmatprep.subr.bf16.mxu0 0
    %1221 = vmatpush1.bf16.xpose.msra.mxu0 0
    %1222 = vmatprep.subr.bf16.mxu0 0
    %1223 = vmatpush1.bf16.xpose.msra.mxu0 0
    %1224 = vmatprep.mubr.bf16.mxu0 0
    %1225 = vmatmul.mubr.bf16.gmra.mrb[0].mxu0 %v1187
    %v1226 = vpop.f32.mrb[0].mxu0
    %v1227 = vadd.f32 %v1106, %v1226
    %v1228 = vpop.f32.mrb[0].mxu0
    %v1229 = vpop.f32.mrb[0].mxu0
    %v1230 = vpop.f32.mrb[0].mxu0
    %1231 = vdwg.mxu0
    %v1233 = vsel %vm1139, %v1077, 0
    %v1236 = vsel %vm1139, %v1085, 0
    %1238 = vmatprep.subr.bf16.mxu0 0
    %1239 = vmatpush1.bf16.xpose.msra.mxu0 %v1236
    %1240 = vmatprep.subr.bf16.mxu0 0
    %1241 = vmatpush1.bf16.xpose.msra.mxu0 0
    %1242 = vmatprep.subr.bf16.mxu0 0
    %1243 = vmatpush1.bf16.xpose.msra.mxu0 0
    %1244 = vmatprep.subr.bf16.mxu0 0
    %1245 = vmatpush1.bf16.xpose.msra.mxu0 0
    %1246 = vmatprep.subr.bf16.mxu0 0
    %1247 = vmatpush1.bf16.xpose.msra.mxu0 0
    %1248 = vmatprep.subr.bf16.mxu0 0
    %1249 = vmatpush1.bf16.xpose.msra.mxu0 0
    %1250 = vmatprep.subr.bf16.mxu0 0
    %1251 = vmatpush1.bf16.xpose.msra.mxu0 0
    %1252 = vmatprep.subr.bf16.mxu0 0
    %1253 = vmatpush1.bf16.xpose.msra.mxu0 0
    %1254 = vmatprep.subr.bf16.mxu0 0
    %1255 = vmatpush1.bf16.xpose.msra.mxu0 0
    %1256 = vmatprep.subr.bf16.mxu0 0
    %1257 = vmatpush1.bf16.xpose.msra.mxu0 0
    %1258 = vmatprep.subr.bf16.mxu0 0
    %1259 = vmatpush1.bf16.xpose.msra.mxu0 0
    %1260 = vmatprep.subr.bf16.mxu0 0
    %1261 = vmatpush1.bf16.xpose.msra.mxu0 0
    %1262 = vmatprep.subr.bf16.mxu0 0
    %1263 = vmatpush1.bf16.xpose.msra.mxu0 0
    %1264 = vmatprep.subr.bf16.mxu0 0
    %1265 = vmatpush1.bf16.xpose.msra.mxu0 0
    %1266 = vmatprep.subr.bf16.mxu0 0
    %1267 = vmatpush1.bf16.xpose.msra.mxu0 0
    %1268 = vmatprep.subr.bf16.mxu0 0
    %1269 = vmatpush1.bf16.xpose.msra.mxu0 0
    %1270 = vmatprep.mubr.bf16.mxu0 0
    %1271 = vmatmul.mubr.bf16.gmra.mrb[0].mxu0 %v1233
    %v1272 = vpop.f32.mrb[0].mxu0
    %v1273 = vadd.f32 %v1110, %v1272
    %v1274 = vpop.f32.mrb[0].mxu0
    %v1275 = vpop.f32.mrb[0].mxu0
    %v1276 = vpop.f32.mrb[0].mxu0
    %1277 = vdwg.mxu0
    %v1279 = vsel %vm1139, %v1078, 0
    %v1282 = vsel %vm1139, %v1086, 0
    %1284 = vmatprep.subr.bf16.mxu0 0
    %1285 = vmatpush1.bf16.xpose.msra.mxu0 %v1282
    %1286 = vmatprep.subr.bf16.mxu0 0
    %1287 = vmatpush1.bf16.xpose.msra.mxu0 0
    %1288 = vmatprep.subr.bf16.mxu0 0
    %1289 = vmatpush1.bf16.xpose.msra.mxu0 0
    %1290 = vmatprep.subr.bf16.mxu0 0
    %1291 = vmatpush1.bf16.xpose.msra.mxu0 0
    %1292 = vmatprep.subr.bf16.mxu0 0
    %1293 = vmatpush1.bf16.xpose.msra.mxu0 0
    %1294 = vmatprep.subr.bf16.mxu0 0
    %1295 = vmatpush1.bf16.xpose.msra.mxu0 0
    %1296 = vmatprep.subr.bf16.mxu0 0
    %1297 = vmatpush1.bf16.xpose.msra.mxu0 0
    %1298 = vmatprep.subr.bf16.mxu0 0
    %1299 = vmatpush1.bf16.xpose.msra.mxu0 0
    %1300 = vmatprep.subr.bf16.mxu0 0
    %1301 = vmatpush1.bf16.xpose.msra.mxu0 0
    %1302 = vmatprep.subr.bf16.mxu0 0
    %1303 = vmatpush1.bf16.xpose.msra.mxu0 0
    %1304 = vmatprep.subr.bf16.mxu0 0
    %1305 = vmatpush1.bf16.xpose.msra.mxu0 0
    %1306 = vmatprep.subr.bf16.mxu0 0
    %1307 = vmatpush1.bf16.xpose.msra.mxu0 0
    %1308 = vmatprep.subr.bf16.mxu0 0
    %1309 = vmatpush1.bf16.xpose.msra.mxu0 0
    %1310 = vmatprep.subr.bf16.mxu0 0
    %1311 = vmatpush1.bf16.xpose.msra.mxu0 0
    %1312 = vmatprep.subr.bf16.mxu0 0
    %1313 = vmatpush1.bf16.xpose.msra.mxu0 0
    %1314 = vmatprep.subr.bf16.mxu0 0
    %1315 = vmatpush1.bf16.xpose.msra.mxu0 0
    %1316 = vmatprep.mubr.bf16.mxu0 0
    %1317 = vmatmul.mubr.bf16.gmra.mrb[0].mxu0 %v1279
    %v1318 = vpop.f32.mrb[0].mxu0
    %v1319 = vadd.f32 %v1114, %v1318
    %v1320 = vpop.f32.mrb[0].mxu0
    %v1321 = vpop.f32.mrb[0].mxu0
    %v1322 = vpop.f32.mrb[0].mxu0
    %1323 = vdwg.mxu0
    %v1325 = vsel %vm1139, %v1079, 0
    %v1328 = vsel %vm1139, %v1087, 0
    %1330 = vmatprep.subr.bf16.mxu0 0
    %1331 = vmatpush1.bf16.xpose.msra.mxu0 %v1328
    %1332 = vmatprep.subr.bf16.mxu0 0
    %1333 = vmatpush1.bf16.xpose.msra.mxu0 0
    %1334 = vmatprep.subr.bf16.mxu0 0
    %1335 = vmatpush1.bf16.xpose.msra.mxu0 0
    %1336 = vmatprep.subr.bf16.mxu0 0
    %1337 = vmatpush1.bf16.xpose.msra.mxu0 0
    %1338 = vmatprep.subr.bf16.mxu0 0
    %1339 = vmatpush1.bf16.xpose.msra.mxu0 0
    %1340 = vmatprep.subr.bf16.mxu0 0
    %1341 = vmatpush1.bf16.xpose.msra.mxu0 0
    %1342 = vmatprep.subr.bf16.mxu0 0
    %1343 = vmatpush1.bf16.xpose.msra.mxu0 0
    %1344 = vmatprep.subr.bf16.mxu0 0
    %1345 = vmatpush1.bf16.xpose.msra.mxu0 0
    %1346 = vmatprep.subr.bf16.mxu0 0
    %1347 = vmatpush1.bf16.xpose.msra.mxu0 0
    %1348 = vmatprep.subr.bf16.mxu0 0
    %1349 = vmatpush1.bf16.xpose.msra.mxu0 0
    %1350 = vmatprep.subr.bf16.mxu0 0
    %1351 = vmatpush1.bf16.xpose.msra.mxu0 0
    %1352 = vmatprep.subr.bf16.mxu0 0
    %1353 = vmatpush1.bf16.xpose.msra.mxu0 0
    %1354 = vmatprep.subr.bf16.mxu0 0
    %1355 = vmatpush1.bf16.xpose.msra.mxu0 0
    %1356 = vmatprep.subr.bf16.mxu0 0
    %1357 = vmatpush1.bf16.xpose.msra.mxu0 0
    %1358 = vmatprep.subr.bf16.mxu0 0
    %1359 = vmatpush1.bf16.xpose.msra.mxu0 0
    %1360 = vmatprep.subr.bf16.mxu0 0
    %1361 = vmatpush1.bf16.xpose.msra.mxu0 0
    %1362 = vmatprep.mubr.bf16.mxu0 0
    %1363 = vmatmul.mubr.bf16.gmra.mrb[0].mxu0 %v1325
    %v1364 = vpop.f32.mrb[0].mxu0
    %v1365 = vadd.f32 %v1118, %v1364
    %v1366 = vpop.f32.mrb[0].mxu0
    %v1367 = vpop.f32.mrb[0].mxu0
    %v1368 = vpop.f32.mrb[0].mxu0
    %1369 = vdwg.mxu0
    %v1371 = vsel %vm1139, %v1080, 0
    %v1374 = vsel %vm1139, %v1088, 0
    %1376 = vmatprep.subr.bf16.mxu0 0
    %1377 = vmatpush1.bf16.xpose.msra.mxu0 %v1374
    %1378 = vmatprep.subr.bf16.mxu0 0
    %1379 = vmatpush1.bf16.xpose.msra.mxu0 0
    %1380 = vmatprep.subr.bf16.mxu0 0
    %1381 = vmatpush1.bf16.xpose.msra.mxu0 0
    %1382 = vmatprep.subr.bf16.mxu0 0
    %1383 = vmatpush1.bf16.xpose.msra.mxu0 0
    %1384 = vmatprep.subr.bf16.mxu0 0
    %1385 = vmatpush1.bf16.xpose.msra.mxu0 0
    %1386 = vmatprep.subr.bf16.mxu0 0
    %1387 = vmatpush1.bf16.xpose.msra.mxu0 0
    %1388 = vmatprep.subr.bf16.mxu0 0
    %1389 = vmatpush1.bf16.xpose.msra.mxu0 0
    %1390 = vmatprep.subr.bf16.mxu0 0
    %1391 = vmatpush1.bf16.xpose.msra.mxu0 0
    %1392 = vmatprep.subr.bf16.mxu0 0
    %1393 = vmatpush1.bf16.xpose.msra.mxu0 0
    %1394 = vmatprep.subr.bf16.mxu0 0
    %1395 = vmatpush1.bf16.xpose.msra.mxu0 0
    %1396 = vmatprep.subr.bf16.mxu0 0
    %1397 = vmatpush1.bf16.xpose.msra.mxu0 0
    %1398 = vmatprep.subr.bf16.mxu0 0
    %1399 = vmatpush1.bf16.xpose.msra.mxu0 0
    %1400 = vmatprep.subr.bf16.mxu0 0
    %1401 = vmatpush1.bf16.xpose.msra.mxu0 0
    %1402 = vmatprep.subr.bf16.mxu0 0
    %1403 = vmatpush1.bf16.xpose.msra.mxu0 0
    %1404 = vmatprep.subr.bf16.mxu0 0
    %1405 = vmatpush1.bf16.xpose.msra.mxu0 0
    %1406 = vmatprep.subr.bf16.mxu0 0
    %1407 = vmatpush1.bf16.xpose.msra.mxu0 0
    %1408 = vmatprep.mubr.bf16.mxu0 0
    %1409 = vmatmul.mubr.bf16.gmra.mrb[0].mxu0 %v1371
    %v1410 = vpop.f32.mrb[0].mxu0
    %v1411 = vadd.f32 %v1122, %v1410
    %v1412 = vpop.f32.mrb[0].mxu0
    %v1413 = vpop.f32.mrb[0].mxu0
    %v1414 = vpop.f32.mrb[0].mxu0
    %1415 = vdwg.mxu0
    %v1417 = vsel %vm1139, %v1081, 0
    %v1420 = vsel %vm1139, %v1089, 0
    %1422 = vmatprep.subr.bf16.mxu0 0
    %1423 = vmatpush1.bf16.xpose.msra.mxu0 %v1420
    %1424 = vmatprep.subr.bf16.mxu0 0
    %1425 = vmatpush1.bf16.xpose.msra.mxu0 0
    %1426 = vmatprep.subr.bf16.mxu0 0
    %1427 = vmatpush1.bf16.xpose.msra.mxu0 0
    %1428 = vmatprep.subr.bf16.mxu0 0
    %1429 = vmatpush1.bf16.xpose.msra.mxu0 0
    %1430 = vmatprep.subr.bf16.mxu0 0
    %1431 = vmatpush1.bf16.xpose.msra.mxu0 0
    %1432 = vmatprep.subr.bf16.mxu0 0
    %1433 = vmatpush1.bf16.xpose.msra.mxu0 0
    %1434 = vmatprep.subr.bf16.mxu0 0
    %1435 = vmatpush1.bf16.xpose.msra.mxu0 0
    %1436 = vmatprep.subr.bf16.mxu0 0
    %1437 = vmatpush1.bf16.xpose.msra.mxu0 0
    %1438 = vmatprep.subr.bf16.mxu0 0
    %1439 = vmatpush1.bf16.xpose.msra.mxu0 0
    %1440 = vmatprep.subr.bf16.mxu0 0
    %1441 = vmatpush1.bf16.xpose.msra.mxu0 0
    %1442 = vmatprep.subr.bf16.mxu0 0
    %1443 = vmatpush1.bf16.xpose.msra.mxu0 0
    %1444 = vmatprep.subr.bf16.mxu0 0
    %1445 = vmatpush1.bf16.xpose.msra.mxu0 0
    %1446 = vmatprep.subr.bf16.mxu0 0
    %1447 = vmatpush1.bf16.xpose.msra.mxu0 0
    %1448 = vmatprep.subr.bf16.mxu0 0
    %1449 = vmatpush1.bf16.xpose.msra.mxu0 0
    %1450 = vmatprep.subr.bf16.mxu0 0
    %1451 = vmatpush1.bf16.xpose.msra.mxu0 0
    %1452 = vmatprep.subr.bf16.mxu0 0
    %1453 = vmatpush1.bf16.xpose.msra.mxu0 0
    %1454 = vmatprep.mubr.bf16.mxu0 0
    %1455 = vmatmul.mubr.bf16.gmra.mrb[0].mxu0 %v1417
    %v1456 = vpop.f32.mrb[0].mxu0
    %v1457 = vadd.f32 %v1126, %v1456
    %v1458 = vpop.f32.mrb[0].mxu0
    %v1459 = vpop.f32.mrb[0].mxu0
    %v1460 = vpop.f32.mrb[0].mxu0
    %1461 = vdwg.mxu0
    %v1463 = vsel %vm1139, %v1082, 0
    %v1466 = vsel %vm1139, %v1090, 0
    %1468 = vmatprep.subr.bf16.mxu0 0
    %1469 = vmatpush1.bf16.xpose.msra.mxu0 %v1466
    %1470 = vmatprep.subr.bf16.mxu0 0
    %1471 = vmatpush1.bf16.xpose.msra.mxu0 0
    %1472 = vmatprep.subr.bf16.mxu0 0
    %1473 = vmatpush1.bf16.xpose.msra.mxu0 0
    %1474 = vmatprep.subr.bf16.mxu0 0
    %1475 = vmatpush1.bf16.xpose.msra.mxu0 0
    %1476 = vmatprep.subr.bf16.mxu0 0
    %1477 = vmatpush1.bf16.xpose.msra.mxu0 0
    %1478 = vmatprep.subr.bf16.mxu0 0
    %1479 = vmatpush1.bf16.xpose.msra.mxu0 0
    %1480 = vmatprep.subr.bf16.mxu0 0
    %1481 = vmatpush1.bf16.xpose.msra.mxu0 0
    %1482 = vmatprep.subr.bf16.mxu0 0
    %1483 = vmatpush1.bf16.xpose.msra.mxu0 0
    %1484 = vmatprep.subr.bf16.mxu0 0
    %1485 = vmatpush1.bf16.xpose.msra.mxu0 0
    %1486 = vmatprep.subr.bf16.mxu0 0
    %1487 = vmatpush1.bf16.xpose.msra.mxu0 0
    %1488 = vmatprep.subr.bf16.mxu0 0
    %1489 = vmatpush1.bf16.xpose.msra.mxu0 0
    %1490 = vmatprep.subr.bf16.mxu0 0
    %1491 = vmatpush1.bf16.xpose.msra.mxu0 0
    %1492 = vmatprep.subr.bf16.mxu0 0
    %1493 = vmatpush1.bf16.xpose.msra.mxu0 0
    %1494 = vmatprep.subr.bf16.mxu0 0
    %1495 = vmatpush1.bf16.xpose.msra.mxu0 0
    %1496 = vmatprep.subr.bf16.mxu0 0
    %1497 = vmatpush1.bf16.xpose.msra.mxu0 0
    %1498 = vmatprep.subr.bf16.mxu0 0
    %1499 = vmatpush1.bf16.xpose.msra.mxu0 0
    %1500 = vmatprep.mubr.bf16.mxu0 0
    %1501 = vmatmul.mubr.bf16.gmra.mrb[0].mxu0 %v1463
    %v1502 = vpop.f32.mrb[0].mxu0
    %v1503 = vadd.f32 %v1130, %v1502
    %v1504 = vpop.f32.mrb[0].mxu0
    %v1505 = vpop.f32.mrb[0].mxu0
    %v1506 = vpop.f32.mrb[0].mxu0
    %1507 = vdwg.mxu0
    %v1508 = vsel %vm1139, %v1181, -inf
    %1509 = vmax.xlane.f32.xlu0 %v1508
    %v1510 = vpop.xlane.xlu0 %1509
    %v1511 = vsel %vm1139, %v1227, -inf
    %1512 = vmax.xlane.f32.xlu0 %v1511
    %v1513 = vpop.xlane.xlu0 %1512
    %v1514 = vsel %vm1139, %v1273, -inf
    %1515 = vmax.xlane.f32.xlu0 %v1514
    %v1516 = vpop.xlane.xlu0 %1515
    %v1517 = vsel %vm1139, %v1319, -inf
    %1518 = vmax.xlane.f32.xlu0 %v1517
    %v1519 = vpop.xlane.xlu0 %1518
    %v1520 = vsel %vm1139, %v1365, -inf
    %1521 = vmax.xlane.f32.xlu0 %v1520
    %v1522 = vpop.xlane.xlu0 %1521
    %v1523 = vsel %vm1139, %v1411, -inf
    %1524 = vmax.xlane.f32.xlu0 %v1523
    %v1525 = vpop.xlane.xlu0 %1524
    %v1526 = vsel %vm1139, %v1457, -inf
    %1527 = vmax.xlane.f32.xlu0 %v1526
    %v1528 = vpop.xlane.xlu0 %1527
    %v1529 = vsel %vm1139, %v1503, -inf
    %1530 = vmax.xlane.f32.xlu0 %v1529
    %v1531 = vpop.xlane.xlu0 %1530
    %v1532 = vsub.f32 %v1181, %v1510
    %v1533 = vsub.f32 %v1227, %v1513
    %v1534 = vsub.f32 %v1273, %v1516
    %v1535 = vsub.f32 %v1319, %v1519
    %v1536 = vsub.f32 %v1365, %v1522
    %v1537 = vsub.f32 %v1411, %v1525
    %v1538 = vsub.f32 %v1457, %v1528
    %v1539 = vsub.f32 %v1503, %v1531
    %v1540 = vmul.f32 %v1532, 1.442695
    %v1541 = vpow.pop %v1540
    %v1542 = vmul.f32 %v1533, 1.442695
    %v1543 = vpow.pop %v1542
    %v1544 = vmul.f32 %v1534, 1.442695
    %v1545 = vpow.pop %v1544
    %v1546 = vmul.f32 %v1535, 1.442695
    %v1547 = vpow.pop %v1546
    %v1548 = vmul.f32 %v1536, 1.442695
    %v1549 = vpow.pop %v1548
    %v1550 = vmul.f32 %v1537, 1.442695
    %v1551 = vpow.pop %v1550
    %v1552 = vmul.f32 %v1538, 1.442695
    %v1553 = vpow.pop %v1552
    %v1554 = vmul.f32 %v1539, 1.442695
    %v1555 = vpow.pop %v1554
    %v1556 = vsel %vm1139, %v1541, 0.0
    %1557 = vadd.xlane.f32.xlu0 %v1556
    %v1558 = vpop.xlane.xlu0 %1557
    %v1559 = vsel %vm1139, %v1543, 0.0
    %1560 = vadd.xlane.f32.xlu0 %v1559
    %v1561 = vpop.xlane.xlu0 %1560
    %v1562 = vsel %vm1139, %v1545, 0.0
    %1563 = vadd.xlane.f32.xlu0 %v1562
    %v1564 = vpop.xlane.xlu0 %1563
    %v1565 = vsel %vm1139, %v1547, 0.0
    %1566 = vadd.xlane.f32.xlu0 %v1565
    %v1567 = vpop.xlane.xlu0 %1566
    %v1568 = vsel %vm1139, %v1549, 0.0
    %1569 = vadd.xlane.f32.xlu0 %v1568
    %v1570 = vpop.xlane.xlu0 %1569
    %v1571 = vsel %vm1139, %v1551, 0.0
    %1572 = vadd.xlane.f32.xlu0 %v1571
    %v1573 = vpop.xlane.xlu0 %1572
    %v1574 = vsel %vm1139, %v1553, 0.0
    %1575 = vadd.xlane.f32.xlu0 %v1574
    %v1576 = vpop.xlane.xlu0 %1575
    %v1577 = vsel %vm1139, %v1555, 0.0
    %1578 = vadd.xlane.f32.xlu0 %v1577
    %v1579 = vpop.xlane.xlu0 %1578
    %v1580 = vrcp.pop %v1558
    %v1581 = vrcp.pop %v1561
    %v1582 = vrcp.pop %v1564
    %v1583 = vrcp.pop %v1567
    %v1584 = vrcp.pop %v1570
    %v1585 = vrcp.pop %v1573
    %v1586 = vrcp.pop %v1576
    %v1587 = vrcp.pop %v1579
    %v1588 = vmul.f32 %v1541, %v1580
    %v1589 = vmul.f32 %v1543, %v1581
    %v1590 = vmul.f32 %v1545, %v1582
    %v1591 = vmul.f32 %v1547, %v1583
    %v1592 = vmul.f32 %v1549, %v1584
    %v1593 = vmul.f32 %v1551, %v1585
    %v1594 = vmul.f32 %v1553, %v1586
    %v1595 = vmul.f32 %v1555, %v1587
    %v1596 = vpack.c.bf16 %v1588, %v1588
    %v1597 = vpack.c.bf16 %v1589, %v1589
    %v1598 = vpack.c.bf16 %v1590, %v1590
    %v1599 = vpack.c.bf16 %v1591, %v1591
    %v1600 = vpack.c.bf16 %v1592, %v1592
    %v1601 = vpack.c.bf16 %v1593, %v1593
    %v1602 = vpack.c.bf16 %v1594, %v1594
    %v1603 = vpack.c.bf16 %v1595, %v1595
    %v1604 = vpack.c.bf16 %v1003, %v1003
    %v1605 = vpack.c.bf16 %v1071, %v1071
    %v1606 = vpack.c.bf16 %v1004, %v1004
    %v1607 = vpack.c.bf16 %v1072, %v1072
    %v1608 = vpack.c.bf16 %v1005, %v1005
    %v1609 = vpack.c.bf16 %v1073, %v1073
    %v1610 = vpack.c.bf16 %v1006, %v1006
    %v1611 = vpack.c.bf16 %v1074, %v1074
    %v1613 = vsel %vm1139, %v1596, 0
    %vm1615 = vcmask 1043456
    %v1617 = vsel %vm1615, %v1604, 0
    %1619 = vmatprep.subr.bf16.mxu0 0
    %1620 = vmatpush1.bf16.msra.mxu0 %v1617
    %1621 = vmatprep.subr.bf16.mxu0 0
    %1622 = vmatpush1.bf16.msra.mxu0 0
    %1623 = vmatprep.subr.bf16.mxu0 0
    %1624 = vmatpush1.bf16.msra.mxu0 0
    %1625 = vmatprep.subr.bf16.mxu0 0
    %1626 = vmatpush1.bf16.msra.mxu0 0
    %1627 = vmatprep.subr.bf16.mxu0 0
    %1628 = vmatpush1.bf16.msra.mxu0 0
    %1629 = vmatprep.subr.bf16.mxu0 0
    %1630 = vmatpush1.bf16.msra.mxu0 0
    %1631 = vmatprep.subr.bf16.mxu0 0
    %1632 = vmatpush1.bf16.msra.mxu0 0
    %1633 = vmatprep.subr.bf16.mxu0 0
    %1634 = vmatpush1.bf16.msra.mxu0 0
    %1635 = vmatprep.subr.bf16.mxu0 0
    %1636 = vmatpush1.bf16.msra.mxu0 0
    %1637 = vmatprep.subr.bf16.mxu0 0
    %1638 = vmatpush1.bf16.msra.mxu0 0
    %1639 = vmatprep.subr.bf16.mxu0 0
    %1640 = vmatpush1.bf16.msra.mxu0 0
    %1641 = vmatprep.subr.bf16.mxu0 0
    %1642 = vmatpush1.bf16.msra.mxu0 0
    %1643 = vmatprep.subr.bf16.mxu0 0
    %1644 = vmatpush1.bf16.msra.mxu0 0
    %1645 = vmatprep.subr.bf16.mxu0 0
    %1646 = vmatpush1.bf16.msra.mxu0 0
    %1647 = vmatprep.subr.bf16.mxu0 0
    %1648 = vmatpush1.bf16.msra.mxu0 0
    %1649 = vmatprep.subr.bf16.mxu0 0
    %1650 = vmatpush1.bf16.msra.mxu0 0
    %1651 = vmatprep.mubr.bf16.mxu0 0
    %1652 = vmatmul.mubr.bf16.gmra.mrb[0].mxu0 %v1613
    %v1653 = vpop.f32.mrb[0].mxu0
    %v1654 = vadd.f32 0.0, %v1653
    %v1655 = vpop.f32.mrb[0].mxu0
    %v1656 = vpop.f32.mrb[0].mxu0
    %v1657 = vpop.f32.mrb[0].mxu0
    %1658 = vdwg.mxu0
    %v1660 = vsel %vm1139, %v1597, 0
    %v1663 = vsel %vm1615, %v1605, 0
    %1665 = vmatprep.subr.bf16.mxu0 0
    %1666 = vmatpush1.bf16.msra.mxu0 %v1663
    %1667 = vmatprep.subr.bf16.mxu0 0
    %1668 = vmatpush1.bf16.msra.mxu0 0
    %1669 = vmatprep.subr.bf16.mxu0 0
    %1670 = vmatpush1.bf16.msra.mxu0 0
    %1671 = vmatprep.subr.bf16.mxu0 0
    %1672 = vmatpush1.bf16.msra.mxu0 0
    %1673 = vmatprep.subr.bf16.mxu0 0
    %1674 = vmatpush1.bf16.msra.mxu0 0
    %1675 = vmatprep.subr.bf16.mxu0 0
    %1676 = vmatpush1.bf16.msra.mxu0 0
    %1677 = vmatprep.subr.bf16.mxu0 0
    %1678 = vmatpush1.bf16.msra.mxu0 0
    %1679 = vmatprep.subr.bf16.mxu0 0
    %1680 = vmatpush1.bf16.msra.mxu0 0
    %1681 = vmatprep.subr.bf16.mxu0 0
    %1682 = vmatpush1.bf16.msra.mxu0 0
    %1683 = vmatprep.subr.bf16.mxu0 0
    %1684 = vmatpush1.bf16.msra.mxu0 0
    %1685 = vmatprep.subr.bf16.mxu0 0
    %1686 = vmatpush1.bf16.msra.mxu0 0
    %1687 = vmatprep.subr.bf16.mxu0 0
    %1688 = vmatpush1.bf16.msra.mxu0 0
    %1689 = vmatprep.subr.bf16.mxu0 0
    %1690 = vmatpush1.bf16.msra.mxu0 0
    %1691 = vmatprep.subr.bf16.mxu0 0
    %1692 = vmatpush1.bf16.msra.mxu0 0
    %1693 = vmatprep.subr.bf16.mxu0 0
    %1694 = vmatpush1.bf16.msra.mxu0 0
    %1695 = vmatprep.subr.bf16.mxu0 0
    %1696 = vmatpush1.bf16.msra.mxu0 0
    %1697 = vmatprep.mubr.bf16.mxu0 0
    %1698 = vmatmul.mubr.bf16.gmra.mrb[0].mxu0 %v1660
    %v1699 = vpop.f32.mrb[0].mxu0
    %v1700 = vadd.f32 0.0, %v1699
    %v1701 = vpop.f32.mrb[0].mxu0
    %v1702 = vpop.f32.mrb[0].mxu0
    %v1703 = vpop.f32.mrb[0].mxu0
    %1704 = vdwg.mxu0
    %v1706 = vsel %vm1139, %v1598, 0
    %v1709 = vsel %vm1615, %v1606, 0
    %1711 = vmatprep.subr.bf16.mxu0 0
    %1712 = vmatpush1.bf16.msra.mxu0 %v1709
    %1713 = vmatprep.subr.bf16.mxu0 0
    %1714 = vmatpush1.bf16.msra.mxu0 0
    %1715 = vmatprep.subr.bf16.mxu0 0
    %1716 = vmatpush1.bf16.msra.mxu0 0
    %1717 = vmatprep.subr.bf16.mxu0 0
    %1718 = vmatpush1.bf16.msra.mxu0 0
    %1719 = vmatprep.subr.bf16.mxu0 0
    %1720 = vmatpush1.bf16.msra.mxu0 0
    %1721 = vmatprep.subr.bf16.mxu0 0
    %1722 = vmatpush1.bf16.msra.mxu0 0
    %1723 = vmatprep.subr.bf16.mxu0 0
    %1724 = vmatpush1.bf16.msra.mxu0 0
    %1725 = vmatprep.subr.bf16.mxu0 0
    %1726 = vmatpush1.bf16.msra.mxu0 0
    %1727 = vmatprep.subr.bf16.mxu0 0
    %1728 = vmatpush1.bf16.msra.mxu0 0
    %1729 = vmatprep.subr.bf16.mxu0 0
    %1730 = vmatpush1.bf16.msra.mxu0 0
    %1731 = vmatprep.subr.bf16.mxu0 0
    %1732 = vmatpush1.bf16.msra.mxu0 0
    %1733 = vmatprep.subr.bf16.mxu0 0
    %1734 = vmatpush1.bf16.msra.mxu0 0
    %1735 = vmatprep.subr.bf16.mxu0 0
    %1736 = vmatpush1.bf16.msra.mxu0 0
    %1737 = vmatprep.subr.bf16.mxu0 0
    %1738 = vmatpush1.bf16.msra.mxu0 0
    %1739 = vmatprep.subr.bf16.mxu0 0
    %1740 = vmatpush1.bf16.msra.mxu0 0
    %1741 = vmatprep.subr.bf16.mxu0 0
    %1742 = vmatpush1.bf16.msra.mxu0 0
    %1743 = vmatprep.mubr.bf16.mxu0 0
    %1744 = vmatmul.mubr.bf16.gmra.mrb[0].mxu0 %v1706
    %v1745 = vpop.f32.mrb[0].mxu0
    %v1746 = vadd.f32 0.0, %v1745
    %v1747 = vpop.f32.mrb[0].mxu0
    %v1748 = vpop.f32.mrb[0].mxu0
    %v1749 = vpop.f32.mrb[0].mxu0
    %1750 = vdwg.mxu0
    %v1752 = vsel %vm1139, %v1599, 0
    %v1755 = vsel %vm1615, %v1607, 0
    %1757 = vmatprep.subr.bf16.mxu0 0
    %1758 = vmatpush1.bf16.msra.mxu0 %v1755
    %1759 = vmatprep.subr.bf16.mxu0 0
    %1760 = vmatpush1.bf16.msra.mxu0 0
    %1761 = vmatprep.subr.bf16.mxu0 0
    %1762 = vmatpush1.bf16.msra.mxu0 0
    %1763 = vmatprep.subr.bf16.mxu0 0
    %1764 = vmatpush1.bf16.msra.mxu0 0
    %1765 = vmatprep.subr.bf16.mxu0 0
    %1766 = vmatpush1.bf16.msra.mxu0 0
    %1767 = vmatprep.subr.bf16.mxu0 0
    %1768 = vmatpush1.bf16.msra.mxu0 0
    %1769 = vmatprep.subr.bf16.mxu0 0
    %1770 = vmatpush1.bf16.msra.mxu0 0
    %1771 = vmatprep.subr.bf16.mxu0 0
    %1772 = vmatpush1.bf16.msra.mxu0 0
    %1773 = vmatprep.subr.bf16.mxu0 0
    %1774 = vmatpush1.bf16.msra.mxu0 0
    %1775 = vmatprep.subr.bf16.mxu0 0
    %1776 = vmatpush1.bf16.msra.mxu0 0
    %1777 = vmatprep.subr.bf16.mxu0 0
    %1778 = vmatpush1.bf16.msra.mxu0 0
    %1779 = vmatprep.subr.bf16.mxu0 0
    %1780 = vmatpush1.bf16.msra.mxu0 0
    %1781 = vmatprep.subr.bf16.mxu0 0
    %1782 = vmatpush1.bf16.msra.mxu0 0
    %1783 = vmatprep.subr.bf16.mxu0 0
    %1784 = vmatpush1.bf16.msra.mxu0 0
    %1785 = vmatprep.subr.bf16.mxu0 0
    %1786 = vmatpush1.bf16.msra.mxu0 0
    %1787 = vmatprep.subr.bf16.mxu0 0
    %1788 = vmatpush1.bf16.msra.mxu0 0
    %1789 = vmatprep.mubr.bf16.mxu0 0
    %1790 = vmatmul.mubr.bf16.gmra.mrb[0].mxu0 %v1752
    %v1791 = vpop.f32.mrb[0].mxu0
    %v1792 = vadd.f32 0.0, %v1791
    %v1793 = vpop.f32.mrb[0].mxu0
    %v1794 = vpop.f32.mrb[0].mxu0
    %v1795 = vpop.f32.mrb[0].mxu0
    %1796 = vdwg.mxu0
    %v1798 = vsel %vm1139, %v1600, 0
    %v1801 = vsel %vm1615, %v1608, 0
    %1803 = vmatprep.subr.bf16.mxu0 0
    %1804 = vmatpush1.bf16.msra.mxu0 %v1801
    %1805 = vmatprep.subr.bf16.mxu0 0
    %1806 = vmatpush1.bf16.msra.mxu0 0
    %1807 = vmatprep.subr.bf16.mxu0 0
    %1808 = vmatpush1.bf16.msra.mxu0 0
    %1809 = vmatprep.subr.bf16.mxu0 0
    %1810 = vmatpush1.bf16.msra.mxu0 0
    %1811 = vmatprep.subr.bf16.mxu0 0
    %1812 = vmatpush1.bf16.msra.mxu0 0
    %1813 = vmatprep.subr.bf16.mxu0 0
    %1814 = vmatpush1.bf16.msra.mxu0 0
    %1815 = vmatprep.subr.bf16.mxu0 0
    %1816 = vmatpush1.bf16.msra.mxu0 0
    %1817 = vmatprep.subr.bf16.mxu0 0
    %1818 = vmatpush1.bf16.msra.mxu0 0
    %1819 = vmatprep.subr.bf16.mxu0 0
    %1820 = vmatpush1.bf16.msra.mxu0 0
    %1821 = vmatprep.subr.bf16.mxu0 0
    %1822 = vmatpush1.bf16.msra.mxu0 0
    %1823 = vmatprep.subr.bf16.mxu0 0
    %1824 = vmatpush1.bf16.msra.mxu0 0
    %1825 = vmatprep.subr.bf16.mxu0 0
    %1826 = vmatpush1.bf16.msra.mxu0 0
    %1827 = vmatprep.subr.bf16.mxu0 0
    %1828 = vmatpush1.bf16.msra.mxu0 0
    %1829 = vmatprep.subr.bf16.mxu0 0
    %1830 = vmatpush1.bf16.msra.mxu0 0
    %1831 = vmatprep.subr.bf16.mxu0 0
    %1832 = vmatpush1.bf16.msra.mxu0 0
    %1833 = vmatprep.subr.bf16.mxu0 0
    %1834 = vmatpush1.bf16.msra.mxu0 0
    %1835 = vmatprep.mubr.bf16.mxu0 0
    %1836 = vmatmul.mubr.bf16.gmra.mrb[0].mxu0 %v1798
    %v1837 = vpop.f32.mrb[0].mxu0
    %v1838 = vadd.f32 0.0, %v1837
    %v1839 = vpop.f32.mrb[0].mxu0
    %v1840 = vpop.f32.mrb[0].mxu0
    %v1841 = vpop.f32.mrb[0].mxu0
    %1842 = vdwg.mxu0
    %v1844 = vsel %vm1139, %v1601, 0
    %v1847 = vsel %vm1615, %v1609, 0
    %1849 = vmatprep.subr.bf16.mxu0 0
    %1850 = vmatpush1.bf16.msra.mxu0 %v1847
    %1851 = vmatprep.subr.bf16.mxu0 0
    %1852 = vmatpush1.bf16.msra.mxu0 0
    %1853 = vmatprep.subr.bf16.mxu0 0
    %1854 = vmatpush1.bf16.msra.mxu0 0
    %1855 = vmatprep.subr.bf16.mxu0 0
    %1856 = vmatpush1.bf16.msra.mxu0 0
    %1857 = vmatprep.subr.bf16.mxu0 0
    %1858 = vmatpush1.bf16.msra.mxu0 0
    %1859 = vmatprep.subr.bf16.mxu0 0
    %1860 = vmatpush1.bf16.msra.mxu0 0
    %1861 = vmatprep.subr.bf16.mxu0 0
    %1862 = vmatpush1.bf16.msra.mxu0 0
    %1863 = vmatprep.subr.bf16.mxu0 0
    %1864 = vmatpush1.bf16.msra.mxu0 0
    %1865 = vmatprep.subr.bf16.mxu0 0
    %1866 = vmatpush1.bf16.msra.mxu0 0
    %1867 = vmatprep.subr.bf16.mxu0 0
    %1868 = vmatpush1.bf16.msra.mxu0 0
    %1869 = vmatprep.subr.bf16.mxu0 0
    %1870 = vmatpush1.bf16.msra.mxu0 0
    %1871 = vmatprep.subr.bf16.mxu0 0
    %1872 = vmatpush1.bf16.msra.mxu0 0
    %1873 = vmatprep.subr.bf16.mxu0 0
    %1874 = vmatpush1.bf16.msra.mxu0 0
    %1875 = vmatprep.subr.bf16.mxu0 0
    %1876 = vmatpush1.bf16.msra.mxu0 0
    %1877 = vmatprep.subr.bf16.mxu0 0
    %1878 = vmatpush1.bf16.msra.mxu0 0
    %1879 = vmatprep.subr.bf16.mxu0 0
    %1880 = vmatpush1.bf16.msra.mxu0 0
    %1881 = vmatprep.mubr.bf16.mxu0 0
    %1882 = vmatmul.mubr.bf16.gmra.mrb[0].mxu0 %v1844
    %v1883 = vpop.f32.mrb[0].mxu0
    %v1884 = vadd.f32 0.0, %v1883
    %v1885 = vpop.f32.mrb[0].mxu0
    %v1886 = vpop.f32.mrb[0].mxu0
    %v1887 = vpop.f32.mrb[0].mxu0
    %1888 = vdwg.mxu0
    %v1890 = vsel %vm1139, %v1602, 0
    %v1893 = vsel %vm1615, %v1610, 0
    %1895 = vmatprep.subr.bf16.mxu0 0
    %1896 = vmatpush1.bf16.msra.mxu0 %v1893
    %1897 = vmatprep.subr.bf16.mxu0 0
    %1898 = vmatpush1.bf16.msra.mxu0 0
    %1899 = vmatprep.subr.bf16.mxu0 0
    %1900 = vmatpush1.bf16.msra.mxu0 0
    %1901 = vmatprep.subr.bf16.mxu0 0
    %1902 = vmatpush1.bf16.msra.mxu0 0
    %1903 = vmatprep.subr.bf16.mxu0 0
    %1904 = vmatpush1.bf16.msra.mxu0 0
    %1905 = vmatprep.subr.bf16.mxu0 0
    %1906 = vmatpush1.bf16.msra.mxu0 0
    %1907 = vmatprep.subr.bf16.mxu0 0
    %1908 = vmatpush1.bf16.msra.mxu0 0
    %1909 = vmatprep.subr.bf16.mxu0 0
    %1910 = vmatpush1.bf16.msra.mxu0 0
    %1911 = vmatprep.subr.bf16.mxu0 0
    %1912 = vmatpush1.bf16.msra.mxu0 0
    %1913 = vmatprep.subr.bf16.mxu0 0
    %1914 = vmatpush1.bf16.msra.mxu0 0
    %1915 = vmatprep.subr.bf16.mxu0 0
    %1916 = vmatpush1.bf16.msra.mxu0 0
    %1917 = vmatprep.subr.bf16.mxu0 0
    %1918 = vmatpush1.bf16.msra.mxu0 0
    %1919 = vmatprep.subr.bf16.mxu0 0
    %1920 = vmatpush1.bf16.msra.mxu0 0
    %1921 = vmatprep.subr.bf16.mxu0 0
    %1922 = vmatpush1.bf16.msra.mxu0 0
    %1923 = vmatprep.subr.bf16.mxu0 0
    %1924 = vmatpush1.bf16.msra.mxu0 0
    %1925 = vmatprep.subr.bf16.mxu0 0
    %1926 = vmatpush1.bf16.msra.mxu0 0
    %1927 = vmatprep.mubr.bf16.mxu0 0
    %1928 = vmatmul.mubr.bf16.gmra.mrb[0].mxu0 %v1890
    %v1929 = vpop.f32.mrb[0].mxu0
    %v1930 = vadd.f32 0.0, %v1929
    %v1931 = vpop.f32.mrb[0].mxu0
    %v1932 = vpop.f32.mrb[0].mxu0
    %v1933 = vpop.f32.mrb[0].mxu0
    %1934 = vdwg.mxu0
    %v1936 = vsel %vm1139, %v1603, 0
    %v1939 = vsel %vm1615, %v1611, 0
    %1941 = vmatprep.subr.bf16.mxu0 0
    %1942 = vmatpush1.bf16.msra.mxu0 %v1939
    %1943 = vmatprep.subr.bf16.mxu0 0
    %1944 = vmatpush1.bf16.msra.mxu0 0
    %1945 = vmatprep.subr.bf16.mxu0 0
    %1946 = vmatpush1.bf16.msra.mxu0 0
    %1947 = vmatprep.subr.bf16.mxu0 0
    %1948 = vmatpush1.bf16.msra.mxu0 0
    %1949 = vmatprep.subr.bf16.mxu0 0
    %1950 = vmatpush1.bf16.msra.mxu0 0
    %1951 = vmatprep.subr.bf16.mxu0 0
    %1952 = vmatpush1.bf16.msra.mxu0 0
    %1953 = vmatprep.subr.bf16.mxu0 0
    %1954 = vmatpush1.bf16.msra.mxu0 0
    %1955 = vmatprep.subr.bf16.mxu0 0
    %1956 = vmatpush1.bf16.msra.mxu0 0
    %1957 = vmatprep.subr.bf16.mxu0 0
    %1958 = vmatpush1.bf16.msra.mxu0 0
    %1959 = vmatprep.subr.bf16.mxu0 0
    %1960 = vmatpush1.bf16.msra.mxu0 0
    %1961 = vmatprep.subr.bf16.mxu0 0
    %1962 = vmatpush1.bf16.msra.mxu0 0
    %1963 = vmatprep.subr.bf16.mxu0 0
    %1964 = vmatpush1.bf16.msra.mxu0 0
    %1965 = vmatprep.subr.bf16.mxu0 0
    %1966 = vmatpush1.bf16.msra.mxu0 0
    %1967 = vmatprep.subr.bf16.mxu0 0
    %1968 = vmatpush1.bf16.msra.mxu0 0
    %1969 = vmatprep.subr.bf16.mxu0 0
    %1970 = vmatpush1.bf16.msra.mxu0 0
    %1971 = vmatprep.subr.bf16.mxu0 0
    %1972 = vmatpush1.bf16.msra.mxu0 0
    %1973 = vmatprep.mubr.bf16.mxu0 0
    %1974 = vmatmul.mubr.bf16.gmra.mrb[0].mxu0 %v1936
    %v1975 = vpop.f32.mrb[0].mxu0
    %v1976 = vadd.f32 0.0, %v1975
    %v1977 = vpop.f32.mrb[0].mxu0
    %v1978 = vpop.f32.mrb[0].mxu0
    %v1979 = vpop.f32.mrb[0].mxu0
    %1980 = vdwg.mxu0
    %v1981 = vcombine.low %v1654, %v1838
    %v1982 = vcombine.high %v1654, %v1838
    %v1984 = vunpack.c.l.s4 1983009808
    %v1985 = vunpack.c.0.s8 %v1984
    %v1986 = vlaneseq
    %v1987 = vshrl.u32 %v1986, 7
    %v1988 = vsub.s32 %v1985, %v1987
    %v1989 = vrot.slane %v1981, %v1988
    %v1991 = vunpack.c.l.s4 1983009808
    %v1992 = vunpack.c.0.s8 %v1991
    %v1993 = vlaneseq
    %v1994 = vshrl.u32 %v1993, 7
    %v1995 = vsub.s32 %v1992, %v1994
    %v1996 = vrot.slane %v1982, %v1995
    %v1997 = vcombine.low %v1746, %v1930
    %v1998 = vcombine.high %v1746, %v1930
    %v2000 = vunpack.c.l.s4 1983009808
    %v2001 = vunpack.c.0.s8 %v2000
    %v2002 = vlaneseq
    %v2003 = vshrl.u32 %v2002, 7
    %v2004 = vsub.s32 %v2001, %v2003
    %v2005 = vrot.slane %v1997, %v2004
    %v2007 = vunpack.c.l.s4 1983009808
    %v2008 = vunpack.c.0.s8 %v2007
    %v2009 = vlaneseq
    %v2010 = vshrl.u32 %v2009, 7
    %v2011 = vsub.s32 %v2008, %v2010
    %v2012 = vrot.slane %v1998, %v2011
    %v2013 = vcombine.low %v1989, %v2005
    %v2014 = vcombine.high %v1989, %v2005
    %v2016 = vunpack.c.l.s4 1934713408
    %v2017 = vunpack.c.0.s8 %v2016
    %v2018 = vlaneseq
    %v2019 = vshrl.u32 %v2018, 7
    %v2020 = vsub.s32 %v2017, %v2019
    %v2021 = vrot.slane %v2013, %v2020
    %v2023 = vunpack.c.l.s4 1934713408
    %v2024 = vunpack.c.0.s8 %v2023
    %v2025 = vlaneseq
    %v2026 = vshrl.u32 %v2025, 7
    %v2027 = vsub.s32 %v2024, %v2026
    %v2028 = vrot.slane %v2014, %v2027
    %v2029 = vcombine.low %v1996, %v2012
    %v2030 = vcombine.high %v1996, %v2012
    %v2032 = vunpack.c.l.s4 1934713408
    %v2033 = vunpack.c.0.s8 %v2032
    %v2034 = vlaneseq
    %v2035 = vshrl.u32 %v2034, 7
    %v2036 = vsub.s32 %v2033, %v2035
    %v2037 = vrot.slane %v2029, %v2036
    %v2039 = vunpack.c.l.s4 1934713408
    %v2040 = vunpack.c.0.s8 %v2039
    %v2041 = vlaneseq
    %v2042 = vshrl.u32 %v2041, 7
    %v2043 = vsub.s32 %v2040, %v2042
    %v2044 = vrot.slane %v2030, %v2043
    %v2045 = vcombine.high %v2021, 0.0
    %v2046 = vcombine.high %v2028, 0.0
    %v2047 = vcombine.high %v2037, 0.0
    %v2048 = vcombine.high %v2044, 0.0
    %v2049 = vcombine.low %v1700, %v1884
    %v2050 = vcombine.high %v1700, %v1884
    %v2052 = vunpack.c.l.s4 1983009808
    %v2053 = vunpack.c.0.s8 %v2052
    %v2054 = vlaneseq
    %v2055 = vshrl.u32 %v2054, 7
    %v2056 = vsub.s32 %v2053, %v2055
    %v2057 = vrot.slane %v2049, %v2056
    %v2059 = vunpack.c.l.s4 1983009808
    %v2060 = vunpack.c.0.s8 %v2059
    %v2061 = vlaneseq
    %v2062 = vshrl.u32 %v2061, 7
    %v2063 = vsub.s32 %v2060, %v2062
    %v2064 = vrot.slane %v2050, %v2063
    %v2065 = vcombine.low %v1792, %v1976
    %v2066 = vcombine.high %v1792, %v1976
    %v2068 = vunpack.c.l.s4 1983009808
    %v2069 = vunpack.c.0.s8 %v2068
    %v2070 = vlaneseq
    %v2071 = vshrl.u32 %v2070, 7
    %v2072 = vsub.s32 %v2069, %v2071
    %v2073 = vrot.slane %v2065, %v2072
    %v2075 = vunpack.c.l.s4 1983009808
    %v2076 = vunpack.c.0.s8 %v2075
    %v2077 = vlaneseq
    %v2078 = vshrl.u32 %v2077, 7
    %v2079 = vsub.s32 %v2076, %v2078
    %v2080 = vrot.slane %v2066, %v2079
    %v2081 = vcombine.low %v2057, %v2073
    %v2082 = vcombine.high %v2057, %v2073
    %v2084 = vunpack.c.l.s4 1934713408
    %v2085 = vunpack.c.0.s8 %v2084
    %v2086 = vlaneseq
    %v2087 = vshrl.u32 %v2086, 7
    %v2088 = vsub.s32 %v2085, %v2087
    %v2089 = vrot.slane %v2081, %v2088
    %v2091 = vunpack.c.l.s4 1934713408
    %v2092 = vunpack.c.0.s8 %v2091
    %v2093 = vlaneseq
    %v2094 = vshrl.u32 %v2093, 7
    %v2095 = vsub.s32 %v2092, %v2094
    %v2096 = vrot.slane %v2082, %v2095
    %v2097 = vcombine.low %v2064, %v2080
    %v2098 = vcombine.high %v2064, %v2080
    %v2100 = vunpack.c.l.s4 1934713408
    %v2101 = vunpack.c.0.s8 %v2100
    %v2102 = vlaneseq
    %v2103 = vshrl.u32 %v2102, 7
    %v2104 = vsub.s32 %v2101, %v2103
    %v2105 = vrot.slane %v2097, %v2104
    %v2107 = vunpack.c.l.s4 1934713408
    %v2108 = vunpack.c.0.s8 %v2107
    %v2109 = vlaneseq
    %v2110 = vshrl.u32 %v2109, 7
    %v2111 = vsub.s32 %v2108, %v2110
    %v2112 = vrot.slane %v2098, %v2111
    %v2113 = vcombine.high %v2089, 0.0
    %v2114 = vcombine.high %v2096, 0.0
    %v2115 = vcombine.high %v2105, 0.0
    %v2116 = vcombine.high %v2112, 0.0
    %v2117 = vcombine.low %v2021, %v2028
    %v2119 = vunpack.c.l.s4 1983009808
    %v2120 = vunpack.c.0.s8 %v2119
    %v2121 = vlaneseq
    %v2122 = vshrl.u32 %v2121, 7
    %v2123 = vsub.s32 %v2120, %v2122
    %v2124 = vrot.slane %v2117, %v2123
    %v2125 = vcombine.low %v2045, %v2046
    %v2127 = vunpack.c.l.s4 1983009808
    %v2128 = vunpack.c.0.s8 %v2127
    %v2129 = vlaneseq
    %v2130 = vshrl.u32 %v2129, 7
    %v2131 = vsub.s32 %v2128, %v2130
    %v2132 = vrot.slane %v2125, %v2131
    %v2133 = vcombine.low %v2037, %v2044
    %v2135 = vunpack.c.l.s4 1983009808
    %v2136 = vunpack.c.0.s8 %v2135
    %v2137 = vlaneseq
    %v2138 = vshrl.u32 %v2137, 7
    %v2139 = vsub.s32 %v2136, %v2138
    %v2140 = vrot.slane %v2133, %v2139
    %v2141 = vcombine.low %v2047, %v2048
    %v2143 = vunpack.c.l.s4 1983009808
    %v2144 = vunpack.c.0.s8 %v2143
    %v2145 = vlaneseq
    %v2146 = vshrl.u32 %v2145, 7
    %v2147 = vsub.s32 %v2144, %v2146
    %v2148 = vrot.slane %v2141, %v2147
    %v2149 = vcombine.low %v2124, %v2132
    %v2150 = vcombine.high %v2124, %v2132
    %v2152 = vunpack.c.l.s4 1934713408
    %v2153 = vunpack.c.0.s8 %v2152
    %v2154 = vlaneseq
    %v2155 = vshrl.u32 %v2154, 7
    %v2156 = vsub.s32 %v2153, %v2155
    %v2157 = vrot.slane %v2149, %v2156
    %v2159 = vunpack.c.l.s4 1934713408
    %v2160 = vunpack.c.0.s8 %v2159
    %v2161 = vlaneseq
    %v2162 = vshrl.u32 %v2161, 7
    %v2163 = vsub.s32 %v2160, %v2162
    %v2164 = vrot.slane %v2150, %v2163
    %v2165 = vcombine.low %v2140, %v2148
    %v2166 = vcombine.high %v2140, %v2148
    %v2168 = vunpack.c.l.s4 1934713408
    %v2169 = vunpack.c.0.s8 %v2168
    %v2170 = vlaneseq
    %v2171 = vshrl.u32 %v2170, 7
    %v2172 = vsub.s32 %v2169, %v2171
    %v2173 = vrot.slane %v2165, %v2172
    %v2175 = vunpack.c.l.s4 1934713408
    %v2176 = vunpack.c.0.s8 %v2175
    %v2177 = vlaneseq
    %v2178 = vshrl.u32 %v2177, 7
    %v2179 = vsub.s32 %v2176, %v2178
    %v2180 = vrot.slane %v2166, %v2179
    %v2181 = vcombine.low %v2157, %v2173
    %v2182 = vcombine.high %v2157, %v2173
    %v2183 = vcombine.low %v2164, %v2180
    %v2184 = vcombine.high %v2164, %v2180
    %v2185 = vcombine.low %v2089, %v2096
    %v2187 = vunpack.c.l.s4 1983009808
    %v2188 = vunpack.c.0.s8 %v2187
    %v2189 = vlaneseq
    %v2190 = vshrl.u32 %v2189, 7
    %v2191 = vsub.s32 %v2188, %v2190
    %v2192 = vrot.slane %v2185, %v2191
    %v2193 = vcombine.low %v2113, %v2114
    %v2195 = vunpack.c.l.s4 1983009808
    %v2196 = vunpack.c.0.s8 %v2195
    %v2197 = vlaneseq
    %v2198 = vshrl.u32 %v2197, 7
    %v2199 = vsub.s32 %v2196, %v2198
    %v2200 = vrot.slane %v2193, %v2199
    %v2201 = vcombine.low %v2105, %v2112
    %v2203 = vunpack.c.l.s4 1983009808
    %v2204 = vunpack.c.0.s8 %v2203
    %v2205 = vlaneseq
    %v2206 = vshrl.u32 %v2205, 7
    %v2207 = vsub.s32 %v2204, %v2206
    %v2208 = vrot.slane %v2201, %v2207
    %v2209 = vcombine.low %v2115, %v2116
    %v2211 = vunpack.c.l.s4 1983009808
    %v2212 = vunpack.c.0.s8 %v2211
    %v2213 = vlaneseq
    %v2214 = vshrl.u32 %v2213, 7
    %v2215 = vsub.s32 %v2212, %v2214
    %v2216 = vrot.slane %v2209, %v2215
    %v2217 = vcombine.low %v2192, %v2200
    %v2218 = vcombine.high %v2192, %v2200
    %v2220 = vunpack.c.l.s4 1934713408
    %v2221 = vunpack.c.0.s8 %v2220
    %v2222 = vlaneseq
    %v2223 = vshrl.u32 %v2222, 7
    %v2224 = vsub.s32 %v2221, %v2223
    %v2225 = vrot.slane %v2217, %v2224
    %v2227 = vunpack.c.l.s4 1934713408
    %v2228 = vunpack.c.0.s8 %v2227
    %v2229 = vlaneseq
    %v2230 = vshrl.u32 %v2229, 7
    %v2231 = vsub.s32 %v2228, %v2230
    %v2232 = vrot.slane %v2218, %v2231
    %v2233 = vcombine.low %v2208, %v2216
    %v2234 = vcombine.high %v2208, %v2216
    %v2236 = vunpack.c.l.s4 1934713408
    %v2237 = vunpack.c.0.s8 %v2236
    %v2238 = vlaneseq
    %v2239 = vshrl.u32 %v2238, 7
    %v2240 = vsub.s32 %v2237, %v2239
    %v2241 = vrot.slane %v2233, %v2240
    %v2243 = vunpack.c.l.s4 1934713408
    %v2244 = vunpack.c.0.s8 %v2243
    %v2245 = vlaneseq
    %v2246 = vshrl.u32 %v2245, 7
    %v2247 = vsub.s32 %v2244, %v2246
    %v2248 = vrot.slane %v2234, %v2247
    %v2249 = vcombine.low %v2225, %v2241
    %v2250 = vcombine.high %v2225, %v2241
    %v2251 = vcombine.low %v2232, %v2248
    %v2252 = vcombine.high %v2232, %v2248
    %2255 = vrot.lane.b32.xlu0 %v2182, 8
    %v2256 = vpop.permute.xlu0 %2255
    %2257 = vrot.lane.b32.xlu0 %v2250, 8
    %v2258 = vpop.permute.xlu0 %2257
    %2263 = vrot.lane.b32.xlu0 %v2183, 16
    %v2264 = vpop.permute.xlu0 %2263
    %2265 = vrot.lane.b32.xlu0 %v2251, 16
    %v2266 = vpop.permute.xlu0 %2265
    %2271 = vrot.lane.b32.xlu0 %v2184, 24
    %v2272 = vpop.permute.xlu0 %2271
    %2273 = vrot.lane.b32.xlu0 %v2252, 24
    %v2274 = vpop.permute.xlu0 %2273
    %v2277 = vsel %vm1139, %v2181, %v2256
    %v2278 = vsel %vm1139, %v2249, %v2258
    %vm2279 = vcmask 130048
    %v2280 = vsel %vm2279, %v2277, %v2264
    %v2281 = vsel %vm2279, %v2278, %v2266
    %vm2282 = vcmask 195584
    %v2283 = vsel %vm2282, %v2280, %v2272
    %v2284 = vsel %vm2282, %v2281, %v2274
    %v2285 = vld [vmem:[%s6] sm:$0xf]
    %v2286 = vld [vmem:[%s6 + $0x4] sm:$0xf]
    %v2287 = vld [vmem:[%s6 + $0x8] sm:$0xf]
    %v2288 = vld [vmem:[%s6 + $0xc] sm:$0xf]
    %v2289 = vpack.c.bf16 %v2284, %v2283
    %v2290 = vld [vmem:[%s7] sm:$0x1]
    %v2292 = vlaneseq
    %v2293 = vshrl.u32 %v2292, 7
    %v2294 = vsub.s32 0, %v2293
    %v2295 = vrot.slane %v2290, %v2294
    %v2301 = vunpack.c.l.b16 %v2285
    %v2302 = vunpack.c.l.b16 %v2286
    %v2303 = vunpack.c.l.b16 %v2287
    %v2304 = vunpack.c.l.b16 %v2288
    %v2305 = vpack.c.b16 %v2302, %v2301
    %v2306 = vpack.c.b16 %v2304, %v2303
    %v2310 = vsel %vm71, %v2289, 0
    %2312 = vmatprep.subr.bf16.mxu0 0
    %2313 = vmatpush1.bf16.msra.mxu0 %v2305
    %2314 = vmatprep.subr.bf16.mxu0 0
    %2315 = vmatpush1.bf16.msra.mxu0 %v2306
    %2316 = vmatprep.subr.bf16.mxu0 0
    %2317 = vmatpush1.bf16.msra.mxu0 0
    %2318 = vmatprep.subr.bf16.mxu0 0
    %2319 = vmatpush1.bf16.msra.mxu0 0
    %2320 = vmatprep.subr.bf16.mxu0 0
    %2321 = vmatpush1.bf16.msra.mxu0 0
    %2322 = vmatprep.subr.bf16.mxu0 0
    %2323 = vmatpush1.bf16.msra.mxu0 0
    %2324 = vmatprep.subr.bf16.mxu0 0
    %2325 = vmatpush1.bf16.msra.mxu0 0
    %2326 = vmatprep.subr.bf16.mxu0 0
    %2327 = vmatpush1.bf16.msra.mxu0 0
    %2328 = vmatprep.subr.bf16.mxu0 0
    %2329 = vmatpush1.bf16.msra.mxu0 0
    %2330 = vmatprep.subr.bf16.mxu0 0
    %2331 = vmatpush1.bf16.msra.mxu0 0
    %2332 = vmatprep.subr.bf16.mxu0 0
    %2333 = vmatpush1.bf16.msra.mxu0 0
    %2334 = vmatprep.subr.bf16.mxu0 0
    %2335 = vmatpush1.bf16.msra.mxu0 0
    %2336 = vmatprep.subr.bf16.mxu0 0
    %2337 = vmatpush1.bf16.msra.mxu0 0
    %2338 = vmatprep.subr.bf16.mxu0 0
    %2339 = vmatpush1.bf16.msra.mxu0 0
    %2340 = vmatprep.subr.bf16.mxu0 0
    %2341 = vmatpush1.bf16.msra.mxu0 0
    %2342 = vmatprep.subr.bf16.mxu0 0
    %2343 = vmatpush1.bf16.msra.mxu0 0
    %2344 = vmatprep.mubr.bf16.mxu0 0
    %2345 = vmatmul.mubr.bf16.gmra.mrb[0].mxu0 %v2310
    %v2346 = vpop.f32.mrb[0].mxu0
    %v2347 = vadd.f32 %v2295, %v2346
    %v2348 = vpop.f32.mrb[0].mxu0
    %v2349 = vpop.f32.mrb[0].mxu0
    %v2350 = vadd.f32 %v2295, %v2349
    %v2351 = vpop.f32.mrb[0].mxu0
    %2352 = vdwg.mxu0
    %v2353 = vadd.f32 %v113, %v2347
    %v2354 = vadd.f32 %v114, %v2350
    %v2355 = vld [vmem:[%s8] sm:$0x1]
    %v2356 = vld [vmem:[%s9] sm:$0x1]
    %v2357 = vsel %vm71, %v2353, 0.0
    %2358 = vadd.xlane.f32.xlu0 %v2357
    %v2359 = vpop.xlane.xlu0 %2358
    %v2360 = vsel %vm71, %v2354, 0.0
    %2361 = vadd.xlane.f32.xlu0 %v2360
    %v2362 = vpop.xlane.xlu0 %2361
    %v2363 = vmul.f32 %v2359, %v78
    %v2364 = vmul.f32 %v2362, %v78
    %v2365 = vsub.f32 %v2353, %v2363
    %v2366 = vsub.f32 %v2354, %v2364
    %v2367 = vmul.f32 %v2365, %v2365
    %v2368 = vmul.f32 %v2366, %v2366
    %v2369 = vsel %vm71, %v2367, 0.0
    %2370 = vadd.xlane.f32.xlu0 %v2369
    %v2371 = vpop.xlane.xlu0 %2370
    %v2372 = vsel %vm71, %v2368, 0.0
    %2373 = vadd.xlane.f32.xlu0 %v2372
    %v2374 = vpop.xlane.xlu0 %2373
    %v2375 = vmul.f32 %v2371, %v78
    %v2376 = vmul.f32 %v2374, %v78
    %v2377 = vadd.f32 %v2375, 1e-12
    %v2378 = vadd.f32 %v2376, 1e-12
    %v2379 = vrsqrt.pop %v2377
    %v2380 = vrsqrt.pop %v2378
    %v2381 = vmul.f32 %v2365, %v2379
    %v2382 = vmul.f32 %v2366, %v2380
    %v2384 = vlaneseq
    %v2385 = vshrl.u32 %v2384, 7
    %v2386 = vsub.s32 0, %v2385
    %v2387 = vrot.slane %v2355, %v2386
    %v2389 = vmul.f32 %v2381, %v2387
    %v2390 = vmul.f32 %v2382, %v2387
    %v2392 = vlaneseq
    %v2393 = vshrl.u32 %v2392, 7
    %v2394 = vsub.s32 0, %v2393
    %v2395 = vrot.slane %v2356, %v2394
    %v2397 = vadd.f32 %v2389, %v2395
    %v2398 = vadd.f32 %v2390, %v2395
    %v2399 = vld [vmem:[%s10] sm:$0xf]
    %v2400 = vld [vmem:[%s10 + $0x4] sm:$0xf]
    %v2401 = vld [vmem:[%s10 + $0x8] sm:$0xf]
    %v2402 = vld [vmem:[%s10 + $0xc] sm:$0xf]
    %v2403 = vpack.c.bf16 %v2398, %v2397
    %v2404 = vld [vmem:[%s11] sm:$0x1]
    %v2406 = vlaneseq
    %v2407 = vshrl.u32 %v2406, 7
    %v2408 = vsub.s32 0, %v2407
    %v2409 = vrot.slane %v2404, %v2408
    %v2415 = vunpack.c.l.b16 %v2399
    %v2416 = vunpack.c.l.b16 %v2400
    %v2417 = vunpack.c.l.b16 %v2401
    %v2418 = vunpack.c.l.b16 %v2402
    %v2419 = vpack.c.b16 %v2416, %v2415
    %v2420 = vpack.c.b16 %v2418, %v2417
    %v2424 = vsel %vm71, %v2403, 0
    %2426 = vmatprep.subr.bf16.mxu0 0
    %2427 = vmatpush1.bf16.msra.mxu0 %v2419
    %2428 = vmatprep.subr.bf16.mxu0 0
    %2429 = vmatpush1.bf16.msra.mxu0 %v2420
    %2430 = vmatprep.subr.bf16.mxu0 0
    %2431 = vmatpush1.bf16.msra.mxu0 0
    %2432 = vmatprep.subr.bf16.mxu0 0
    %2433 = vmatpush1.bf16.msra.mxu0 0
    %2434 = vmatprep.subr.bf16.mxu0 0
    %2435 = vmatpush1.bf16.msra.mxu0 0
    %2436 = vmatprep.subr.bf16.mxu0 0
    %2437 = vmatpush1.bf16.msra.mxu0 0
    %2438 = vmatprep.subr.bf16.mxu0 0
    %2439 = vmatpush1.bf16.msra.mxu0 0
    %2440 = vmatprep.subr.bf16.mxu0 0
    %2441 = vmatpush1.bf16.msra.mxu0 0
    %2442 = vmatprep.subr.bf16.mxu0 0
    %2443 = vmatpush1.bf16.msra.mxu0 0
    %2444 = vmatprep.subr.bf16.mxu0 0
    %2445 = vmatpush1.bf16.msra.mxu0 0
    %2446 = vmatprep.subr.bf16.mxu0 0
    %2447 = vmatpush1.bf16.msra.mxu0 0
    %2448 = vmatprep.subr.bf16.mxu0 0
    %2449 = vmatpush1.bf16.msra.mxu0 0
    %2450 = vmatprep.subr.bf16.mxu0 0
    %2451 = vmatpush1.bf16.msra.mxu0 0
    %2452 = vmatprep.subr.bf16.mxu0 0
    %2453 = vmatpush1.bf16.msra.mxu0 0
    %2454 = vmatprep.subr.bf16.mxu0 0
    %2455 = vmatpush1.bf16.msra.mxu0 0
    %2456 = vmatprep.subr.bf16.mxu0 0
    %2457 = vmatpush1.bf16.msra.mxu0 0
    %2458 = vmatprep.mubr.bf16.mxu0 0
    %2459 = vmatmul.mubr.bf16.gmra.mrb[0].mxu0 %v2424
    %v2460 = vpop.f32.mrb[0].mxu0
    %v2461 = vadd.f32 %v2409, %v2460
    %v2462 = vpop.f32.mrb[0].mxu0
    %v2463 = vpop.f32.mrb[0].mxu0
    %v2464 = vadd.f32 %v2409, %v2463
    %v2465 = vpop.f32.mrb[0].mxu0
    %2466 = vdwg.mxu0
    %v2467 = vmul.f32 %v2461, %v2461
    %v2468 = vmul.f32 %v2464, %v2464
    %v2469 = vmul.f32 %v2461, %v2467
    %v2470 = vmul.f32 %v2464, %v2468
    %v2471 = vmul.f32 %v2469, 0.044715
    %v2472 = vmul.f32 %v2470, 0.044715
    %v2473 = vadd.f32 %v2461, %v2471
    %v2474 = vadd.f32 %v2464, %v2472
    %v2475 = vmul.f32 %v2473, 0.7978846
    %v2476 = vmul.f32 %v2474, 0.7978846
    %v2477 = vtanh.pop %v2475
    %v2478 = vtanh.pop %v2476
    %v2479 = vadd.f32 %v2477, 1.0
    %v2480 = vadd.f32 %v2478, 1.0
    %v2481 = vmul.f32 %v2479, 0.5
    %v2482 = vmul.f32 %v2480, 0.5
    %v2483 = vmul.f32 %v2461, %v2481
    %v2484 = vmul.f32 %v2464, %v2482
    %v2485 = vld [vmem:[%s12] sm:$0xf]
    %v2486 = vld [vmem:[%s12 + $0x4] sm:$0xf]
    %v2487 = vld [vmem:[%s12 + $0x8] sm:$0xf]
    %v2488 = vld [vmem:[%s12 + $0xc] sm:$0xf]
    %v2489 = vld [vmem:[%s12 + $0x10] sm:$0xf]
    %v2490 = vld [vmem:[%s12 + $0x14] sm:$0xf]
    %v2491 = vld [vmem:[%s12 + $0x18] sm:$0xf]
    %v2492 = vld [vmem:[%s12 + $0x1c] sm:$0xf]
    %v2493 = vpack.c.bf16 %v2484, %v2483
    %v2494 = vld [vmem:[%s13] sm:$0x1]
    %v2496 = vlaneseq
    %v2497 = vshrl.u32 %v2496, 7
    %v2498 = vsub.s32 0, %v2497
    %v2499 = vrot.slane %v2494, %v2498
    %v2509 = vunpack.c.l.b16 %v2485
    %v2510 = vunpack.c.l.b16 %v2486
    %v2511 = vunpack.c.l.b16 %v2487
    %v2512 = vunpack.c.l.b16 %v2488
    %v2513 = vunpack.c.l.b16 %v2489
    %v2514 = vunpack.c.l.b16 %v2490
    %v2515 = vunpack.c.l.b16 %v2491
    %v2516 = vunpack.c.l.b16 %v2492
    %v2517 = vpack.c.b16 %v2510, %v2509
    %v2518 = vpack.c.b16 %v2512, %v2511
    %v2519 = vpack.c.b16 %v2514, %v2513
    %v2520 = vpack.c.b16 %v2516, %v2515
    %vm2525 = vcmask 523264
    %v2527 = vsel %vm2525, %v2493, 0
    %2529 = vmatprep.subr.bf16.mxu0 0
    %2530 = vmatpush1.bf16.msra.mxu0 %v2517
    %2531 = vmatprep.subr.bf16.mxu0 0
    %2532 = vmatpush1.bf16.msra.mxu0 %v2518
    %2533 = vmatprep.subr.bf16.mxu0 0
    %2534 = vmatpush1.bf16.msra.mxu0 %v2519
    %2535 = vmatprep.subr.bf16.mxu0 0
    %2536 = vmatpush1.bf16.msra.mxu0 %v2520
    %2537 = vmatprep.subr.bf16.mxu0 0
    %2538 = vmatpush1.bf16.msra.mxu0 0
    %2539 = vmatprep.subr.bf16.mxu0 0
    %2540 = vmatpush1.bf16.msra.mxu0 0
    %2541 = vmatprep.subr.bf16.mxu0 0
    %2542 = vmatpush1.bf16.msra.mxu0 0
    %2543 = vmatprep.subr.bf16.mxu0 0
    %2544 = vmatpush1.bf16.msra.mxu0 0
    %2545 = vmatprep.subr.bf16.mxu0 0
    %2546 = vmatpush1.bf16.msra.mxu0 0
    %2547 = vmatprep.subr.bf16.mxu0 0
    %2548 = vmatpush1.bf16.msra.mxu0 0
    %2549 = vmatprep.subr.bf16.mxu0 0
    %2550 = vmatpush1.bf16.msra.mxu0 0
    %2551 = vmatprep.subr.bf16.mxu0 0
    %2552 = vmatpush1.bf16.msra.mxu0 0
    %2553 = vmatprep.subr.bf16.mxu0 0
    %2554 = vmatpush1.bf16.msra.mxu0 0
    %2555 = vmatprep.subr.bf16.mxu0 0
    %2556 = vmatpush1.bf16.msra.mxu0 0
    %2557 = vmatprep.subr.bf16.mxu0 0
    %2558 = vmatpush1.bf16.msra.mxu0 0
    %2559 = vmatprep.subr.bf16.mxu0 0
    %2560 = vmatpush1.bf16.msra.mxu0 0
    %2561 = vmatprep.mubr.bf16.mxu0 0
    %2562 = vmatmul.mubr.bf16.gmra.mrb[0].mxu0 %v2527
    %v2563 = vpop.f32.mrb[0].mxu0
    %v2564 = vadd.f32 %v2499, %v2563
    %v2565 = vpop.f32.mrb[0].mxu0
    %v2566 = vpop.f32.mrb[0].mxu0
    %v2567 = vadd.f32 %v2499, %v2566
    %v2568 = vpop.f32.mrb[0].mxu0
    %2569 = vdwg.mxu0
    %v2570 = vadd.f32 %v2397, %v2564
    %v2571 = vadd.f32 %v2398, %v2567
    %v2572 = vld [vmem:[%s14] sm:$0x1]
    %v2573 = vld [vmem:[%s15] sm:$0x1]
    %v2574 = vsel %vm71, %v2570, 0.0
    %2575 = vadd.xlane.f32.xlu0 %v2574
    %v2576 = vpop.xlane.xlu0 %2575
    %v2577 = vsel %vm71, %v2571, 0.0
    %2578 = vadd.xlane.f32.xlu0 %v2577
    %v2579 = vpop.xlane.xlu0 %2578
    %v2580 = vmul.f32 %v2576, %v78
    %v2581 = vmul.f32 %v2579, %v78
    %v2582 = vsub.f32 %v2570, %v2580
    %v2583 = vsub.f32 %v2571, %v2581
    %v2584 = vmul.f32 %v2582, %v2582
    %v2585 = vmul.f32 %v2583, %v2583
    %v2586 = vsel %vm71, %v2584, 0.0
    %2587 = vadd.xlane.f32.xlu0 %v2586
    %v2588 = vpop.xlane.xlu0 %2587
    %v2589 = vsel %vm71, %v2585, 0.0
    %2590 = vadd.xlane.f32.xlu0 %v2589
    %v2591 = vpop.xlane.xlu0 %2590
    %v2592 = vmul.f32 %v2588, %v78
    %v2593 = vmul.f32 %v2591, %v78
    %v2594 = vadd.f32 %v2592, 1e-12
    %v2595 = vadd.f32 %v2593, 1e-12
    %v2596 = vrsqrt.pop %v2594
    %v2597 = vrsqrt.pop %v2595
    %v2598 = vmul.f32 %v2582, %v2596
    %v2599 = vmul.f32 %v2583, %v2597
    %v2601 = vlaneseq
    %v2602 = vshrl.u32 %v2601, 7
    %v2603 = vsub.s32 0, %v2602
    %v2604 = vrot.slane %v2572, %v2603
    %v2606 = vmul.f32 %v2598, %v2604
    %v2607 = vmul.f32 %v2599, %v2604
    %v2609 = vlaneseq
    %v2610 = vshrl.u32 %v2609, 7
    %v2611 = vsub.s32 0, %v2610
    %v2612 = vrot.slane %v2573, %v2611
    %v2614 = vadd.f32 %v2606, %v2612
    %v2615 = vadd.f32 %v2607, %v2612
    %s2616 = scalar_lea.vmem %s4, 16
    %v2617 = vld [vmem:[%s2616] sm:$0xf]
    %v2618 = vld [vmem:[%s2616 + $0x4] sm:$0xf]
    %v2619 = vld [vmem:[%s2616 + $0x8] sm:$0xf]
    %v2620 = vld [vmem:[%s2616 + $0xc] sm:$0xf]
    %v2621 = vpack.c.bf16 %v2615, %v2614
    %s2622 = scalar_lea.vmem %s5, 1
    %v2623 = vld [vmem:[%s2622] sm:$0x1]
    %v2625 = vlaneseq
    %v2626 = vshrl.u32 %v2625, 7
    %v2627 = vsub.s32 0, %v2626
    %v2628 = vrot.slane %v2623, %v2627
    %v2634 = vunpack.c.l.b16 %v2617
    %v2635 = vunpack.c.l.b16 %v2618
    %v2636 = vunpack.c.l.b16 %v2619
    %v2637 = vunpack.c.l.b16 %v2620
    %v2638 = vpack.c.b16 %v2635, %v2634
    %v2639 = vpack.c.b16 %v2637, %v2636
    %v2643 = vsel %vm71, %v2621, 0
    %2645 = vmatprep.subr.bf16.mxu0 0
    %2646 = vmatpush1.bf16.msra.mxu0 %v2638
    %2647 = vmatprep.subr.bf16.mxu0 0
    %2648 = vmatpush1.bf16.msra.mxu0 %v2639
    %2649 = vmatprep.subr.bf16.mxu0 0
    %2650 = vmatpush1.bf16.msra.mxu0 0
    %2651 = vmatprep.subr.bf16.mxu0 0
    %2652 = vmatpush1.bf16.msra.mxu0 0
    %2653 = vmatprep.subr.bf16.mxu0 0
    %2654 = vmatpush1.bf16.msra.mxu0 0
    %2655 = vmatprep.subr.bf16.mxu0 0
    %2656 = vmatpush1.bf16.msra.mxu0 0
    %2657 = vmatprep.subr.bf16.mxu0 0
    %2658 = vmatpush1.bf16.msra.mxu0 0
    %2659 = vmatprep.subr.bf16.mxu0 0
    %2660 = vmatpush1.bf16.msra.mxu0 0
    %2661 = vmatprep.subr.bf16.mxu0 0
    %2662 = vmatpush1.bf16.msra.mxu0 0
    %2663 = vmatprep.subr.bf16.mxu0 0
    %2664 = vmatpush1.bf16.msra.mxu0 0
    %2665 = vmatprep.subr.bf16.mxu0 0
    %2666 = vmatpush1.bf16.msra.mxu0 0
    %2667 = vmatprep.subr.bf16.mxu0 0
    %2668 = vmatpush1.bf16.msra.mxu0 0
    %2669 = vmatprep.subr.bf16.mxu0 0
    %2670 = vmatpush1.bf16.msra.mxu0 0
    %2671 = vmatprep.subr.bf16.mxu0 0
    %2672 = vmatpush1.bf16.msra.mxu0 0
    %2673 = vmatprep.subr.bf16.mxu0 0
    %2674 = vmatpush1.bf16.msra.mxu0 0
    %2675 = vmatprep.subr.bf16.mxu0 0
    %2676 = vmatpush1.bf16.msra.mxu0 0
    %2677 = vmatprep.mubr.bf16.mxu0 0
    %2678 = vmatmul.mubr.bf16.gmra.mrb[0].mxu0 %v2643
    %v2679 = vpop.f32.mrb[0].mxu0
    %v2680 = vadd.f32 %v2628, %v2679
    %v2681 = vpop.f32.mrb[0].mxu0
    %v2682 = vpop.f32.mrb[0].mxu0
    %v2683 = vadd.f32 %v2628, %v2682
    %v2684 = vpop.f32.mrb[0].mxu0
    %2685 = vdwg.mxu0
    %2688 = vrot.lane.b32.xlu0 %v2680, 120
    %v2689 = vpop.permute.xlu0 %2688
    %2690 = vrot.lane.b32.xlu0 %v2683, 120
    %v2691 = vpop.permute.xlu0 %2690
    %2694 = vrot.lane.b32.xlu0 %v2680, 112
    %v2695 = vpop.permute.xlu0 %2694
    %2696 = vrot.lane.b32.xlu0 %v2683, 112
    %v2697 = vpop.permute.xlu0 %2696
    %2700 = vrot.lane.b32.xlu0 %v2680, 104
    %v2701 = vpop.permute.xlu0 %2700
    %2702 = vrot.lane.b32.xlu0 %v2683, 104
    %v2703 = vpop.permute.xlu0 %2702
    %v2706 = vcombine.low %v2680, %v2695
    %v2707 = vcombine.high %v2680, %v2695
    %v2709 = vunpack.c.l.s4 1983009808
    %v2710 = vunpack.c.0.s8 %v2709
    %v2711 = vlaneseq
    %v2712 = vshrl.u32 %v2711, 7
    %v2713 = vsub.s32 %v2710, %v2712
    %v2714 = vrot.slane %v2706, %v2713
    %v2716 = vunpack.c.l.s4 1983009808
    %v2717 = vunpack.c.0.s8 %v2716
    %v2718 = vlaneseq
    %v2719 = vshrl.u32 %v2718, 7
    %v2720 = vsub.s32 %v2717, %v2719
    %v2721 = vrot.slane %v2707, %v2720
    %v2722 = vcombine.low %v2689, %v2701
    %v2723 = vcombine.high %v2689, %v2701
    %v2725 = vunpack.c.l.s4 1983009808
    %v2726 = vunpack.c.0.s8 %v2725
    %v2727 = vlaneseq
    %v2728 = vshrl.u32 %v2727, 7
    %v2729 = vsub.s32 %v2726, %v2728
    %v2730 = vrot.slane %v2722, %v2729
    %v2732 = vunpack.c.l.s4 1983009808
    %v2733 = vunpack.c.0.s8 %v2732
    %v2734 = vlaneseq
    %v2735 = vshrl.u32 %v2734, 7
    %v2736 = vsub.s32 %v2733, %v2735
    %v2737 = vrot.slane %v2723, %v2736
    %v2738 = vcombine.low %v2714, %v2730
    %v2739 = vcombine.high %v2714, %v2730
    %v2741 = vunpack.c.l.s4 1934713408
    %v2742 = vunpack.c.0.s8 %v2741
    %v2743 = vlaneseq
    %v2744 = vshrl.u32 %v2743, 7
    %v2745 = vsub.s32 %v2742, %v2744
    %v2746 = vrot.slane %v2738, %v2745
    %v2748 = vunpack.c.l.s4 1934713408
    %v2749 = vunpack.c.0.s8 %v2748
    %v2750 = vlaneseq
    %v2751 = vshrl.u32 %v2750, 7
    %v2752 = vsub.s32 %v2749, %v2751
    %v2753 = vrot.slane %v2739, %v2752
    %v2754 = vcombine.low %v2721, %v2737
    %v2755 = vcombine.high %v2721, %v2737
    %v2757 = vunpack.c.l.s4 1934713408
    %v2758 = vunpack.c.0.s8 %v2757
    %v2759 = vlaneseq
    %v2760 = vshrl.u32 %v2759, 7
    %v2761 = vsub.s32 %v2758, %v2760
    %v2762 = vrot.slane %v2754, %v2761
    %v2764 = vunpack.c.l.s4 1934713408
    %v2765 = vunpack.c.0.s8 %v2764
    %v2766 = vlaneseq
    %v2767 = vshrl.u32 %v2766, 7
    %v2768 = vsub.s32 %v2765, %v2767
    %v2769 = vrot.slane %v2755, %v2768
    %v2770 = vcombine.high %v2746, 0.0
    %v2771 = vcombine.high %v2753, 0.0
    %v2772 = vcombine.high %v2762, 0.0
    %v2773 = vcombine.high %v2769, 0.0
    %v2774 = vcombine.low %v2683, %v2697
    %v2775 = vcombine.high %v2683, %v2697
    %v2777 = vunpack.c.l.s4 1983009808
    %v2778 = vunpack.c.0.s8 %v2777
    %v2779 = vlaneseq
    %v2780 = vshrl.u32 %v2779, 7
    %v2781 = vsub.s32 %v2778, %v2780
    %v2782 = vrot.slane %v2774, %v2781
    %v2784 = vunpack.c.l.s4 1983009808
    %v2785 = vunpack.c.0.s8 %v2784
    %v2786 = vlaneseq
    %v2787 = vshrl.u32 %v2786, 7
    %v2788 = vsub.s32 %v2785, %v2787
    %v2789 = vrot.slane %v2775, %v2788
    %v2790 = vcombine.low %v2691, %v2703
    %v2791 = vcombine.high %v2691, %v2703
    %v2793 = vunpack.c.l.s4 1983009808
    %v2794 = vunpack.c.0.s8 %v2793
    %v2795 = vlaneseq
    %v2796 = vshrl.u32 %v2795, 7
    %v2797 = vsub.s32 %v2794, %v2796
    %v2798 = vrot.slane %v2790, %v2797
    %v2800 = vunpack.c.l.s4 1983009808
    %v2801 = vunpack.c.0.s8 %v2800
    %v2802 = vlaneseq
    %v2803 = vshrl.u32 %v2802, 7
    %v2804 = vsub.s32 %v2801, %v2803
    %v2805 = vrot.slane %v2791, %v2804
    %v2806 = vcombine.low %v2782, %v2798
    %v2807 = vcombine.high %v2782, %v2798
    %v2809 = vunpack.c.l.s4 1934713408
    %v2810 = vunpack.c.0.s8 %v2809
    %v2811 = vlaneseq
    %v2812 = vshrl.u32 %v2811, 7
    %v2813 = vsub.s32 %v2810, %v2812
    %v2814 = vrot.slane %v2806, %v2813
    %v2816 = vunpack.c.l.s4 1934713408
    %v2817 = vunpack.c.0.s8 %v2816
    %v2818 = vlaneseq
    %v2819 = vshrl.u32 %v2818, 7
    %v2820 = vsub.s32 %v2817, %v2819
    %v2821 = vrot.slane %v2807, %v2820
    %v2822 = vcombine.low %v2789, %v2805
    %v2823 = vcombine.high %v2789, %v2805
    %v2825 = vunpack.c.l.s4 1934713408
    %v2826 = vunpack.c.0.s8 %v2825
    %v2827 = vlaneseq
    %v2828 = vshrl.u32 %v2827, 7
    %v2829 = vsub.s32 %v2826, %v2828
    %v2830 = vrot.slane %v2822, %v2829
    %v2832 = vunpack.c.l.s4 1934713408
    %v2833 = vunpack.c.0.s8 %v2832
    %v2834 = vlaneseq
    %v2835 = vshrl.u32 %v2834, 7
    %v2836 = vsub.s32 %v2833, %v2835
    %v2837 = vrot.slane %v2823, %v2836
    %v2838 = vcombine.high %v2814, 0.0
    %v2839 = vcombine.high %v2821, 0.0
    %v2840 = vcombine.high %v2830, 0.0
    %v2841 = vcombine.high %v2837, 0.0
    %v2842 = vcombine.low %v2746, %v2753
    %v2844 = vunpack.c.l.s4 1983009808
    %v2845 = vunpack.c.0.s8 %v2844
    %v2846 = vlaneseq
    %v2847 = vshrl.u32 %v2846, 7
    %v2848 = vsub.s32 %v2845, %v2847
    %v2849 = vrot.slane %v2842, %v2848
    %v2850 = vcombine.low %v2770, %v2771
    %v2852 = vunpack.c.l.s4 1983009808
    %v2853 = vunpack.c.0.s8 %v2852
    %v2854 = vlaneseq
    %v2855 = vshrl.u32 %v2854, 7
    %v2856 = vsub.s32 %v2853, %v2855
    %v2857 = vrot.slane %v2850, %v2856
    %v2858 = vcombine.low %v2762, %v2769
    %v2860 = vunpack.c.l.s4 1983009808
    %v2861 = vunpack.c.0.s8 %v2860
    %v2862 = vlaneseq
    %v2863 = vshrl.u32 %v2862, 7
    %v2864 = vsub.s32 %v2861, %v2863
    %v2865 = vrot.slane %v2858, %v2864
    %v2866 = vcombine.low %v2772, %v2773
    %v2868 = vunpack.c.l.s4 1983009808
    %v2869 = vunpack.c.0.s8 %v2868
    %v2870 = vlaneseq
    %v2871 = vshrl.u32 %v2870, 7
    %v2872 = vsub.s32 %v2869, %v2871
    %v2873 = vrot.slane %v2866, %v2872
    %v2874 = vcombine.low %v2849, %v2857
    %v2875 = vcombine.high %v2849, %v2857
    %v2877 = vunpack.c.l.s4 1934713408
    %v2878 = vunpack.c.0.s8 %v2877
    %v2879 = vlaneseq
    %v2880 = vshrl.u32 %v2879, 7
    %v2881 = vsub.s32 %v2878, %v2880
    %v2882 = vrot.slane %v2874, %v2881
    %v2884 = vunpack.c.l.s4 1934713408
    %v2885 = vunpack.c.0.s8 %v2884
    %v2886 = vlaneseq
    %v2887 = vshrl.u32 %v2886, 7
    %v2888 = vsub.s32 %v2885, %v2887
    %v2889 = vrot.slane %v2875, %v2888
    %v2890 = vcombine.low %v2865, %v2873
    %v2891 = vcombine.high %v2865, %v2873
    %v2893 = vunpack.c.l.s4 1934713408
    %v2894 = vunpack.c.0.s8 %v2893
    %v2895 = vlaneseq
    %v2896 = vshrl.u32 %v2895, 7
    %v2897 = vsub.s32 %v2894, %v2896
    %v2898 = vrot.slane %v2890, %v2897
    %v2900 = vunpack.c.l.s4 1934713408
    %v2901 = vunpack.c.0.s8 %v2900
    %v2902 = vlaneseq
    %v2903 = vshrl.u32 %v2902, 7
    %v2904 = vsub.s32 %v2901, %v2903
    %v2905 = vrot.slane %v2891, %v2904
    %v2906 = vcombine.low %v2882, %v2898
    %v2907 = vcombine.high %v2882, %v2898
    %v2908 = vcombine.low %v2889, %v2905
    %v2909 = vcombine.high %v2889, %v2905
    %v2910 = vcombine.low %v2814, %v2821
    %v2912 = vunpack.c.l.s4 1983009808
    %v2913 = vunpack.c.0.s8 %v2912
    %v2914 = vlaneseq
    %v2915 = vshrl.u32 %v2914, 7
    %v2916 = vsub.s32 %v2913, %v2915
    %v2917 = vrot.slane %v2910, %v2916
    %v2918 = vcombine.low %v2838, %v2839
    %v2920 = vunpack.c.l.s4 1983009808
    %v2921 = vunpack.c.0.s8 %v2920
    %v2922 = vlaneseq
    %v2923 = vshrl.u32 %v2922, 7
    %v2924 = vsub.s32 %v2921, %v2923
    %v2925 = vrot.slane %v2918, %v2924
    %v2926 = vcombine.low %v2830, %v2837
    %v2928 = vunpack.c.l.s4 1983009808
    %v2929 = vunpack.c.0.s8 %v2928
    %v2930 = vlaneseq
    %v2931 = vshrl.u32 %v2930, 7
    %v2932 = vsub.s32 %v2929, %v2931
    %v2933 = vrot.slane %v2926, %v2932
    %v2934 = vcombine.low %v2840, %v2841
    %v2936 = vunpack.c.l.s4 1983009808
    %v2937 = vunpack.c.0.s8 %v2936
    %v2938 = vlaneseq
    %v2939 = vshrl.u32 %v2938, 7
    %v2940 = vsub.s32 %v2937, %v2939
    %v2941 = vrot.slane %v2934, %v2940
    %v2942 = vcombine.low %v2917, %v2925
    %v2943 = vcombine.high %v2917, %v2925
    %v2945 = vunpack.c.l.s4 1934713408
    %v2946 = vunpack.c.0.s8 %v2945
    %v2947 = vlaneseq
    %v2948 = vshrl.u32 %v2947, 7
    %v2949 = vsub.s32 %v2946, %v2948
    %v2950 = vrot.slane %v2942, %v2949
    %v2952 = vunpack.c.l.s4 1934713408
    %v2953 = vunpack.c.0.s8 %v2952
    %v2954 = vlaneseq
    %v2955 = vshrl.u32 %v2954, 7
    %v2956 = vsub.s32 %v2953, %v2955
    %v2957 = vrot.slane %v2943, %v2956
    %v2958 = vcombine.low %v2933, %v2941
    %v2959 = vcombine.high %v2933, %v2941
    %v2961 = vunpack.c.l.s4 1934713408
    %v2962 = vunpack.c.0.s8 %v2961
    %v2963 = vlaneseq
    %v2964 = vshrl.u32 %v2963, 7
    %v2965 = vsub.s32 %v2962, %v2964
    %v2966 = vrot.slane %v2958, %v2965
    %v2968 = vunpack.c.l.s4 1934713408
    %v2969 = vunpack.c.0.s8 %v2968
    %v2970 = vlaneseq
    %v2971 = vshrl.u32 %v2970, 7
    %v2972 = vsub.s32 %v2969, %v2971
    %v2973 = vrot.slane %v2959, %v2972
    %v2974 = vcombine.low %v2950, %v2966
    %v2975 = vcombine.high %v2950, %v2966
    %v2976 = vcombine.low %v2957, %v2973
    %v2977 = vcombine.high %v2957, %v2973
    %2978 = vrot.lane.b32.xlu0 %v2680, 96
    %v2979 = vpop.permute.xlu0 %2978
    %2980 = vrot.lane.b32.xlu0 %v2683, 96
    %v2981 = vpop.permute.xlu0 %2980
    %2982 = vrot.lane.b32.xlu0 %v2689, 96
    %v2983 = vpop.permute.xlu0 %2982
    %2984 = vrot.lane.b32.xlu0 %v2691, 96
    %v2985 = vpop.permute.xlu0 %2984
    %2986 = vrot.lane.b32.xlu0 %v2695, 96
    %v2987 = vpop.permute.xlu0 %2986
    %2988 = vrot.lane.b32.xlu0 %v2697, 96
    %v2989 = vpop.permute.xlu0 %2988
    %2990 = vrot.lane.b32.xlu0 %v2701, 96
    %v2991 = vpop.permute.xlu0 %2990
    %2992 = vrot.lane.b32.xlu0 %v2703, 96
    %v2993 = vpop.permute.xlu0 %2992
    %v3002 = vcombine.low %v2979, %v2987
    %v3003 = vcombine.high %v2979, %v2987
    %v3005 = vunpack.c.l.s4 1983009808
    %v3006 = vunpack.c.0.s8 %v3005
    %v3007 = vlaneseq
    %v3008 = vshrl.u32 %v3007, 7
    %v3009 = vsub.s32 %v3006, %v3008
    %v3010 = vrot.slane %v3002, %v3009
    %v3012 = vunpack.c.l.s4 1983009808
    %v3013 = vunpack.c.0.s8 %v3012
    %v3014 = vlaneseq
    %v3015 = vshrl.u32 %v3014, 7
    %v3016 = vsub.s32 %v3013, %v3015
    %v3017 = vrot.slane %v3003, %v3016
    %v3018 = vcombine.low %v2983, %v2991
    %v3019 = vcombine.high %v2983, %v2991
    %v3021 = vunpack.c.l.s4 1983009808
    %v3022 = vunpack.c.0.s8 %v3021
    %v3023 = vlaneseq
    %v3024 = vshrl.u32 %v3023, 7
    %v3025 = vsub.s32 %v3022, %v3024
    %v3026 = vrot.slane %v3018, %v3025
    %v3028 = vunpack.c.l.s4 1983009808
    %v3029 = vunpack.c.0.s8 %v3028
    %v3030 = vlaneseq
    %v3031 = vshrl.u32 %v3030, 7
    %v3032 = vsub.s32 %v3029, %v3031
    %v3033 = vrot.slane %v3019, %v3032
    %v3034 = vcombine.low %v3010, %v3026
    %v3035 = vcombine.high %v3010, %v3026
    %v3037 = vunpack.c.l.s4 1934713408
    %v3038 = vunpack.c.0.s8 %v3037
    %v3039 = vlaneseq
    %v3040 = vshrl.u32 %v3039, 7
    %v3041 = vsub.s32 %v3038, %v3040
    %v3042 = vrot.slane %v3034, %v3041
    %v3044 = vunpack.c.l.s4 1934713408
    %v3045 = vunpack.c.0.s8 %v3044
    %v3046 = vlaneseq
    %v3047 = vshrl.u32 %v3046, 7
    %v3048 = vsub.s32 %v3045, %v3047
    %v3049 = vrot.slane %v3035, %v3048
    %v3050 = vcombine.low %v3017, %v3033
    %v3051 = vcombine.high %v3017, %v3033
    %v3053 = vunpack.c.l.s4 1934713408
    %v3054 = vunpack.c.0.s8 %v3053
    %v3055 = vlaneseq
    %v3056 = vshrl.u32 %v3055, 7
    %v3057 = vsub.s32 %v3054, %v3056
    %v3058 = vrot.slane %v3050, %v3057
    %v3060 = vunpack.c.l.s4 1934713408
    %v3061 = vunpack.c.0.s8 %v3060
    %v3062 = vlaneseq
    %v3063 = vshrl.u32 %v3062, 7
    %v3064 = vsub.s32 %v3061, %v3063
    %v3065 = vrot.slane %v3051, %v3064
    %v3066 = vcombine.high %v3042, 0.0
    %v3067 = vcombine.high %v3049, 0.0
    %v3068 = vcombine.high %v3058, 0.0
    %v3069 = vcombine.high %v3065, 0.0
    %v3070 = vcombine.low %v2981, %v2989
    %v3071 = vcombine.high %v2981, %v2989
    %v3073 = vunpack.c.l.s4 1983009808
    %v3074 = vunpack.c.0.s8 %v3073
    %v3075 = vlaneseq
    %v3076 = vshrl.u32 %v3075, 7
    %v3077 = vsub.s32 %v3074, %v3076
    %v3078 = vrot.slane %v3070, %v3077
    %v3080 = vunpack.c.l.s4 1983009808
    %v3081 = vunpack.c.0.s8 %v3080
    %v3082 = vlaneseq
    %v3083 = vshrl.u32 %v3082, 7
    %v3084 = vsub.s32 %v3081, %v3083
    %v3085 = vrot.slane %v3071, %v3084
    %v3086 = vcombine.low %v2985, %v2993
    %v3087 = vcombine.high %v2985, %v2993
    %v3089 = vunpack.c.l.s4 1983009808
    %v3090 = vunpack.c.0.s8 %v3089
    %v3091 = vlaneseq
    %v3092 = vshrl.u32 %v3091, 7
    %v3093 = vsub.s32 %v3090, %v3092
    %v3094 = vrot.slane %v3086, %v3093
    %v3096 = vunpack.c.l.s4 1983009808
    %v3097 = vunpack.c.0.s8 %v3096
    %v3098 = vlaneseq
    %v3099 = vshrl.u32 %v3098, 7
    %v3100 = vsub.s32 %v3097, %v3099
    %v3101 = vrot.slane %v3087, %v3100
    %v3102 = vcombine.low %v3078, %v3094
    %v3103 = vcombine.high %v3078, %v3094
    %v3105 = vunpack.c.l.s4 1934713408
    %v3106 = vunpack.c.0.s8 %v3105
    %v3107 = vlaneseq
    %v3108 = vshrl.u32 %v3107, 7
    %v3109 = vsub.s32 %v3106, %v3108
    %v3110 = vrot.slane %v3102, %v3109
    %v3112 = vunpack.c.l.s4 1934713408
    %v3113 = vunpack.c.0.s8 %v3112
    %v3114 = vlaneseq
    %v3115 = vshrl.u32 %v3114, 7
    %v3116 = vsub.s32 %v3113, %v3115
    %v3117 = vrot.slane %v3103, %v3116
    %v3118 = vcombine.low %v3085, %v3101
    %v3119 = vcombine.high %v3085, %v3101
    %v3121 = vunpack.c.l.s4 1934713408
    %v3122 = vunpack.c.0.s8 %v3121
    %v3123 = vlaneseq
    %v3124 = vshrl.u32 %v3123, 7
    %v3125 = vsub.s32 %v3122, %v3124
    %v3126 = vrot.slane %v3118, %v3125
    %v3128 = vunpack.c.l.s4 1934713408
    %v3129 = vunpack.c.0.s8 %v3128
    %v3130 = vlaneseq
    %v3131 = vshrl.u32 %v3130, 7
    %v3132 = vsub.s32 %v3129, %v3131
    %v3133 = vrot.slane %v3119, %v3132
    %v3134 = vcombine.high %v3110, 0.0
    %v3135 = vcombine.high %v3117, 0.0
    %v3136 = vcombine.high %v3126, 0.0
    %v3137 = vcombine.high %v3133, 0.0
    %v3138 = vcombine.low %v3042, %v3049
    %v3140 = vunpack.c.l.s4 1983009808
    %v3141 = vunpack.c.0.s8 %v3140
    %v3142 = vlaneseq
    %v3143 = vshrl.u32 %v3142, 7
    %v3144 = vsub.s32 %v3141, %v3143
    %v3145 = vrot.slane %v3138, %v3144
    %v3146 = vcombine.low %v3066, %v3067
    %v3148 = vunpack.c.l.s4 1983009808
    %v3149 = vunpack.c.0.s8 %v3148
    %v3150 = vlaneseq
    %v3151 = vshrl.u32 %v3150, 7
    %v3152 = vsub.s32 %v3149, %v3151
    %v3153 = vrot.slane %v3146, %v3152
    %v3154 = vcombine.low %v3058, %v3065
    %v3156 = vunpack.c.l.s4 1983009808
    %v3157 = vunpack.c.0.s8 %v3156
    %v3158 = vlaneseq
    %v3159 = vshrl.u32 %v3158, 7
    %v3160 = vsub.s32 %v3157, %v3159
    %v3161 = vrot.slane %v3154, %v3160
    %v3162 = vcombine.low %v3068, %v3069
    %v3164 = vunpack.c.l.s4 1983009808
    %v3165 = vunpack.c.0.s8 %v3164
    %v3166 = vlaneseq
    %v3167 = vshrl.u32 %v3166, 7
    %v3168 = vsub.s32 %v3165, %v3167
    %v3169 = vrot.slane %v3162, %v3168
    %v3170 = vcombine.low %v3145, %v3153
    %v3171 = vcombine.high %v3145, %v3153
    %v3173 = vunpack.c.l.s4 1934713408
    %v3174 = vunpack.c.0.s8 %v3173
    %v3175 = vlaneseq
    %v3176 = vshrl.u32 %v3175, 7
    %v3177 = vsub.s32 %v3174, %v3176
    %v3178 = vrot.slane %v3170, %v3177
    %v3180 = vunpack.c.l.s4 1934713408
    %v3181 = vunpack.c.0.s8 %v3180
    %v3182 = vlaneseq
    %v3183 = vshrl.u32 %v3182, 7
    %v3184 = vsub.s32 %v3181, %v3183
    %v3185 = vrot.slane %v3171, %v3184
    %v3186 = vcombine.low %v3161, %v3169
    %v3187 = vcombine.high %v3161, %v3169
    %v3189 = vunpack.c.l.s4 1934713408
    %v3190 = vunpack.c.0.s8 %v3189
    %v3191 = vlaneseq
    %v3192 = vshrl.u32 %v3191, 7
    %v3193 = vsub.s32 %v3190, %v3192
    %v3194 = vrot.slane %v3186, %v3193
    %v3196 = vunpack.c.l.s4 1934713408
    %v3197 = vunpack.c.0.s8 %v3196
    %v3198 = vlaneseq
    %v3199 = vshrl.u32 %v3198, 7
    %v3200 = vsub.s32 %v3197, %v3199
    %v3201 = vrot.slane %v3187, %v3200
    %v3202 = vcombine.low %v3178, %v3194
    %v3203 = vcombine.high %v3178, %v3194
    %v3204 = vcombine.low %v3185, %v3201
    %v3205 = vcombine.high %v3185, %v3201
    %v3206 = vcombine.low %v3110, %v3117
    %v3208 = vunpack.c.l.s4 1983009808
    %v3209 = vunpack.c.0.s8 %v3208
    %v3210 = vlaneseq
    %v3211 = vshrl.u32 %v3210, 7
    %v3212 = vsub.s32 %v3209, %v3211
    %v3213 = vrot.slane %v3206, %v3212
    %v3214 = vcombine.low %v3134, %v3135
    %v3216 = vunpack.c.l.s4 1983009808
    %v3217 = vunpack.c.0.s8 %v3216
    %v3218 = vlaneseq
    %v3219 = vshrl.u32 %v3218, 7
    %v3220 = vsub.s32 %v3217, %v3219
    %v3221 = vrot.slane %v3214, %v3220
    %v3222 = vcombine.low %v3126, %v3133
    %v3224 = vunpack.c.l.s4 1983009808
    %v3225 = vunpack.c.0.s8 %v3224
    %v3226 = vlaneseq
    %v3227 = vshrl.u32 %v3226, 7
    %v3228 = vsub.s32 %v3225, %v3227
    %v3229 = vrot.slane %v3222, %v3228
    %v3230 = vcombine.low %v3136, %v3137
    %v3232 = vunpack.c.l.s4 1983009808
    %v3233 = vunpack.c.0.s8 %v3232
    %v3234 = vlaneseq
    %v3235 = vshrl.u32 %v3234, 7
    %v3236 = vsub.s32 %v3233, %v3235
    %v3237 = vrot.slane %v3230, %v3236
    %v3238 = vcombine.low %v3213, %v3221
    %v3239 = vcombine.high %v3213, %v3221
    %v3241 = vunpack.c.l.s4 1934713408
    %v3242 = vunpack.c.0.s8 %v3241
    %v3243 = vlaneseq
    %v3244 = vshrl.u32 %v3243, 7
    %v3245 = vsub.s32 %v3242, %v3244
    %v3246 = vrot.slane %v3238, %v3245
    %v3248 = vunpack.c.l.s4 1934713408
    %v3249 = vunpack.c.0.s8 %v3248
    %v3250 = vlaneseq
    %v3251 = vshrl.u32 %v3250, 7
    %v3252 = vsub.s32 %v3249, %v3251
    %v3253 = vrot.slane %v3239, %v3252
    %v3254 = vcombine.low %v3229, %v3237
    %v3255 = vcombine.high %v3229, %v3237
    %v3257 = vunpack.c.l.s4 1934713408
    %v3258 = vunpack.c.0.s8 %v3257
    %v3259 = vlaneseq
    %v3260 = vshrl.u32 %v3259, 7
    %v3261 = vsub.s32 %v3258, %v3260
    %v3262 = vrot.slane %v3254, %v3261
    %v3264 = vunpack.c.l.s4 1934713408
    %v3265 = vunpack.c.0.s8 %v3264
    %v3266 = vlaneseq
    %v3267 = vshrl.u32 %v3266, 7
    %v3268 = vsub.s32 %v3265, %v3267
    %v3269 = vrot.slane %v3255, %v3268
    %v3270 = vcombine.low %v3246, %v3262
    %v3271 = vcombine.high %v3246, %v3262
    %v3272 = vcombine.low %v3253, %v3269
    %v3273 = vcombine.high %v3253, %v3269
    %3274 = vrot.lane.b32.xlu0 %v2680, 64
    %v3275 = vpop.permute.xlu0 %3274
    %3276 = vrot.lane.b32.xlu0 %v2683, 64
    %v3277 = vpop.permute.xlu0 %3276
    %3278 = vrot.lane.b32.xlu0 %v2689, 64
    %v3279 = vpop.permute.xlu0 %3278
    %3280 = vrot.lane.b32.xlu0 %v2691, 64
    %v3281 = vpop.permute.xlu0 %3280
    %3282 = vrot.lane.b32.xlu0 %v2695, 64
    %v3283 = vpop.permute.xlu0 %3282
    %3284 = vrot.lane.b32.xlu0 %v2697, 64
    %v3285 = vpop.permute.xlu0 %3284
    %3286 = vrot.lane.b32.xlu0 %v2701, 64
    %v3287 = vpop.permute.xlu0 %3286
    %3288 = vrot.lane.b32.xlu0 %v2703, 64
    %v3289 = vpop.permute.xlu0 %3288
    %v3298 = vcombine.low %v3275, %v3283
    %v3299 = vcombine.high %v3275, %v3283
    %v3301 = vunpack.c.l.s4 1983009808
    %v3302 = vunpack.c.0.s8 %v3301
    %v3303 = vlaneseq
    %v3304 = vshrl.u32 %v3303, 7
    %v3305 = vsub.s32 %v3302, %v3304
    %v3306 = vrot.slane %v3298, %v3305
    %v3308 = vunpack.c.l.s4 1983009808
    %v3309 = vunpack.c.0.s8 %v3308
    %v3310 = vlaneseq
    %v3311 = vshrl.u32 %v3310, 7
    %v3312 = vsub.s32 %v3309, %v3311
    %v3313 = vrot.slane %v3299, %v3312
    %v3314 = vcombine.low %v3279, %v3287
    %v3315 = vcombine.high %v3279, %v3287
    %v3317 = vunpack.c.l.s4 1983009808
    %v3318 = vunpack.c.0.s8 %v3317
    %v3319 = vlaneseq
    %v3320 = vshrl.u32 %v3319, 7
    %v3321 = vsub.s32 %v3318, %v3320
    %v3322 = vrot.slane %v3314, %v3321
    %v3324 = vunpack.c.l.s4 1983009808
    %v3325 = vunpack.c.0.s8 %v3324
    %v3326 = vlaneseq
    %v3327 = vshrl.u32 %v3326, 7
    %v3328 = vsub.s32 %v3325, %v3327
    %v3329 = vrot.slane %v3315, %v3328
    %v3330 = vcombine.low %v3306, %v3322
    %v3331 = vcombine.high %v3306, %v3322
    %v3333 = vunpack.c.l.s4 1934713408
    %v3334 = vunpack.c.0.s8 %v3333
    %v3335 = vlaneseq
    %v3336 = vshrl.u32 %v3335, 7
    %v3337 = vsub.s32 %v3334, %v3336
    %v3338 = vrot.slane %v3330, %v3337
    %v3340 = vunpack.c.l.s4 1934713408
    %v3341 = vunpack.c.0.s8 %v3340
    %v3342 = vlaneseq
    %v3343 = vshrl.u32 %v3342, 7
    %v3344 = vsub.s32 %v3341, %v3343
    %v3345 = vrot.slane %v3331, %v3344
    %v3346 = vcombine.low %v3313, %v3329
    %v3347 = vcombine.high %v3313, %v3329
    %v3349 = vunpack.c.l.s4 1934713408
    %v3350 = vunpack.c.0.s8 %v3349
    %v3351 = vlaneseq
    %v3352 = vshrl.u32 %v3351, 7
    %v3353 = vsub.s32 %v3350, %v3352
    %v3354 = vrot.slane %v3346, %v3353
    %v3356 = vunpack.c.l.s4 1934713408
    %v3357 = vunpack.c.0.s8 %v3356
    %v3358 = vlaneseq
    %v3359 = vshrl.u32 %v3358, 7
    %v3360 = vsub.s32 %v3357, %v3359
    %v3361 = vrot.slane %v3347, %v3360
    %v3362 = vcombine.high %v3338, 0.0
    %v3363 = vcombine.high %v3345, 0.0
    %v3364 = vcombine.high %v3354, 0.0
    %v3365 = vcombine.high %v3361, 0.0
    %v3366 = vcombine.low %v3277, %v3285
    %v3367 = vcombine.high %v3277, %v3285
    %v3369 = vunpack.c.l.s4 1983009808
    %v3370 = vunpack.c.0.s8 %v3369
    %v3371 = vlaneseq
    %v3372 = vshrl.u32 %v3371, 7
    %v3373 = vsub.s32 %v3370, %v3372
    %v3374 = vrot.slane %v3366, %v3373
    %v3376 = vunpack.c.l.s4 1983009808
    %v3377 = vunpack.c.0.s8 %v3376
    %v3378 = vlaneseq
    %v3379 = vshrl.u32 %v3378, 7
    %v3380 = vsub.s32 %v3377, %v3379
    %v3381 = vrot.slane %v3367, %v3380
    %v3382 = vcombine.low %v3281, %v3289
    %v3383 = vcombine.high %v3281, %v3289
    %v3385 = vunpack.c.l.s4 1983009808
    %v3386 = vunpack.c.0.s8 %v3385
    %v3387 = vlaneseq
    %v3388 = vshrl.u32 %v3387, 7
    %v3389 = vsub.s32 %v3386, %v3388
    %v3390 = vrot.slane %v3382, %v3389
    %v3392 = vunpack.c.l.s4 1983009808
    %v3393 = vunpack.c.0.s8 %v3392
    %v3394 = vlaneseq
    %v3395 = vshrl.u32 %v3394, 7
    %v3396 = vsub.s32 %v3393, %v3395
    %v3397 = vrot.slane %v3383, %v3396
    %v3398 = vcombine.low %v3374, %v3390
    %v3399 = vcombine.high %v3374, %v3390
    %v3401 = vunpack.c.l.s4 1934713408
    %v3402 = vunpack.c.0.s8 %v3401
    %v3403 = vlaneseq
    %v3404 = vshrl.u32 %v3403, 7
    %v3405 = vsub.s32 %v3402, %v3404
    %v3406 = vrot.slane %v3398, %v3405
    %v3408 = vunpack.c.l.s4 1934713408
    %v3409 = vunpack.c.0.s8 %v3408
    %v3410 = vlaneseq
    %v3411 = vshrl.u32 %v3410, 7
    %v3412 = vsub.s32 %v3409, %v3411
    %v3413 = vrot.slane %v3399, %v3412
    %v3414 = vcombine.low %v3381, %v3397
    %v3415 = vcombine.high %v3381, %v3397
    %v3417 = vunpack.c.l.s4 1934713408
    %v3418 = vunpack.c.0.s8 %v3417
    %v3419 = vlaneseq
    %v3420 = vshrl.u32 %v3419, 7
    %v3421 = vsub.s32 %v3418, %v3420
    %v3422 = vrot.slane %v3414, %v3421
    %v3424 = vunpack.c.l.s4 1934713408
    %v3425 = vunpack.c.0.s8 %v3424
    %v3426 = vlaneseq
    %v3427 = vshrl.u32 %v3426, 7
    %v3428 = vsub.s32 %v3425, %v3427
    %v3429 = vrot.slane %v3415, %v3428
    %v3430 = vcombine.high %v3406, 0.0
    %v3431 = vcombine.high %v3413, 0.0
    %v3432 = vcombine.high %v3422, 0.0
    %v3433 = vcombine.high %v3429, 0.0
    %v3434 = vcombine.low %v3338, %v3345
    %v3436 = vunpack.c.l.s4 1983009808
    %v3437 = vunpack.c.0.s8 %v3436
    %v3438 = vlaneseq
    %v3439 = vshrl.u32 %v3438, 7
    %v3440 = vsub.s32 %v3437, %v3439
    %v3441 = vrot.slane %v3434, %v3440
    %v3442 = vcombine.low %v3362, %v3363
    %v3444 = vunpack.c.l.s4 1983009808
    %v3445 = vunpack.c.0.s8 %v3444
    %v3446 = vlaneseq
    %v3447 = vshrl.u32 %v3446, 7
    %v3448 = vsub.s32 %v3445, %v3447
    %v3449 = vrot.slane %v3442, %v3448
    %v3450 = vcombine.low %v3354, %v3361
    %v3452 = vunpack.c.l.s4 1983009808
    %v3453 = vunpack.c.0.s8 %v3452
    %v3454 = vlaneseq
    %v3455 = vshrl.u32 %v3454, 7
    %v3456 = vsub.s32 %v3453, %v3455
    %v3457 = vrot.slane %v3450, %v3456
    %v3458 = vcombine.low %v3364, %v3365
    %v3460 = vunpack.c.l.s4 1983009808
    %v3461 = vunpack.c.0.s8 %v3460
    %v3462 = vlaneseq
    %v3463 = vshrl.u32 %v3462, 7
    %v3464 = vsub.s32 %v3461, %v3463
    %v3465 = vrot.slane %v3458, %v3464
    %v3466 = vcombine.low %v3441, %v3449
    %v3467 = vcombine.high %v3441, %v3449
    %v3469 = vunpack.c.l.s4 1934713408
    %v3470 = vunpack.c.0.s8 %v3469
    %v3471 = vlaneseq
    %v3472 = vshrl.u32 %v3471, 7
    %v3473 = vsub.s32 %v3470, %v3472
    %v3474 = vrot.slane %v3466, %v3473
    %v3476 = vunpack.c.l.s4 1934713408
    %v3477 = vunpack.c.0.s8 %v3476
    %v3478 = vlaneseq
    %v3479 = vshrl.u32 %v3478, 7
    %v3480 = vsub.s32 %v3477, %v3479
    %v3481 = vrot.slane %v3467, %v3480
    %v3482 = vcombine.low %v3457, %v3465
    %v3483 = vcombine.high %v3457, %v3465
    %v3485 = vunpack.c.l.s4 1934713408
    %v3486 = vunpack.c.0.s8 %v3485
    %v3487 = vlaneseq
    %v3488 = vshrl.u32 %v3487, 7
    %v3489 = vsub.s32 %v3486, %v3488
    %v3490 = vrot.slane %v3482, %v3489
    %v3492 = vunpack.c.l.s4 1934713408
    %v3493 = vunpack.c.0.s8 %v3492
    %v3494 = vlaneseq
    %v3495 = vshrl.u32 %v3494, 7
    %v3496 = vsub.s32 %v3493, %v3495
    %v3497 = vrot.slane %v3483, %v3496
    %v3498 = vcombine.low %v3474, %v3490
    %v3499 = vcombine.high %v3474, %v3490
    %v3500 = vcombine.low %v3481, %v3497
    %v3501 = vcombine.high %v3481, %v3497
    %v3502 = vcombine.low %v3406, %v3413
    %v3504 = vunpack.c.l.s4 1983009808
    %v3505 = vunpack.c.0.s8 %v3504
    %v3506 = vlaneseq
    %v3507 = vshrl.u32 %v3506, 7
    %v3508 = vsub.s32 %v3505, %v3507
    %v3509 = vrot.slane %v3502, %v3508
    %v3510 = vcombine.low %v3430, %v3431
    %v3512 = vunpack.c.l.s4 1983009808
    %v3513 = vunpack.c.0.s8 %v3512
    %v3514 = vlaneseq
    %v3515 = vshrl.u32 %v3514, 7
    %v3516 = vsub.s32 %v3513, %v3515
    %v3517 = vrot.slane %v3510, %v3516
    %v3518 = vcombine.low %v3422, %v3429
    %v3520 = vunpack.c.l.s4 1983009808
    %v3521 = vunpack.c.0.s8 %v3520
    %v3522 = vlaneseq
    %v3523 = vshrl.u32 %v3522, 7
    %v3524 = vsub.s32 %v3521, %v3523
    %v3525 = vrot.slane %v3518, %v3524
    %v3526 = vcombine.low %v3432, %v3433
    %v3528 = vunpack.c.l.s4 1983009808
    %v3529 = vunpack.c.0.s8 %v3528
    %v3530 = vlaneseq
    %v3531 = vshrl.u32 %v3530, 7
    %v3532 = vsub.s32 %v3529, %v3531
    %v3533 = vrot.slane %v3526, %v3532
    %v3534 = vcombine.low %v3509, %v3517
    %v3535 = vcombine.high %v3509, %v3517
    %v3537 = vunpack.c.l.s4 1934713408
    %v3538 = vunpack.c.0.s8 %v3537
    %v3539 = vlaneseq
    %v3540 = vshrl.u32 %v3539, 7
    %v3541 = vsub.s32 %v3538, %v3540
    %v3542 = vrot.slane %v3534, %v3541
    %v3544 = vunpack.c.l.s4 1934713408
    %v3545 = vunpack.c.0.s8 %v3544
    %v3546 = vlaneseq
    %v3547 = vshrl.u32 %v3546, 7
    %v3548 = vsub.s32 %v3545, %v3547
    %v3549 = vrot.slane %v3535, %v3548
    %v3550 = vcombine.low %v3525, %v3533
    %v3551 = vcombine.high %v3525, %v3533
    %v3553 = vunpack.c.l.s4 1934713408
    %v3554 = vunpack.c.0.s8 %v3553
    %v3555 = vlaneseq
    %v3556 = vshrl.u32 %v3555, 7
    %v3557 = vsub.s32 %v3554, %v3556
    %v3558 = vrot.slane %v3550, %v3557
    %v3560 = vunpack.c.l.s4 1934713408
    %v3561 = vunpack.c.0.s8 %v3560
    %v3562 = vlaneseq
    %v3563 = vshrl.u32 %v3562, 7
    %v3564 = vsub.s32 %v3561, %v3563
    %v3565 = vrot.slane %v3551, %v3564
    %v3566 = vcombine.low %v3542, %v3558
    %v3567 = vcombine.high %v3542, %v3558
    %v3568 = vcombine.low %v3549, %v3565
    %v3569 = vcombine.high %v3549, %v3565
    %v3570 = vpack.c.bf16 %v2906, %v2906
    %v3571 = vpack.c.bf16 %v2974, %v2974
    %v3572 = vpack.c.bf16 %v2907, %v2907
    %v3573 = vpack.c.bf16 %v2975, %v2975
    %v3574 = vpack.c.bf16 %v2908, %v2908
    %v3575 = vpack.c.bf16 %v2976, %v2976
    %v3576 = vpack.c.bf16 %v2909, %v2909
    %v3577 = vpack.c.bf16 %v2977, %v2977
    %v3578 = vpack.c.bf16 %v3202, %v3202
    %v3579 = vpack.c.bf16 %v3270, %v3270
    %v3580 = vpack.c.bf16 %v3203, %v3203
    %v3581 = vpack.c.bf16 %v3271, %v3271
    %v3582 = vpack.c.bf16 %v3204, %v3204
    %v3583 = vpack.c.bf16 %v3272, %v3272
    %v3584 = vpack.c.bf16 %v3205, %v3205
    %v3585 = vpack.c.bf16 %v3273, %v3273
    %v3587 = vsel %vm1139, %v3570, 0
    %v3590 = vsel %vm1139, %v3578, 0
    %3592 = vmatprep.subr.bf16.mxu0 0
    %3593 = vmatpush1.bf16.xpose.msra.mxu0 %v3590
    %3594 = vmatprep.subr.bf16.mxu0 0
    %3595 = vmatpush1.bf16.xpose.msra.mxu0 0
    %3596 = vmatprep.subr.bf16.mxu0 0
    %3597 = vmatpush1.bf16.xpose.msra.mxu0 0
    %3598 = vmatprep.subr.bf16.mxu0 0
    %3599 = vmatpush1.bf16.xpose.msra.mxu0 0
    %3600 = vmatprep.subr.bf16.mxu0 0
    %3601 = vmatpush1.bf16.xpose.msra.mxu0 0
    %3602 = vmatprep.subr.bf16.mxu0 0
    %3603 = vmatpush1.bf16.xpose.msra.mxu0 0
    %3604 = vmatprep.subr.bf16.mxu0 0
    %3605 = vmatpush1.bf16.xpose.msra.mxu0 0
    %3606 = vmatprep.subr.bf16.mxu0 0
    %3607 = vmatpush1.bf16.xpose.msra.mxu0 0
    %3608 = vmatprep.subr.bf16.mxu0 0
    %3609 = vmatpush1.bf16.xpose.msra.mxu0 0
    %3610 = vmatprep.subr.bf16.mxu0 0
    %3611 = vmatpush1.bf16.xpose.msra.mxu0 0
    %3612 = vmatprep.subr.bf16.mxu0 0
    %3613 = vmatpush1.bf16.xpose.msra.mxu0 0
    %3614 = vmatprep.subr.bf16.mxu0 0
    %3615 = vmatpush1.bf16.xpose.msra.mxu0 0
    %3616 = vmatprep.subr.bf16.mxu0 0
    %3617 = vmatpush1.bf16.xpose.msra.mxu0 0
    %3618 = vmatprep.subr.bf16.mxu0 0
    %3619 = vmatpush1.bf16.xpose.msra.mxu0 0
    %3620 = vmatprep.subr.bf16.mxu0 0
    %3621 = vmatpush1.bf16.xpose.msra.mxu0 0
    %3622 = vmatprep.subr.bf16.mxu0 0
    %3623 = vmatpush1.bf16.xpose.msra.mxu0 0
    %3624 = vmatprep.mubr.bf16.mxu0 0
    %3625 = vmatmul.mubr.bf16.gmra.mrb[0].mxu0 %v3587
    %v3626 = vpop.f32.mrb[0].mxu0
    %v3627 = vadd.f32 %v1102, %v3626
    %v3628 = vpop.f32.mrb[0].mxu0
    %v3629 = vpop.f32.mrb[0].mxu0
    %v3630 = vpop.f32.mrb[0].mxu0
    %3631 = vdwg.mxu0
    %v3633 = vsel %vm1139, %v3571, 0
    %v3636 = vsel %vm1139, %v3579, 0
    %3638 = vmatprep.subr.bf16.mxu0 0
    %3639 = vmatpush1.bf16.xpose.msra.mxu0 %v3636
    %3640 = vmatprep.subr.bf16.mxu0 0
    %3641 = vmatpush1.bf16.xpose.msra.mxu0 0
    %3642 = vmatprep.subr.bf16.mxu0 0
    %3643 = vmatpush1.bf16.xpose.msra.mxu0 0
    %3644 = vmatprep.subr.bf16.mxu0 0
    %3645 = vmatpush1.bf16.xpose.msra.mxu0 0
    %3646 = vmatprep.subr.bf16.mxu0 0
    %3647 = vmatpush1.bf16.xpose.msra.mxu0 0
    %3648 = vmatprep.subr.bf16.mxu0 0
    %3649 = vmatpush1.bf16.xpose.msra.mxu0 0
    %3650 = vmatprep.subr.bf16.mxu0 0
    %3651 = vmatpush1.bf16.xpose.msra.mxu0 0
    %3652 = vmatprep.subr.bf16.mxu0 0
    %3653 = vmatpush1.bf16.xpose.msra.mxu0 0
    %3654 = vmatprep.subr.bf16.mxu0 0
    %3655 = vmatpush1.bf16.xpose.msra.mxu0 0
    %3656 = vmatprep.subr.bf16.mxu0 0
    %3657 = vmatpush1.bf16.xpose.msra.mxu0 0
    %3658 = vmatprep.subr.bf16.mxu0 0
    %3659 = vmatpush1.bf16.xpose.msra.mxu0 0
    %3660 = vmatprep.subr.bf16.mxu0 0
    %3661 = vmatpush1.bf16.xpose.msra.mxu0 0
    %3662 = vmatprep.subr.bf16.mxu0 0
    %3663 = vmatpush1.bf16.xpose.msra.mxu0 0
    %3664 = vmatprep.subr.bf16.mxu0 0
    %3665 = vmatpush1.bf16.xpose.msra.mxu0 0
    %3666 = vmatprep.subr.bf16.mxu0 0
    %3667 = vmatpush1.bf16.xpose.msra.mxu0 0
    %3668 = vmatprep.subr.bf16.mxu0 0
    %3669 = vmatpush1.bf16.xpose.msra.mxu0 0
    %3670 = vmatprep.mubr.bf16.mxu0 0
    %3671 = vmatmul.mubr.bf16.gmra.mrb[0].mxu0 %v3633
    %v3672 = vpop.f32.mrb[0].mxu0
    %v3673 = vadd.f32 %v1106, %v3672
    %v3674 = vpop.f32.mrb[0].mxu0
    %v3675 = vpop.f32.mrb[0].mxu0
    %v3676 = vpop.f32.mrb[0].mxu0
    %3677 = vdwg.mxu0
    %v3679 = vsel %vm1139, %v3572, 0
    %v3682 = vsel %vm1139, %v3580, 0
    %3684 = vmatprep.subr.bf16.mxu0 0
    %3685 = vmatpush1.bf16.xpose.msra.mxu0 %v3682
    %3686 = vmatprep.subr.bf16.mxu0 0
    %3687 = vmatpush1.bf16.xpose.msra.mxu0 0
    %3688 = vmatprep.subr.bf16.mxu0 0
    %3689 = vmatpush1.bf16.xpose.msra.mxu0 0
    %3690 = vmatprep.subr.bf16.mxu0 0
    %3691 = vmatpush1.bf16.xpose.msra.mxu0 0
    %3692 = vmatprep.subr.bf16.mxu0 0
    %3693 = vmatpush1.bf16.xpose.msra.mxu0 0
    %3694 = vmatprep.subr.bf16.mxu0 0
    %3695 = vmatpush1.bf16.xpose.msra.mxu0 0
    %3696 = vmatprep.subr.bf16.mxu0 0
    %3697 = vmatpush1.bf16.xpose.msra.mxu0 0
    %3698 = vmatprep.subr.bf16.mxu0 0
    %3699 = vmatpush1.bf16.xpose.msra.mxu0 0
    %3700 = vmatprep.subr.bf16.mxu0 0
    %3701 = vmatpush1.bf16.xpose.msra.mxu0 0
    %3702 = vmatprep.subr.bf16.mxu0 0
    %3703 = vmatpush1.bf16.xpose.msra.mxu0 0
    %3704 = vmatprep.subr.bf16.mxu0 0
    %3705 = vmatpush1.bf16.xpose.msra.mxu0 0
    %3706 = vmatprep.subr.bf16.mxu0 0
    %3707 = vmatpush1.bf16.xpose.msra.mxu0 0
    %3708 = vmatprep.subr.bf16.mxu0 0
    %3709 = vmatpush1.bf16.xpose.msra.mxu0 0
    %3710 = vmatprep.subr.bf16.mxu0 0
    %3711 = vmatpush1.bf16.xpose.msra.mxu0 0
    %3712 = vmatprep.subr.bf16.mxu0 0
    %3713 = vmatpush1.bf16.xpose.msra.mxu0 0
    %3714 = vmatprep.subr.bf16.mxu0 0
    %3715 = vmatpush1.bf16.xpose.msra.mxu0 0
    %3716 = vmatprep.mubr.bf16.mxu0 0
    %3717 = vmatmul.mubr.bf16.gmra.mrb[0].mxu0 %v3679
    %v3718 = vpop.f32.mrb[0].mxu0
    %v3719 = vadd.f32 %v1110, %v3718
    %v3720 = vpop.f32.mrb[0].mxu0
    %v3721 = vpop.f32.mrb[0].mxu0
    %v3722 = vpop.f32.mrb[0].mxu0
    %3723 = vdwg.mxu0
    %v3725 = vsel %vm1139, %v3573, 0
    %v3728 = vsel %vm1139, %v3581, 0
    %3730 = vmatprep.subr.bf16.mxu0 0
    %3731 = vmatpush1.bf16.xpose.msra.mxu0 %v3728
    %3732 = vmatprep.subr.bf16.mxu0 0
    %3733 = vmatpush1.bf16.xpose.msra.mxu0 0
    %3734 = vmatprep.subr.bf16.mxu0 0
    %3735 = vmatpush1.bf16.xpose.msra.mxu0 0
    %3736 = vmatprep.subr.bf16.mxu0 0
    %3737 = vmatpush1.bf16.xpose.msra.mxu0 0
    %3738 = vmatprep.subr.bf16.mxu0 0
    %3739 = vmatpush1.bf16.xpose.msra.mxu0 0
    %3740 = vmatprep.subr.bf16.mxu0 0
    %3741 = vmatpush1.bf16.xpose.msra.mxu0 0
    %3742 = vmatprep.subr.bf16.mxu0 0
    %3743 = vmatpush1.bf16.xpose.msra.mxu0 0
    %3744 = vmatprep.subr.bf16.mxu0 0
    %3745 = vmatpush1.bf16.xpose.msra.mxu0 0
    %3746 = vmatprep.subr.bf16.mxu0 0
    %3747 = vmatpush1.bf16.xpose.msra.mxu0 0
    %3748 = vmatprep.subr.bf16.mxu0 0
    %3749 = vmatpush1.bf16.xpose.msra.mxu0 0
    %3750 = vmatprep.subr.bf16.mxu0 0
    %3751 = vmatpush1.bf16.xpose.msra.mxu0 0
    %3752 = vmatprep.subr.bf16.mxu0 0
    %3753 = vmatpush1.bf16.xpose.msra.mxu0 0
    %3754 = vmatprep.subr.bf16.mxu0 0
    %3755 = vmatpush1.bf16.xpose.msra.mxu0 0
    %3756 = vmatprep.subr.bf16.mxu0 0
    %3757 = vmatpush1.bf16.xpose.msra.mxu0 0
    %3758 = vmatprep.subr.bf16.mxu0 0
    %3759 = vmatpush1.bf16.xpose.msra.mxu0 0
    %3760 = vmatprep.subr.bf16.mxu0 0
    %3761 = vmatpush1.bf16.xpose.msra.mxu0 0
    %3762 = vmatprep.mubr.bf16.mxu0 0
    %3763 = vmatmul.mubr.bf16.gmra.mrb[0].mxu0 %v3725
    %v3764 = vpop.f32.mrb[0].mxu0
    %v3765 = vadd.f32 %v1114, %v3764
    %v3766 = vpop.f32.mrb[0].mxu0
    %v3767 = vpop.f32.mrb[0].mxu0
    %v3768 = vpop.f32.mrb[0].mxu0
    %3769 = vdwg.mxu0
    %v3771 = vsel %vm1139, %v3574, 0
    %v3774 = vsel %vm1139, %v3582, 0
    %3776 = vmatprep.subr.bf16.mxu0 0
    %3777 = vmatpush1.bf16.xpose.msra.mxu0 %v3774
    %3778 = vmatprep.subr.bf16.mxu0 0
    %3779 = vmatpush1.bf16.xpose.msra.mxu0 0
    %3780 = vmatprep.subr.bf16.mxu0 0
    %3781 = vmatpush1.bf16.xpose.msra.mxu0 0
    %3782 = vmatprep.subr.bf16.mxu0 0
    %3783 = vmatpush1.bf16.xpose.msra.mxu0 0
    %3784 = vmatprep.subr.bf16.mxu0 0
    %3785 = vmatpush1.bf16.xpose.msra.mxu0 0
    %3786 = vmatprep.subr.bf16.mxu0 0
    %3787 = vmatpush1.bf16.xpose.msra.mxu0 0
    %3788 = vmatprep.subr.bf16.mxu0 0
    %3789 = vmatpush1.bf16.xpose.msra.mxu0 0
    %3790 = vmatprep.subr.bf16.mxu0 0
    %3791 = vmatpush1.bf16.xpose.msra.mxu0 0
    %3792 = vmatprep.subr.bf16.mxu0 0
    %3793 = vmatpush1.bf16.xpose.msra.mxu0 0
    %3794 = vmatprep.subr.bf16.mxu0 0
    %3795 = vmatpush1.bf16.xpose.msra.mxu0 0
    %3796 = vmatprep.subr.bf16.mxu0 0
    %3797 = vmatpush1.bf16.xpose.msra.mxu0 0
    %3798 = vmatprep.subr.bf16.mxu0 0
    %3799 = vmatpush1.bf16.xpose.msra.mxu0 0
    %3800 = vmatprep.subr.bf16.mxu0 0
    %3801 = vmatpush1.bf16.xpose.msra.mxu0 0
    %3802 = vmatprep.subr.bf16.mxu0 0
    %3803 = vmatpush1.bf16.xpose.msra.mxu0 0
    %3804 = vmatprep.subr.bf16.mxu0 0
    %3805 = vmatpush1.bf16.xpose.msra.mxu0 0
    %3806 = vmatprep.subr.bf16.mxu0 0
    %3807 = vmatpush1.bf16.xpose.msra.mxu0 0
    %3808 = vmatprep.mubr.bf16.mxu0 0
    %3809 = vmatmul.mubr.bf16.gmra.mrb[0].mxu0 %v3771
    %v3810 = vpop.f32.mrb[0].mxu0
    %v3811 = vadd.f32 %v1118, %v3810
    %v3812 = vpop.f32.mrb[0].mxu0
    %v3813 = vpop.f32.mrb[0].mxu0
    %v3814 = vpop.f32.mrb[0].mxu0
    %3815 = vdwg.mxu0
    %v3817 = vsel %vm1139, %v3575, 0
    %v3820 = vsel %vm1139, %v3583, 0
    %3822 = vmatprep.subr.bf16.mxu0 0
    %3823 = vmatpush1.bf16.xpose.msra.mxu0 %v3820
    %3824 = vmatprep.subr.bf16.mxu0 0
    %3825 = vmatpush1.bf16.xpose.msra.mxu0 0
    %3826 = vmatprep.subr.bf16.mxu0 0
    %3827 = vmatpush1.bf16.xpose.msra.mxu0 0
    %3828 = vmatprep.subr.bf16.mxu0 0
    %3829 = vmatpush1.bf16.xpose.msra.mxu0 0
    %3830 = vmatprep.subr.bf16.mxu0 0
    %3831 = vmatpush1.bf16.xpose.msra.mxu0 0
    %3832 = vmatprep.subr.bf16.mxu0 0
    %3833 = vmatpush1.bf16.xpose.msra.mxu0 0
    %3834 = vmatprep.subr.bf16.mxu0 0
    %3835 = vmatpush1.bf16.xpose.msra.mxu0 0
    %3836 = vmatprep.subr.bf16.mxu0 0
    %3837 = vmatpush1.bf16.xpose.msra.mxu0 0
    %3838 = vmatprep.subr.bf16.mxu0 0
    %3839 = vmatpush1.bf16.xpose.msra.mxu0 0
    %3840 = vmatprep.subr.bf16.mxu0 0
    %3841 = vmatpush1.bf16.xpose.msra.mxu0 0
    %3842 = vmatprep.subr.bf16.mxu0 0
    %3843 = vmatpush1.bf16.xpose.msra.mxu0 0
    %3844 = vmatprep.subr.bf16.mxu0 0
    %3845 = vmatpush1.bf16.xpose.msra.mxu0 0
    %3846 = vmatprep.subr.bf16.mxu0 0
    %3847 = vmatpush1.bf16.xpose.msra.mxu0 0
    %3848 = vmatprep.subr.bf16.mxu0 0
    %3849 = vmatpush1.bf16.xpose.msra.mxu0 0
    %3850 = vmatprep.subr.bf16.mxu0 0
    %3851 = vmatpush1.bf16.xpose.msra.mxu0 0
    %3852 = vmatprep.subr.bf16.mxu0 0
    %3853 = vmatpush1.bf16.xpose.msra.mxu0 0
    %3854 = vmatprep.mubr.bf16.mxu0 0
    %3855 = vmatmul.mubr.bf16.gmra.mrb[0].mxu0 %v3817
    %v3856 = vpop.f32.mrb[0].mxu0
    %v3857 = vadd.f32 %v1122, %v3856
    %v3858 = vpop.f32.mrb[0].mxu0
    %v3859 = vpop.f32.mrb[0].mxu0
    %v3860 = vpop.f32.mrb[0].mxu0
    %3861 = vdwg.mxu0
    %v3863 = vsel %vm1139, %v3576, 0
    %v3866 = vsel %vm1139, %v3584, 0
    %3868 = vmatprep.subr.bf16.mxu0 0
    %3869 = vmatpush1.bf16.xpose.msra.mxu0 %v3866
    %3870 = vmatprep.subr.bf16.mxu0 0
    %3871 = vmatpush1.bf16.xpose.msra.mxu0 0
    %3872 = vmatprep.subr.bf16.mxu0 0
    %3873 = vmatpush1.bf16.xpose.msra.mxu0 0
    %3874 = vmatprep.subr.bf16.mxu0 0
    %3875 = vmatpush1.bf16.xpose.msra.mxu0 0
    %3876 = vmatprep.subr.bf16.mxu0 0
    %3877 = vmatpush1.bf16.xpose.msra.mxu0 0
    %3878 = vmatprep.subr.bf16.mxu0 0
    %3879 = vmatpush1.bf16.xpose.msra.mxu0 0
    %3880 = vmatprep.subr.bf16.mxu0 0
    %3881 = vmatpush1.bf16.xpose.msra.mxu0 0
    %3882 = vmatprep.subr.bf16.mxu0 0
    %3883 = vmatpush1.bf16.xpose.msra.mxu0 0
    %3884 = vmatprep.subr.bf16.mxu0 0
    %3885 = vmatpush1.bf16.xpose.msra.mxu0 0
    %3886 = vmatprep.subr.bf16.mxu0 0
    %3887 = vmatpush1.bf16.xpose.msra.mxu0 0
    %3888 = vmatprep.subr.bf16.mxu0 0
    %3889 = vmatpush1.bf16.xpose.msra.mxu0 0
    %3890 = vmatprep.subr.bf16.mxu0 0
    %3891 = vmatpush1.bf16.xpose.msra.mxu0 0
    %3892 = vmatprep.subr.bf16.mxu0 0
    %3893 = vmatpush1.bf16.xpose.msra.mxu0 0
    %3894 = vmatprep.subr.bf16.mxu0 0
    %3895 = vmatpush1.bf16.xpose.msra.mxu0 0
    %3896 = vmatprep.subr.bf16.mxu0 0
    %3897 = vmatpush1.bf16.xpose.msra.mxu0 0
    %3898 = vmatprep.subr.bf16.mxu0 0
    %3899 = vmatpush1.bf16.xpose.msra.mxu0 0
    %3900 = vmatprep.mubr.bf16.mxu0 0
    %3901 = vmatmul.mubr.bf16.gmra.mrb[0].mxu0 %v3863
    %v3902 = vpop.f32.mrb[0].mxu0
    %v3903 = vadd.f32 %v1126, %v3902
    %v3904 = vpop.f32.mrb[0].mxu0
    %v3905 = vpop.f32.mrb[0].mxu0
    %v3906 = vpop.f32.mrb[0].mxu0
    %3907 = vdwg.mxu0
    %v3909 = vsel %vm1139, %v3577, 0
    %v3912 = vsel %vm1139, %v3585, 0
    %3914 = vmatprep.subr.bf16.mxu0 0
    %3915 = vmatpush1.bf16.xpose.msra.mxu0 %v3912
    %3916 = vmatprep.subr.bf16.mxu0 0
    %3917 = vmatpush1.bf16.xpose.msra.mxu0 0
    %3918 = vmatprep.subr.bf16.mxu0 0
    %3919 = vmatpush1.bf16.xpose.msra.mxu0 0
    %3920 = vmatprep.subr.bf16.mxu0 0
    %3921 = vmatpush1.bf16.xpose.msra.mxu0 0
    %3922 = vmatprep.subr.bf16.mxu0 0
    %3923 = vmatpush1.bf16.xpose.msra.mxu0 0
    %3924 = vmatprep.subr.bf16.mxu0 0
    %3925 = vmatpush1.bf16.xpose.msra.mxu0 0
    %3926 = vmatprep.subr.bf16.mxu0 0
    %3927 = vmatpush1.bf16.xpose.msra.mxu0 0
    %3928 = vmatprep.subr.bf16.mxu0 0
    %3929 = vmatpush1.bf16.xpose.msra.mxu0 0
    %3930 = vmatprep.subr.bf16.mxu0 0
    %3931 = vmatpush1.bf16.xpose.msra.mxu0 0
    %3932 = vmatprep.subr.bf16.mxu0 0
    %3933 = vmatpush1.bf16.xpose.msra.mxu0 0
    %3934 = vmatprep.subr.bf16.mxu0 0
    %3935 = vmatpush1.bf16.xpose.msra.mxu0 0
    %3936 = vmatprep.subr.bf16.mxu0 0
    %3937 = vmatpush1.bf16.xpose.msra.mxu0 0
    %3938 = vmatprep.subr.bf16.mxu0 0
    %3939 = vmatpush1.bf16.xpose.msra.mxu0 0
    %3940 = vmatprep.subr.bf16.mxu0 0
    %3941 = vmatpush1.bf16.xpose.msra.mxu0 0
    %3942 = vmatprep.subr.bf16.mxu0 0
    %3943 = vmatpush1.bf16.xpose.msra.mxu0 0
    %3944 = vmatprep.subr.bf16.mxu0 0
    %3945 = vmatpush1.bf16.xpose.msra.mxu0 0
    %3946 = vmatprep.mubr.bf16.mxu0 0
    %3947 = vmatmul.mubr.bf16.gmra.mrb[0].mxu0 %v3909
    %v3948 = vpop.f32.mrb[0].mxu0
    %v3949 = vadd.f32 %v1130, %v3948
    %v3950 = vpop.f32.mrb[0].mxu0
    %v3951 = vpop.f32.mrb[0].mxu0
    %v3952 = vpop.f32.mrb[0].mxu0
    %3953 = vdwg.mxu0
    %v3954 = vsel %vm1139, %v3627, -inf
    %3955 = vmax.xlane.f32.xlu0 %v3954
    %v3956 = vpop.xlane.xlu0 %3955
    %v3957 = vsel %vm1139, %v3673, -inf
    %3958 = vmax.xlane.f32.xlu0 %v3957
    %v3959 = vpop.xlane.xlu0 %3958
    %v3960 = vsel %vm1139, %v3719, -inf
    %3961 = vmax.xlane.f32.xlu0 %v3960
    %v3962 = vpop.xlane.xlu0 %3961
    %v3963 = vsel %vm1139, %v3765, -inf
    %3964 = vmax.xlane.f32.xlu0 %v3963
    %v3965 = vpop.xlane.xlu0 %3964
    %v3966 = vsel %vm1139, %v3811, -inf
    %3967 = vmax.xlane.f32.xlu0 %v3966
    %v3968 = vpop.xlane.xlu0 %3967
    %v3969 = vsel %vm1139, %v3857, -inf
    %3970 = vmax.xlane.f32.xlu0 %v3969
    %v3971 = vpop.xlane.xlu0 %3970
    %v3972 = vsel %vm1139, %v3903, -inf
    %3973 = vmax.xlane.f32.xlu0 %v3972
    %v3974 = vpop.xlane.xlu0 %3973
    %v3975 = vsel %vm1139, %v3949, -inf
    %3976 = vmax.xlane.f32.xlu0 %v3975
    %v3977 = vpop.xlane.xlu0 %3976
    %v3978 = vsub.f32 %v3627, %v3956
    %v3979 = vsub.f32 %v3673, %v3959
    %v3980 = vsub.f32 %v3719, %v3962
    %v3981 = vsub.f32 %v3765, %v3965
    %v3982 = vsub.f32 %v3811, %v3968
    %v3983 = vsub.f32 %v3857, %v3971
    %v3984 = vsub.f32 %v3903, %v3974
    %v3985 = vsub.f32 %v3949, %v3977
    %v3986 = vmul.f32 %v3978, 1.442695
    %v3987 = vpow.pop %v3986
    %v3988 = vmul.f32 %v3979, 1.442695
    %v3989 = vpow.pop %v3988
    %v3990 = vmul.f32 %v3980, 1.442695
    %v3991 = vpow.pop %v3990
    %v3992 = vmul.f32 %v3981, 1.442695
    %v3993 = vpow.pop %v3992
    %v3994 = vmul.f32 %v3982, 1.442695
    %v3995 = vpow.pop %v3994
    %v3996 = vmul.f32 %v3983, 1.442695
    %v3997 = vpow.pop %v3996
    %v3998 = vmul.f32 %v3984, 1.442695
    %v3999 = vpow.pop %v3998
    %v4000 = vmul.f32 %v3985, 1.442695
    %v4001 = vpow.pop %v4000
    %v4002 = vsel %vm1139, %v3987, 0.0
    %4003 = vadd.xlane.f32.xlu0 %v4002
    %v4004 = vpop.xlane.xlu0 %4003
    %v4005 = vsel %vm1139, %v3989, 0.0
    %4006 = vadd.xlane.f32.xlu0 %v4005
    %v4007 = vpop.xlane.xlu0 %4006
    %v4008 = vsel %vm1139, %v3991, 0.0
    %4009 = vadd.xlane.f32.xlu0 %v4008
    %v4010 = vpop.xlane.xlu0 %4009
    %v4011 = vsel %vm1139, %v3993, 0.0
    %4012 = vadd.xlane.f32.xlu0 %v4011
    %v4013 = vpop.xlane.xlu0 %4012
    %v4014 = vsel %vm1139, %v3995, 0.0
    %4015 = vadd.xlane.f32.xlu0 %v4014
    %v4016 = vpop.xlane.xlu0 %4015
    %v4017 = vsel %vm1139, %v3997, 0.0
    %4018 = vadd.xlane.f32.xlu0 %v4017
    %v4019 = vpop.xlane.xlu0 %4018
    %v4020 = vsel %vm1139, %v3999, 0.0
    %4021 = vadd.xlane.f32.xlu0 %v4020
    %v4022 = vpop.xlane.xlu0 %4021
    %v4023 = vsel %vm1139, %v4001, 0.0
    %4024 = vadd.xlane.f32.xlu0 %v4023
    %v4025 = vpop.xlane.xlu0 %4024
    %v4026 = vrcp.pop %v4004
    %v4027 = vrcp.pop %v4007
    %v4028 = vrcp.pop %v4010
    %v4029 = vrcp.pop %v4013
    %v4030 = vrcp.pop %v4016
    %v4031 = vrcp.pop %v4019
    %v4032 = vrcp.pop %v4022
    %v4033 = vrcp.pop %v4025
    %v4034 = vmul.f32 %v3987, %v4026
    %v4035 = vmul.f32 %v3989, %v4027
    %v4036 = vmul.f32 %v3991, %v4028
    %v4037 = vmul.f32 %v3993, %v4029
    %v4038 = vmul.f32 %v3995, %v4030
    %v4039 = vmul.f32 %v3997, %v4031
    %v4040 = vmul.f32 %v3999, %v4032
    %v4041 = vmul.f32 %v4001, %v4033
    %v4042 = vpack.c.bf16 %v4034, %v4034
    %v4043 = vpack.c.bf16 %v4035, %v4035
    %v4044 = vpack.c.bf16 %v4036, %v4036
    %v4045 = vpack.c.bf16 %v4037, %v4037
    %v4046 = vpack.c.bf16 %v4038, %v4038
    %v4047 = vpack.c.bf16 %v4039, %v4039
    %v4048 = vpack.c.bf16 %v4040, %v4040
    %v4049 = vpack.c.bf16 %v4041, %v4041
    %v4050 = vpack.c.bf16 %v3498, %v3498
    %v4051 = vpack.c.bf16 %v3566, %v3566
    %v4052 = vpack.c.bf16 %v3499, %v3499
    %v4053 = vpack.c.bf16 %v3567, %v3567
    %v4054 = vpack.c.bf16 %v3500, %v3500
    %v4055 = vpack.c.bf16 %v3568, %v3568
    %v4056 = vpack.c.bf16 %v3501, %v3501
    %v4057 = vpack.c.bf16 %v3569, %v3569
    %v4059 = vsel %vm1139, %v4042, 0
    %v4062 = vsel %vm1615, %v4050, 0
    %4064 = vmatprep.subr.bf16.mxu0 0
    %4065 = vmatpush1.bf16.msra.mxu0 %v4062
    %4066 = vmatprep.subr.bf16.mxu0 0
    %4067 = vmatpush1.bf16.msra.mxu0 0
    %4068 = vmatprep.subr.bf16.mxu0 0
    %4069 = vmatpush1.bf16.msra.mxu0 0
    %4070 = vmatprep.subr.bf16.mxu0 0
    %4071 = vmatpush1.bf16.msra.mxu0 0
    %4072 = vmatprep.subr.bf16.mxu0 0
    %4073 = vmatpush1.bf16.msra.mxu0 0
    %4074 = vmatprep.subr.bf16.mxu0 0
    %4075 = vmatpush1.bf16.msra.mxu0 0
    %4076 = vmatprep.subr.bf16.mxu0 0
    %4077 = vmatpush1.bf16.msra.mxu0 0
    %4078 = vmatprep.subr.bf16.mxu0 0
    %4079 = vmatpush1.bf16.msra.mxu0 0
    %4080 = vmatprep.subr.bf16.mxu0 0
    %4081 = vmatpush1.bf16.msra.mxu0 0
    %4082 = vmatprep.subr.bf16.mxu0 0
    %4083 = vmatpush1.bf16.msra.mxu0 0
    %4084 = vmatprep.subr.bf16.mxu0 0
    %4085 = vmatpush1.bf16.msra.mxu0 0
    %4086 = vmatprep.subr.bf16.mxu0 0
    %4087 = vmatpush1.bf16.msra.mxu0 0
    %4088 = vmatprep.subr.bf16.mxu0 0
    %4089 = vmatpush1.bf16.msra.mxu0 0
    %4090 = vmatprep.subr.bf16.mxu0 0
    %4091 = vmatpush1.bf16.msra.mxu0 0
    %4092 = vmatprep.subr.bf16.mxu0 0
    %4093 = vmatpush1.bf16.msra.mxu0 0
    %4094 = vmatprep.subr.bf16.mxu0 0
    %4095 = vmatpush1.bf16.msra.mxu0 0
    %4096 = vmatprep.mubr.bf16.mxu0 0
    %4097 = vmatmul.mubr.bf16.gmra.mrb[0].mxu0 %v4059
    %v4098 = vpop.f32.mrb[0].mxu0
    %v4099 = vadd.f32 0.0, %v4098
    %v4100 = vpop.f32.mrb[0].mxu0
    %v4101 = vpop.f32.mrb[0].mxu0
    %v4102 = vpop.f32.mrb[0].mxu0
    %4103 = vdwg.mxu0
    %v4105 = vsel %vm1139, %v4043, 0
    %v4108 = vsel %vm1615, %v4051, 0
    %4110 = vmatprep.subr.bf16.mxu0 0
    %4111 = vmatpush1.bf16.msra.mxu0 %v4108
    %4112 = vmatprep.subr.bf16.mxu0 0
    %4113 = vmatpush1.bf16.msra.mxu0 0
    %4114 = vmatprep.subr.bf16.mxu0 0
    %4115 = vmatpush1.bf16.msra.mxu0 0
    %4116 = vmatprep.subr.bf16.mxu0 0
    %4117 = vmatpush1.bf16.msra.mxu0 0
    %4118 = vmatprep.subr.bf16.mxu0 0
    %4119 = vmatpush1.bf16.msra.mxu0 0
    %4120 = vmatprep.subr.bf16.mxu0 0
    %4121 = vmatpush1.bf16.msra.mxu0 0
    %4122 = vmatprep.subr.bf16.mxu0 0
    %4123 = vmatpush1.bf16.msra.mxu0 0
    %4124 = vmatprep.subr.bf16.mxu0 0
    %4125 = vmatpush1.bf16.msra.mxu0 0
    %4126 = vmatprep.subr.bf16.mxu0 0
    %4127 = vmatpush1.bf16.msra.mxu0 0
    %4128 = vmatprep.subr.bf16.mxu0 0
    %4129 = vmatpush1.bf16.msra.mxu0 0
    %4130 = vmatprep.subr.bf16.mxu0 0
    %4131 = vmatpush1.bf16.msra.mxu0 0
    %4132 = vmatprep.subr.bf16.mxu0 0
    %4133 = vmatpush1.bf16.msra.mxu0 0
    %4134 = vmatprep.subr.bf16.mxu0 0
    %4135 = vmatpush1.bf16.msra.mxu0 0
    %4136 = vmatprep.subr.bf16.mxu0 0
    %4137 = vmatpush1.bf16.msra.mxu0 0
    %4138 = vmatprep.subr.bf16.mxu0 0
    %4139 = vmatpush1.bf16.msra.mxu0 0
    %4140 = vmatprep.subr.bf16.mxu0 0
    %4141 = vmatpush1.bf16.msra.mxu0 0
    %4142 = vmatprep.mubr.bf16.mxu0 0
    %4143 = vmatmul.mubr.bf16.gmra.mrb[0].mxu0 %v4105
    %v4144 = vpop.f32.mrb[0].mxu0
    %v4145 = vadd.f32 0.0, %v4144
    %v4146 = vpop.f32.mrb[0].mxu0
    %v4147 = vpop.f32.mrb[0].mxu0
    %v4148 = vpop.f32.mrb[0].mxu0
    %4149 = vdwg.mxu0
    %v4151 = vsel %vm1139, %v4044, 0
    %v4154 = vsel %vm1615, %v4052, 0
    %4156 = vmatprep.subr.bf16.mxu0 0
    %4157 = vmatpush1.bf16.msra.mxu0 %v4154
    %4158 = vmatprep.subr.bf16.mxu0 0
    %4159 = vmatpush1.bf16.msra.mxu0 0
    %4160 = vmatprep.subr.bf16.mxu0 0
    %4161 = vmatpush1.bf16.msra.mxu0 0
    %4162 = vmatprep.subr.bf16.mxu0 0
    %4163 = vmatpush1.bf16.msra.mxu0 0
    %4164 = vmatprep.subr.bf16.mxu0 0
    %4165 = vmatpush1.bf16.msra.mxu0 0
    %4166 = vmatprep.subr.bf16.mxu0 0
    %4167 = vmatpush1.bf16.msra.mxu0 0
    %4168 = vmatprep.subr.bf16.mxu0 0
    %4169 = vmatpush1.bf16.msra.mxu0 0
    %4170 = vmatprep.subr.bf16.mxu0 0
    %4171 = vmatpush1.bf16.msra.mxu0 0
    %4172 = vmatprep.subr.bf16.mxu0 0
    %4173 = vmatpush1.bf16.msra.mxu0 0
    %4174 = vmatprep.subr.bf16.mxu0 0
    %4175 = vmatpush1.bf16.msra.mxu0 0
    %4176 = vmatprep.subr.bf16.mxu0 0
    %4177 = vmatpush1.bf16.msra.mxu0 0
    %4178 = vmatprep.subr.bf16.mxu0 0
    %4179 = vmatpush1.bf16.msra.mxu0 0
    %4180 = vmatprep.subr.bf16.mxu0 0
    %4181 = vmatpush1.bf16.msra.mxu0 0
    %4182 = vmatprep.subr.bf16.mxu0 0
    %4183 = vmatpush1.bf16.msra.mxu0 0
    %4184 = vmatprep.subr.bf16.mxu0 0
    %4185 = vmatpush1.bf16.msra.mxu0 0
    %4186 = vmatprep.subr.bf16.mxu0 0
    %4187 = vmatpush1.bf16.msra.mxu0 0
    %4188 = vmatprep.mubr.bf16.mxu0 0
    %4189 = vmatmul.mubr.bf16.gmra.mrb[0].mxu0 %v4151
    %v4190 = vpop.f32.mrb[0].mxu0
    %v4191 = vadd.f32 0.0, %v4190
    %v4192 = vpop.f32.mrb[0].mxu0
    %v4193 = vpop.f32.mrb[0].mxu0
    %v4194 = vpop.f32.mrb[0].mxu0
    %4195 = vdwg.mxu0
    %v4197 = vsel %vm1139, %v4045, 0
    %v4200 = vsel %vm1615, %v4053, 0
    %4202 = vmatprep.subr.bf16.mxu0 0
    %4203 = vmatpush1.bf16.msra.mxu0 %v4200
    %4204 = vmatprep.subr.bf16.mxu0 0
    %4205 = vmatpush1.bf16.msra.mxu0 0
    %4206 = vmatprep.subr.bf16.mxu0 0
    %4207 = vmatpush1.bf16.msra.mxu0 0
    %4208 = vmatprep.subr.bf16.mxu0 0
    %4209 = vmatpush1.bf16.msra.mxu0 0
    %4210 = vmatprep.subr.bf16.mxu0 0
    %4211 = vmatpush1.bf16.msra.mxu0 0
    %4212 = vmatprep.subr.bf16.mxu0 0
    %4213 = vmatpush1.bf16.msra.mxu0 0
    %4214 = vmatprep.subr.bf16.mxu0 0
    %4215 = vmatpush1.bf16.msra.mxu0 0
    %4216 = vmatprep.subr.bf16.mxu0 0
    %4217 = vmatpush1.bf16.msra.mxu0 0
    %4218 = vmatprep.subr.bf16.mxu0 0
    %4219 = vmatpush1.bf16.msra.mxu0 0
    %4220 = vmatprep.subr.bf16.mxu0 0
    %4221 = vmatpush1.bf16.msra.mxu0 0
    %4222 = vmatprep.subr.bf16.mxu0 0
    %4223 = vmatpush1.bf16.msra.mxu0 0
    %4224 = vmatprep.subr.bf16.mxu0 0
    %4225 = vmatpush1.bf16.msra.mxu0 0
    %4226 = vmatprep.subr.bf16.mxu0 0
    %4227 = vmatpush1.bf16.msra.mxu0 0
    %4228 = vmatprep.subr.bf16.mxu0 0
    %4229 = vmatpush1.bf16.msra.mxu0 0
    %4230 = vmatprep.subr.bf16.mxu0 0
    %4231 = vmatpush1.bf16.msra.mxu0 0
    %4232 = vmatprep.subr.bf16.mxu0 0
    %4233 = vmatpush1.bf16.msra.mxu0 0
    %4234 = vmatprep.mubr.bf16.mxu0 0
    %4235 = vmatmul.mubr.bf16.gmra.mrb[0].mxu0 %v4197
    %v4236 = vpop.f32.mrb[0].mxu0
    %v4237 = vadd.f32 0.0, %v4236
    %v4238 = vpop.f32.mrb[0].mxu0
    %v4239 = vpop.f32.mrb[0].mxu0
    %v4240 = vpop.f32.mrb[0].mxu0
    %4241 = vdwg.mxu0
    %v4243 = vsel %vm1139, %v4046, 0
    %v4246 = vsel %vm1615, %v4054, 0
    %4248 = vmatprep.subr.bf16.mxu0 0
    %4249 = vmatpush1.bf16.msra.mxu0 %v4246
    %4250 = vmatprep.subr.bf16.mxu0 0
    %4251 = vmatpush1.bf16.msra.mxu0 0
    %4252 = vmatprep.subr.bf16.mxu0 0
    %4253 = vmatpush1.bf16.msra.mxu0 0
    %4254 = vmatprep.subr.bf16.mxu0 0
    %4255 = vmatpush1.bf16.msra.mxu0 0
    %4256 = vmatprep.subr.bf16.mxu0 0
    %4257 = vmatpush1.bf16.msra.mxu0 0
    %4258 = vmatprep.subr.bf16.mxu0 0
    %4259 = vmatpush1.bf16.msra.mxu0 0
    %4260 = vmatprep.subr.bf16.mxu0 0
    %4261 = vmatpush1.bf16.msra.mxu0 0
    %4262 = vmatprep.subr.bf16.mxu0 0
    %4263 = vmatpush1.bf16.msra.mxu0 0
    %4264 = vmatprep.subr.bf16.mxu0 0
    %4265 = vmatpush1.bf16.msra.mxu0 0
    %4266 = vmatprep.subr.bf16.mxu0 0
    %4267 = vmatpush1.bf16.msra.mxu0 0
    %4268 = vmatprep.subr.bf16.mxu0 0
    %4269 = vmatpush1.bf16.msra.mxu0 0
    %4270 = vmatprep.subr.bf16.mxu0 0
    %4271 = vmatpush1.bf16.msra.mxu0 0
    %4272 = vmatprep.subr.bf16.mxu0 0
    %4273 = vmatpush1.bf16.msra.mxu0 0
    %4274 = vmatprep.subr.bf16.mxu0 0
    %4275 = vmatpush1.bf16.msra.mxu0 0
    %4276 = vmatprep.subr.bf16.mxu0 0
    %4277 = vmatpush1.bf16.msra.mxu0 0
    %4278 = vmatprep.subr.bf16.mxu0 0
    %4279 = vmatpush1.bf16.msra.mxu0 0
    %4280 = vmatprep.mubr.bf16.mxu0 0
    %4281 = vmatmul.mubr.bf16.gmra.mrb[0].mxu0 %v4243
    %v4282 = vpop.f32.mrb[0].mxu0
    %v4283 = vadd.f32 0.0, %v4282
    %v4284 = vpop.f32.mrb[0].mxu0
    %v4285 = vpop.f32.mrb[0].mxu0
    %v4286 = vpop.f32.mrb[0].mxu0
    %4287 = vdwg.mxu0
    %v4289 = vsel %vm1139, %v4047, 0
    %v4292 = vsel %vm1615, %v4055, 0
    %4294 = vmatprep.subr.bf16.mxu0 0
    %4295 = vmatpush1.bf16.msra.mxu0 %v4292
    %4296 = vmatprep.subr.bf16.mxu0 0
    %4297 = vmatpush1.bf16.msra.mxu0 0
    %4298 = vmatprep.subr.bf16.mxu0 0
    %4299 = vmatpush1.bf16.msra.mxu0 0
    %4300 = vmatprep.subr.bf16.mxu0 0
    %4301 = vmatpush1.bf16.msra.mxu0 0
    %4302 = vmatprep.subr.bf16.mxu0 0
    %4303 = vmatpush1.bf16.msra.mxu0 0
    %4304 = vmatprep.subr.bf16.mxu0 0
    %4305 = vmatpush1.bf16.msra.mxu0 0
    %4306 = vmatprep.subr.bf16.mxu0 0
    %4307 = vmatpush1.bf16.msra.mxu0 0
    %4308 = vmatprep.subr.bf16.mxu0 0
    %4309 = vmatpush1.bf16.msra.mxu0 0
    %4310 = vmatprep.subr.bf16.mxu0 0
    %4311 = vmatpush1.bf16.msra.mxu0 0
    %4312 = vmatprep.subr.bf16.mxu0 0
    %4313 = vmatpush1.bf16.msra.mxu0 0
    %4314 = vmatprep.subr.bf16.mxu0 0
    %4315 = vmatpush1.bf16.msra.mxu0 0
    %4316 = vmatprep.subr.bf16.mxu0 0
    %4317 = vmatpush1.bf16.msra.mxu0 0
    %4318 = vmatprep.subr.bf16.mxu0 0
    %4319 = vmatpush1.bf16.msra.mxu0 0
    %4320 = vmatprep.subr.bf16.mxu0 0
    %4321 = vmatpush1.bf16.msra.mxu0 0
    %4322 = vmatprep.subr.bf16.mxu0 0
    %4323 = vmatpush1.bf16.msra.mxu0 0
    %4324 = vmatprep.subr.bf16.mxu0 0
    %4325 = vmatpush1.bf16.msra.mxu0 0
    %4326 = vmatprep.mubr.bf16.mxu0 0
    %4327 = vmatmul.mubr.bf16.gmra.mrb[0].mxu0 %v4289
    %v4328 = vpop.f32.mrb[0].mxu0
    %v4329 = vadd.f32 0.0, %v4328
    %v4330 = vpop.f32.mrb[0].mxu0
    %v4331 = vpop.f32.mrb[0].mxu0
    %v4332 = vpop.f32.mrb[0].mxu0
    %4333 = vdwg.mxu0
    %v4335 = vsel %vm1139, %v4048, 0
    %v4338 = vsel %vm1615, %v4056, 0
    %4340 = vmatprep.subr.bf16.mxu0 0
    %4341 = vmatpush1.bf16.msra.mxu0 %v4338
    %4342 = vmatprep.subr.bf16.mxu0 0
    %4343 = vmatpush1.bf16.msra.mxu0 0
    %4344 = vmatprep.subr.bf16.mxu0 0
    %4345 = vmatpush1.bf16.msra.mxu0 0
    %4346 = vmatprep.subr.bf16.mxu0 0
    %4347 = vmatpush1.bf16.msra.mxu0 0
    %4348 = vmatprep.subr.bf16.mxu0 0
    %4349 = vmatpush1.bf16.msra.mxu0 0
    %4350 = vmatprep.subr.bf16.mxu0 0
    %4351 = vmatpush1.bf16.msra.mxu0 0
    %4352 = vmatprep.subr.bf16.mxu0 0
    %4353 = vmatpush1.bf16.msra.mxu0 0
    %4354 = vmatprep.subr.bf16.mxu0 0
    %4355 = vmatpush1.bf16.msra.mxu0 0
    %4356 = vmatprep.subr.bf16.mxu0 0
    %4357 = vmatpush1.bf16.msra.mxu0 0
    %4358 = vmatprep.subr.bf16.mxu0 0
    %4359 = vmatpush1.bf16.msra.mxu0 0
    %4360 = vmatprep.subr.bf16.mxu0 0
    %4361 = vmatpush1.bf16.msra.mxu0 0
    %4362 = vmatprep.subr.bf16.mxu0 0
    %4363 = vmatpush1.bf16.msra.mxu0 0
    %4364 = vmatprep.subr.bf16.mxu0 0
    %4365 = vmatpush1.bf16.msra.mxu0 0
    %4366 = vmatprep.subr.bf16.mxu0 0
    %4367 = vmatpush1.bf16.msra.mxu0 0
    %4368 = vmatprep.subr.bf16.mxu0 0
    %4369 = vmatpush1.bf16.msra.mxu0 0
    %4370 = vmatprep.subr.bf16.mxu0 0
    %4371 = vmatpush1.bf16.msra.mxu0 0
    %4372 = vmatprep.mubr.bf16.mxu0 0
    %4373 = vmatmul.mubr.bf16.gmra.mrb[0].mxu0 %v4335
    %v4374 = vpop.f32.mrb[0].mxu0
    %v4375 = vadd.f32 0.0, %v4374
    %v4376 = vpop.f32.mrb[0].mxu0
    %v4377 = vpop.f32.mrb[0].mxu0
    %v4378 = vpop.f32.mrb[0].mxu0
    %4379 = vdwg.mxu0
    %v4381 = vsel %vm1139, %v4049, 0
    %v4384 = vsel %vm1615, %v4057, 0
    %4386 = vmatprep.subr.bf16.mxu0 0
    %4387 = vmatpush1.bf16.msra.mxu0 %v4384
    %4388 = vmatprep.subr.bf16.mxu0 0
    %4389 = vmatpush1.bf16.msra.mxu0 0
    %4390 = vmatprep.subr.bf16.mxu0 0
    %4391 = vmatpush1.bf16.msra.mxu0 0
    %4392 = vmatprep.subr.bf16.mxu0 0
    %4393 = vmatpush1.bf16.msra.mxu0 0
    %4394 = vmatprep.subr.bf16.mxu0 0
    %4395 = vmatpush1.bf16.msra.mxu0 0
    %4396 = vmatprep.subr.bf16.mxu0 0
    %4397 = vmatpush1.bf16.msra.mxu0 0
    %4398 = vmatprep.subr.bf16.mxu0 0
    %4399 = vmatpush1.bf16.msra.mxu0 0
    %4400 = vmatprep.subr.bf16.mxu0 0
    %4401 = vmatpush1.bf16.msra.mxu0 0
    %4402 = vmatprep.subr.bf16.mxu0 0
    %4403 = vmatpush1.bf16.msra.mxu0 0
    %4404 = vmatprep.subr.bf16.mxu0 0
    %4405 = vmatpush1.bf16.msra.mxu0 0
    %4406 = vmatprep.subr.bf16.mxu0 0
    %4407 = vmatpush1.bf16.msra.mxu0 0
    %4408 = vmatprep.subr.bf16.mxu0 0
    %4409 = vmatpush1.bf16.msra.mxu0 0
    %4410 = vmatprep.subr.bf16.mxu0 0
    %4411 = vmatpush1.bf16.msra.mxu0 0
    %4412 = vmatprep.subr.bf16.mxu0 0
    %4413 = vmatpush1.bf16.msra.mxu0 0
    %4414 = vmatprep.subr.bf16.mxu0 0
    %4415 = vmatpush1.bf16.msra.mxu0 0
    %4416 = vmatprep.subr.bf16.mxu0 0
    %4417 = vmatpush1.bf16.msra.mxu0 0
    %4418 = vmatprep.mubr.bf16.mxu0 0
    %4419 = vmatmul.mubr.bf16.gmra.mrb[0].mxu0 %v4381
    %v4420 = vpop.f32.mrb[0].mxu0
    %v4421 = vadd.f32 0.0, %v4420
    %v4422 = vpop.f32.mrb[0].mxu0
    %v4423 = vpop.f32.mrb[0].mxu0
    %v4424 = vpop.f32.mrb[0].mxu0
    %4425 = vdwg.mxu0
    %v4426 = vcombine.low %v4099, %v4283
    %v4427 = vcombine.high %v4099, %v4283
    %v4429 = vunpack.c.l.s4 1983009808
    %v4430 = vunpack.c.0.s8 %v4429
    %v4431 = vlaneseq
    %v4432 = vshrl.u32 %v4431, 7
    %v4433 = vsub.s32 %v4430, %v4432
    %v4434 = vrot.slane %v4426, %v4433
    %v4436 = vunpack.c.l.s4 1983009808
    %v4437 = vunpack.c.0.s8 %v4436
    %v4438 = vlaneseq
    %v4439 = vshrl.u32 %v4438, 7
    %v4440 = vsub.s32 %v4437, %v4439
    %v4441 = vrot.slane %v4427, %v4440
    %v4442 = vcombine.low %v4191, %v4375
    %v4443 = vcombine.high %v4191, %v4375
    %v4445 = vunpack.c.l.s4 1983009808
    %v4446 = vunpack.c.0.s8 %v4445
    %v4447 = vlaneseq
    %v4448 = vshrl.u32 %v4447, 7
    %v4449 = vsub.s32 %v4446, %v4448
    %v4450 = vrot.slane %v4442, %v4449
    %v4452 = vunpack.c.l.s4 1983009808
    %v4453 = vunpack.c.0.s8 %v4452
    %v4454 = vlaneseq
    %v4455 = vshrl.u32 %v4454, 7
    %v4456 = vsub.s32 %v4453, %v4455
    %v4457 = vrot.slane %v4443, %v4456
    %v4458 = vcombine.low %v4434, %v4450
    %v4459 = vcombine.high %v4434, %v4450
    %v4461 = vunpack.c.l.s4 1934713408
    %v4462 = vunpack.c.0.s8 %v4461
    %v4463 = vlaneseq
    %v4464 = vshrl.u32 %v4463, 7
    %v4465 = vsub.s32 %v4462, %v4464
    %v4466 = vrot.slane %v4458, %v4465
    %v4468 = vunpack.c.l.s4 1934713408
    %v4469 = vunpack.c.0.s8 %v4468
    %v4470 = vlaneseq
    %v4471 = vshrl.u32 %v4470, 7
    %v4472 = vsub.s32 %v4469, %v4471
    %v4473 = vrot.slane %v4459, %v4472
    %v4474 = vcombine.low %v4441, %v4457
    %v4475 = vcombine.high %v4441, %v4457
    %v4477 = vunpack.c.l.s4 1934713408
    %v4478 = vunpack.c.0.s8 %v4477
    %v4479 = vlaneseq
    %v4480 = vshrl.u32 %v4479, 7
    %v4481 = vsub.s32 %v4478, %v4480
    %v4482 = vrot.slane %v4474, %v4481
    %v4484 = vunpack.c.l.s4 1934713408
    %v4485 = vunpack.c.0.s8 %v4484
    %v4486 = vlaneseq
    %v4487 = vshrl.u32 %v4486, 7
    %v4488 = vsub.s32 %v4485, %v4487
    %v4489 = vrot.slane %v4475, %v4488
    %v4490 = vcombine.high %v4466, 0.0
    %v4491 = vcombine.high %v4473, 0.0
    %v4492 = vcombine.high %v4482, 0.0
    %v4493 = vcombine.high %v4489, 0.0
    %v4494 = vcombine.low %v4145, %v4329
    %v4495 = vcombine.high %v4145, %v4329
    %v4497 = vunpack.c.l.s4 1983009808
    %v4498 = vunpack.c.0.s8 %v4497
    %v4499 = vlaneseq
    %v4500 = vshrl.u32 %v4499, 7
    %v4501 = vsub.s32 %v4498, %v4500
    %v4502 = vrot.slane %v4494, %v4501
    %v4504 = vunpack.c.l.s4 1983009808
    %v4505 = vunpack.c.0.s8 %v4504
    %v4506 = vlaneseq
    %v4507 = vshrl.u32 %v4506, 7
    %v4508 = vsub.s32 %v4505, %v4507
    %v4509 = vrot.slane %v4495, %v4508
    %v4510 = vcombine.low %v4237, %v4421
    %v4511 = vcombine.high %v4237, %v4421
    %v4513 = vunpack.c.l.s4 1983009808
    %v4514 = vunpack.c.0.s8 %v4513
    %v4515 = vlaneseq
    %v4516 = vshrl.u32 %v4515, 7
    %v4517 = vsub.s32 %v4514, %v4516
    %v4518 = vrot.slane %v4510, %v4517
    %v4520 = vunpack.c.l.s4 1983009808
    %v4521 = vunpack.c.0.s8 %v4520
    %v4522 = vlaneseq
    %v4523 = vshrl.u32 %v4522, 7
    %v4524 = vsub.s32 %v4521, %v4523
    %v4525 = vrot.slane %v4511, %v4524
    %v4526 = vcombine.low %v4502, %v4518
    %v4527 = vcombine.high %v4502, %v4518
    %v4529 = vunpack.c.l.s4 1934713408
    %v4530 = vunpack.c.0.s8 %v4529
    %v4531 = vlaneseq
    %v4532 = vshrl.u32 %v4531, 7
    %v4533 = vsub.s32 %v4530, %v4532
    %v4534 = vrot.slane %v4526, %v4533
    %v4536 = vunpack.c.l.s4 1934713408
    %v4537 = vunpack.c.0.s8 %v4536
    %v4538 = vlaneseq
    %v4539 = vshrl.u32 %v4538, 7
    %v4540 = vsub.s32 %v4537, %v4539
    %v4541 = vrot.slane %v4527, %v4540
    %v4542 = vcombine.low %v4509, %v4525
    %v4543 = vcombine.high %v4509, %v4525
    %v4545 = vunpack.c.l.s4 1934713408
    %v4546 = vunpack.c.0.s8 %v4545
    %v4547 = vlaneseq
    %v4548 = vshrl.u32 %v4547, 7
    %v4549 = vsub.s32 %v4546, %v4548
    %v4550 = vrot.slane %v4542, %v4549
    %v4552 = vunpack.c.l.s4 1934713408
    %v4553 = vunpack.c.0.s8 %v4552
    %v4554 = vlaneseq
    %v4555 = vshrl.u32 %v4554, 7
    %v4556 = vsub.s32 %v4553, %v4555
    %v4557 = vrot.slane %v4543, %v4556
    %v4558 = vcombine.high %v4534, 0.0
    %v4559 = vcombine.high %v4541, 0.0
    %v4560 = vcombine.high %v4550, 0.0
    %v4561 = vcombine.high %v4557, 0.0
    %v4562 = vcombine.low %v4466, %v4473
    %v4564 = vunpack.c.l.s4 1983009808
    %v4565 = vunpack.c.0.s8 %v4564
    %v4566 = vlaneseq
    %v4567 = vshrl.u32 %v4566, 7
    %v4568 = vsub.s32 %v4565, %v4567
    %v4569 = vrot.slane %v4562, %v4568
    %v4570 = vcombine.low %v4490, %v4491
    %v4572 = vunpack.c.l.s4 1983009808
    %v4573 = vunpack.c.0.s8 %v4572
    %v4574 = vlaneseq
    %v4575 = vshrl.u32 %v4574, 7
    %v4576 = vsub.s32 %v4573, %v4575
    %v4577 = vrot.slane %v4570, %v4576
    %v4578 = vcombine.low %v4482, %v4489
    %v4580 = vunpack.c.l.s4 1983009808
    %v4581 = vunpack.c.0.s8 %v4580
    %v4582 = vlaneseq
    %v4583 = vshrl.u32 %v4582, 7
    %v4584 = vsub.s32 %v4581, %v4583
    %v4585 = vrot.slane %v4578, %v4584
    %v4586 = vcombine.low %v4492, %v4493
    %v4588 = vunpack.c.l.s4 1983009808
    %v4589 = vunpack.c.0.s8 %v4588
    %v4590 = vlaneseq
    %v4591 = vshrl.u32 %v4590, 7
    %v4592 = vsub.s32 %v4589, %v4591
    %v4593 = vrot.slane %v4586, %v4592
    %v4594 = vcombine.low %v4569, %v4577
    %v4595 = vcombine.high %v4569, %v4577
    %v4597 = vunpack.c.l.s4 1934713408
    %v4598 = vunpack.c.0.s8 %v4597
    %v4599 = vlaneseq
    %v4600 = vshrl.u32 %v4599, 7
    %v4601 = vsub.s32 %v4598, %v4600
    %v4602 = vrot.slane %v4594, %v4601
    %v4604 = vunpack.c.l.s4 1934713408
    %v4605 = vunpack.c.0.s8 %v4604
    %v4606 = vlaneseq
    %v4607 = vshrl.u32 %v4606, 7
    %v4608 = vsub.s32 %v4605, %v4607
    %v4609 = vrot.slane %v4595, %v4608
    %v4610 = vcombine.low %v4585, %v4593
    %v4611 = vcombine.high %v4585, %v4593
    %v4613 = vunpack.c.l.s4 1934713408
    %v4614 = vunpack.c.0.s8 %v4613
    %v4615 = vlaneseq
    %v4616 = vshrl.u32 %v4615, 7
    %v4617 = vsub.s32 %v4614, %v4616
    %v4618 = vrot.slane %v4610, %v4617
    %v4620 = vunpack.c.l.s4 1934713408
    %v4621 = vunpack.c.0.s8 %v4620
    %v4622 = vlaneseq
    %v4623 = vshrl.u32 %v4622, 7
    %v4624 = vsub.s32 %v4621, %v4623
    %v4625 = vrot.slane %v4611, %v4624
    %v4626 = vcombine.low %v4602, %v4618
    %v4627 = vcombine.high %v4602, %v4618
    %v4628 = vcombine.low %v4609, %v4625
    %v4629 = vcombine.high %v4609, %v4625
    %v4630 = vcombine.low %v4534, %v4541
    %v4632 = vunpack.c.l.s4 1983009808
    %v4633 = vunpack.c.0.s8 %v4632
    %v4634 = vlaneseq
    %v4635 = vshrl.u32 %v4634, 7
    %v4636 = vsub.s32 %v4633, %v4635
    %v4637 = vrot.slane %v4630, %v4636
    %v4638 = vcombine.low %v4558, %v4559
    %v4640 = vunpack.c.l.s4 1983009808
    %v4641 = vunpack.c.0.s8 %v4640
    %v4642 = vlaneseq
    %v4643 = vshrl.u32 %v4642, 7
    %v4644 = vsub.s32 %v4641, %v4643
    %v4645 = vrot.slane %v4638, %v4644
    %v4646 = vcombine.low %v4550, %v4557
    %v4648 = vunpack.c.l.s4 1983009808
    %v4649 = vunpack.c.0.s8 %v4648
    %v4650 = vlaneseq
    %v4651 = vshrl.u32 %v4650, 7
    %v4652 = vsub.s32 %v4649, %v4651
    %v4653 = vrot.slane %v4646, %v4652
    %v4654 = vcombine.low %v4560, %v4561
    %v4656 = vunpack.c.l.s4 1983009808
    %v4657 = vunpack.c.0.s8 %v4656
    %v4658 = vlaneseq
    %v4659 = vshrl.u32 %v4658, 7
    %v4660 = vsub.s32 %v4657, %v4659
    %v4661 = vrot.slane %v4654, %v4660
    %v4662 = vcombine.low %v4637, %v4645
    %v4663 = vcombine.high %v4637, %v4645
    %v4665 = vunpack.c.l.s4 1934713408
    %v4666 = vunpack.c.0.s8 %v4665
    %v4667 = vlaneseq
    %v4668 = vshrl.u32 %v4667, 7
    %v4669 = vsub.s32 %v4666, %v4668
    %v4670 = vrot.slane %v4662, %v4669
    %v4672 = vunpack.c.l.s4 1934713408
    %v4673 = vunpack.c.0.s8 %v4672
    %v4674 = vlaneseq
    %v4675 = vshrl.u32 %v4674, 7
    %v4676 = vsub.s32 %v4673, %v4675
    %v4677 = vrot.slane %v4663, %v4676
    %v4678 = vcombine.low %v4653, %v4661
    %v4679 = vcombine.high %v4653, %v4661
    %v4681 = vunpack.c.l.s4 1934713408
    %v4682 = vunpack.c.0.s8 %v4681
    %v4683 = vlaneseq
    %v4684 = vshrl.u32 %v4683, 7
    %v4685 = vsub.s32 %v4682, %v4684
    %v4686 = vrot.slane %v4678, %v4685
    %v4688 = vunpack.c.l.s4 1934713408
    %v4689 = vunpack.c.0.s8 %v4688
    %v4690 = vlaneseq
    %v4691 = vshrl.u32 %v4690, 7
    %v4692 = vsub.s32 %v4689, %v4691
    %v4693 = vrot.slane %v4679, %v4692
    %v4694 = vcombine.low %v4670, %v4686
    %v4695 = vcombine.high %v4670, %v4686
    %v4696 = vcombine.low %v4677, %v4693
    %v4697 = vcombine.high %v4677, %v4693
    %4700 = vrot.lane.b32.xlu0 %v4627, 8
    %v4701 = vpop.permute.xlu0 %4700
    %4702 = vrot.lane.b32.xlu0 %v4695, 8
    %v4703 = vpop.permute.xlu0 %4702
    %4708 = vrot.lane.b32.xlu0 %v4628, 16
    %v4709 = vpop.permute.xlu0 %4708
    %4710 = vrot.lane.b32.xlu0 %v4696, 16
    %v4711 = vpop.permute.xlu0 %4710
    %4716 = vrot.lane.b32.xlu0 %v4629, 24
    %v4717 = vpop.permute.xlu0 %4716
    %4718 = vrot.lane.b32.xlu0 %v4697, 24
    %v4719 = vpop.permute.xlu0 %4718
    %v4722 = vsel %vm1139, %v4626, %v4701
    %v4723 = vsel %vm1139, %v4694, %v4703
    %v4724 = vsel %vm2279, %v4722, %v4709
    %v4725 = vsel %vm2279, %v4723, %v4711
    %v4726 = vsel %vm2282, %v4724, %v4717
    %v4727 = vsel %vm2282, %v4725, %v4719
    %s4728 = scalar_lea.vmem %s6, 16
    %v4729 = vld [vmem:[%s4728] sm:$0xf]
    %v4730 = vld [vmem:[%s4728 + $0x4] sm:$0xf]
    %v4731 = vld [vmem:[%s4728 + $0x8] sm:$0xf]
    %v4732 = vld [vmem:[%s4728 + $0xc] sm:$0xf]
    %v4733 = vpack.c.bf16 %v4727, %v4726
    %s4734 = scalar_lea.vmem %s7, 1
    %v4735 = vld [vmem:[%s4734] sm:$0x1]
    %v4737 = vlaneseq
    %v4738 = vshrl.u32 %v4737, 7
    %v4739 = vsub.s32 0, %v4738
    %v4740 = vrot.slane %v4735, %v4739
    %v4746 = vunpack.c.l.b16 %v4729
    %v4747 = vunpack.c.l.b16 %v4730
    %v4748 = vunpack.c.l.b16 %v4731
    %v4749 = vunpack.c.l.b16 %v4732
    %v4750 = vpack.c.b16 %v4747, %v4746
    %v4751 = vpack.c.b16 %v4749, %v4748
    %v4755 = vsel %vm71, %v4733, 0
    %4757 = vmatprep.subr.bf16.mxu0 0
    %4758 = vmatpush1.bf16.msra.mxu0 %v4750
    %4759 = vmatprep.subr.bf16.mxu0 0
    %4760 = vmatpush1.bf16.msra.mxu0 %v4751
    %4761 = vmatprep.subr.bf16.mxu0 0
    %4762 = vmatpush1.bf16.msra.mxu0 0
    %4763 = vmatprep.subr.bf16.mxu0 0
    %4764 = vmatpush1.bf16.msra.mxu0 0
    %4765 = vmatprep.subr.bf16.mxu0 0
    %4766 = vmatpush1.bf16.msra.mxu0 0
    %4767 = vmatprep.subr.bf16.mxu0 0
    %4768 = vmatpush1.bf16.msra.mxu0 0
    %4769 = vmatprep.subr.bf16.mxu0 0
    %4770 = vmatpush1.bf16.msra.mxu0 0
    %4771 = vmatprep.subr.bf16.mxu0 0
    %4772 = vmatpush1.bf16.msra.mxu0 0
    %4773 = vmatprep.subr.bf16.mxu0 0
    %4774 = vmatpush1.bf16.msra.mxu0 0
    %4775 = vmatprep.subr.bf16.mxu0 0
    %4776 = vmatpush1.bf16.msra.mxu0 0
    %4777 = vmatprep.subr.bf16.mxu0 0
    %4778 = vmatpush1.bf16.msra.mxu0 0
    %4779 = vmatprep.subr.bf16.mxu0 0
    %4780 = vmatpush1.bf16.msra.mxu0 0
    %4781 = vmatprep.subr.bf16.mxu0 0
    %4782 = vmatpush1.bf16.msra.mxu0 0
    %4783 = vmatprep.subr.bf16.mxu0 0
    %4784 = vmatpush1.bf16.msra.mxu0 0
    %4785 = vmatprep.subr.bf16.mxu0 0
    %4786 = vmatpush1.bf16.msra.mxu0 0
    %4787 = vmatprep.subr.bf16.mxu0 0
    %4788 = vmatpush1.bf16.msra.mxu0 0
    %4789 = vmatprep.mubr.bf16.mxu0 0
    %4790 = vmatmul.mubr.bf16.gmra.mrb[0].mxu0 %v4755
    %v4791 = vpop.f32.mrb[0].mxu0
    %v4792 = vadd.f32 %v4740, %v4791
    %v4793 = vpop.f32.mrb[0].mxu0
    %v4794 = vpop.f32.mrb[0].mxu0
    %v4795 = vadd.f32 %v4740, %v4794
    %v4796 = vpop.f32.mrb[0].mxu0
    %4797 = vdwg.mxu0
    %v4798 = vadd.f32 %v2614, %v4792
    %v4799 = vadd.f32 %v2615, %v4795
    %s4800 = scalar_lea.vmem %s8, 1
    %v4801 = vld [vmem:[%s4800] sm:$0x1]
    %s4802 = scalar_lea.vmem %s9, 1
    %v4803 = vld [vmem:[%s4802] sm:$0x1]
    %v4804 = vsel %vm71, %v4798, 0.0
    %4805 = vadd.xlane.f32.xlu0 %v4804
    %v4806 = vpop.xlane.xlu0 %4805
    %v4807 = vsel %vm71, %v4799, 0.0
    %4808 = vadd.xlane.f32.xlu0 %v4807
    %v4809 = vpop.xlane.xlu0 %4808
    %v4810 = vmul.f32 %v4806, %v78
    %v4811 = vmul.f32 %v4809, %v78
    %v4812 = vsub.f32 %v4798, %v4810
    %v4813 = vsub.f32 %v4799, %v4811
    %v4814 = vmul.f32 %v4812, %v4812
    %v4815 = vmul.f32 %v4813, %v4813
    %v4816 = vsel %vm71, %v4814, 0.0
    %4817 = vadd.xlane.f32.xlu0 %v4816
    %v4818 = vpop.xlane.xlu0 %4817
    %v4819 = vsel %vm71, %v4815, 0.0
    %4820 = vadd.xlane.f32.xlu0 %v4819
    %v4821 = vpop.xlane.xlu0 %4820
    %v4822 = vmul.f32 %v4818, %v78
    %v4823 = vmul.f32 %v4821, %v78
    %v4824 = vadd.f32 %v4822, 1e-12
    %v4825 = vadd.f32 %v4823, 1e-12
    %v4826 = vrsqrt.pop %v4824
    %v4827 = vrsqrt.pop %v4825
    %v4828 = vmul.f32 %v4812, %v4826
    %v4829 = vmul.f32 %v4813, %v4827
    %v4831 = vlaneseq
    %v4832 = vshrl.u32 %v4831, 7
    %v4833 = vsub.s32 0, %v4832
    %v4834 = vrot.slane %v4801, %v4833
    %v4836 = vmul.f32 %v4828, %v4834
    %v4837 = vmul.f32 %v4829, %v4834
    %v4839 = vlaneseq
    %v4840 = vshrl.u32 %v4839, 7
    %v4841 = vsub.s32 0, %v4840
    %v4842 = vrot.slane %v4803, %v4841
    %v4844 = vadd.f32 %v4836, %v4842
    %v4845 = vadd.f32 %v4837, %v4842
    %s4846 = scalar_lea.vmem %s10, 16
    %v4847 = vld [vmem:[%s4846] sm:$0xf]
    %v4848 = vld [vmem:[%s4846 + $0x4] sm:$0xf]
    %v4849 = vld [vmem:[%s4846 + $0x8] sm:$0xf]
    %v4850 = vld [vmem:[%s4846 + $0xc] sm:$0xf]
    %v4851 = vpack.c.bf16 %v4845, %v4844
    %s4852 = scalar_lea.vmem %s11, 1
    %v4853 = vld [vmem:[%s4852] sm:$0x1]
    %v4855 = vlaneseq
    %v4856 = vshrl.u32 %v4855, 7
    %v4857 = vsub.s32 0, %v4856
    %v4858 = vrot.slane %v4853, %v4857
    %v4864 = vunpack.c.l.b16 %v4847
    %v4865 = vunpack.c.l.b16 %v4848
    %v4866 = vunpack.c.l.b16 %v4849
    %v4867 = vunpack.c.l.b16 %v4850
    %v4868 = vpack.c.b16 %v4865, %v4864
    %v4869 = vpack.c.b16 %v4867, %v4866
    %v4873 = vsel %vm71, %v4851, 0
    %4875 = vmatprep.subr.bf16.mxu0 0
    %4876 = vmatpush1.bf16.msra.mxu0 %v4868
    %4877 = vmatprep.subr.bf16.mxu0 0
    %4878 = vmatpush1.bf16.msra.mxu0 %v4869
    %4879 = vmatprep.subr.bf16.mxu0 0
    %4880 = vmatpush1.bf16.msra.mxu0 0
    %4881 = vmatprep.subr.bf16.mxu0 0
    %4882 = vmatpush1.bf16.msra.mxu0 0
    %4883 = vmatprep.subr.bf16.mxu0 0
    %4884 = vmatpush1.bf16.msra.mxu0 0
    %4885 = vmatprep.subr.bf16.mxu0 0
    %4886 = vmatpush1.bf16.msra.mxu0 0
    %4887 = vmatprep.subr.bf16.mxu0 0
    %4888 = vmatpush1.bf16.msra.mxu0 0
    %4889 = vmatprep.subr.bf16.mxu0 0
    %4890 = vmatpush1.bf16.msra.mxu0 0
    %4891 = vmatprep.subr.bf16.mxu0 0
    %4892 = vmatpush1.bf16.msra.mxu0 0
    %4893 = vmatprep.subr.bf16.mxu0 0
    %4894 = vmatpush1.bf16.msra.mxu0 0
    %4895 = vmatprep.subr.bf16.mxu0 0
    %4896 = vmatpush1.bf16.msra.mxu0 0
    %4897 = vmatprep.subr.bf16.mxu0 0
    %4898 = vmatpush1.bf16.msra.mxu0 0
    %4899 = vmatprep.subr.bf16.mxu0 0
    %4900 = vmatpush1.bf16.msra.mxu0 0
    %4901 = vmatprep.subr.bf16.mxu0 0
    %4902 = vmatpush1.bf16.msra.mxu0 0
    %4903 = vmatprep.subr.bf16.mxu0 0
    %4904 = vmatpush1.bf16.msra.mxu0 0
    %4905 = vmatprep.subr.bf16.mxu0 0
    %4906 = vmatpush1.bf16.msra.mxu0 0
    %4907 = vmatprep.mubr.bf16.mxu0 0
    %4908 = vmatmul.mubr.bf16.gmra.mrb[0].mxu0 %v4873
    %v4909 = vpop.f32.mrb[0].mxu0
    %v4910 = vadd.f32 %v4858, %v4909
    %v4911 = vpop.f32.mrb[0].mxu0
    %v4912 = vpop.f32.mrb[0].mxu0
    %v4913 = vadd.f32 %v4858, %v4912
    %v4914 = vpop.f32.mrb[0].mxu0
    %4915 = vdwg.mxu0
    %v4916 = vmul.f32 %v4910, %v4910
    %v4917 = vmul.f32 %v4913, %v4913
    %v4918 = vmul.f32 %v4910, %v4916
    %v4919 = vmul.f32 %v4913, %v4917
    %v4920 = vmul.f32 %v4918, 0.044715
    %v4921 = vmul.f32 %v4919, 0.044715
    %v4922 = vadd.f32 %v4910, %v4920
    %v4923 = vadd.f32 %v4913, %v4921
    %v4924 = vmul.f32 %v4922, 0.7978846
    %v4925 = vmul.f32 %v4923, 0.7978846
    %v4926 = vtanh.pop %v4924
    %v4927 = vtanh.pop %v4925
    %v4928 = vadd.f32 %v4926, 1.0
    %v4929 = vadd.f32 %v4927, 1.0
    %v4930 = vmul.f32 %v4928, 0.5
    %v4931 = vmul.f32 %v4929, 0.5
    %v4932 = vmul.f32 %v4910, %v4930
    %v4933 = vmul.f32 %v4913, %v4931
    %s4934 = scalar_lea.vmem %s12, 32
    %v4935 = vld [vmem:[%s4934] sm:$0xf]
    %v4936 = vld [vmem:[%s4934 + $0x4] sm:$0xf]
    %v4937 = vld [vmem:[%s4934 + $0x8] sm:$0xf]
    %v4938 = vld [vmem:[%s4934 + $0xc] sm:$0xf]
    %v4939 = vld [vmem:[%s4934 + $0x10] sm:$0xf]
    %v4940 = vld [vmem:[%s4934 + $0x14] sm:$0xf]
    %v4941 = vld [vmem:[%s4934 + $0x18] sm:$0xf]
    %v4942 = vld [vmem:[%s4934 + $0x1c] sm:$0xf]
    %v4943 = vpack.c.bf16 %v4933, %v4932
    %s4944 = scalar_lea.vmem %s13, 1
    %v4945 = vld [vmem:[%s4944] sm:$0x1]
    %v4947 = vlaneseq
    %v4948 = vshrl.u32 %v4947, 7
    %v4949 = vsub.s32 0, %v4948
    %v4950 = vrot.slane %v4945, %v4949
    %v4960 = vunpack.c.l.b16 %v4935
    %v4961 = vunpack.c.l.b16 %v4936
    %v4962 = vunpack.c.l.b16 %v4937
    %v4963 = vunpack.c.l.b16 %v4938
    %v4964 = vunpack.c.l.b16 %v4939
    %v4965 = vunpack.c.l.b16 %v4940
    %v4966 = vunpack.c.l.b16 %v4941
    %v4967 = vunpack.c.l.b16 %v4942
    %v4968 = vpack.c.b16 %v4961, %v4960
    %v4969 = vpack.c.b16 %v4963, %v4962
    %v4970 = vpack.c.b16 %v4965, %v4964
    %v4971 = vpack.c.b16 %v4967, %v4966
    %v4977 = vsel %vm2525, %v4943, 0
    %4979 = vmatprep.subr.bf16.mxu0 0
    %4980 = vmatpush1.bf16.msra.mxu0 %v4968
    %4981 = vmatprep.subr.bf16.mxu0 0
    %4982 = vmatpush1.bf16.msra.mxu0 %v4969
    %4983 = vmatprep.subr.bf16.mxu0 0
    %4984 = vmatpush1.bf16.msra.mxu0 %v4970
    %4985 = vmatprep.subr.bf16.mxu0 0
    %4986 = vmatpush1.bf16.msra.mxu0 %v4971
    %4987 = vmatprep.subr.bf16.mxu0 0
    %4988 = vmatpush1.bf16.msra.mxu0 0
    %4989 = vmatprep.subr.bf16.mxu0 0
    %4990 = vmatpush1.bf16.msra.mxu0 0
    %4991 = vmatprep.subr.bf16.mxu0 0
    %4992 = vmatpush1.bf16.msra.mxu0 0
    %4993 = vmatprep.subr.bf16.mxu0 0
    %4994 = vmatpush1.bf16.msra.mxu0 0
    %4995 = vmatprep.subr.bf16.mxu0 0
    %4996 = vmatpush1.bf16.msra.mxu0 0
    %4997 = vmatprep.subr.bf16.mxu0 0
    %4998 = vmatpush1.bf16.msra.mxu0 0
    %4999 = vmatprep.subr.bf16.mxu0 0
    %5000 = vmatpush1.bf16.msra.mxu0 0
    %5001 = vmatprep.subr.bf16.mxu0 0
    %5002 = vmatpush1.bf16.msra.mxu0 0
    %5003 = vmatprep.subr.bf16.mxu0 0
    %5004 = vmatpush1.bf16.msra.mxu0 0
    %5005 = vmatprep.subr.bf16.mxu0 0
    %5006 = vmatpush1.bf16.msra.mxu0 0
    %5007 = vmatprep.subr.bf16.mxu0 0
    %5008 = vmatpush1.bf16.msra.mxu0 0
    %5009 = vmatprep.subr.bf16.mxu0 0
    %5010 = vmatpush1.bf16.msra.mxu0 0
    %5011 = vmatprep.mubr.bf16.mxu0 0
    %5012 = vmatmul.mubr.bf16.gmra.mrb[0].mxu0 %v4977
    %v5013 = vpop.f32.mrb[0].mxu0
    %v5014 = vadd.f32 %v4950, %v5013
    %v5015 = vpop.f32.mrb[0].mxu0
    %v5016 = vpop.f32.mrb[0].mxu0
    %v5017 = vadd.f32 %v4950, %v5016
    %v5018 = vpop.f32.mrb[0].mxu0
    %5019 = vdwg.mxu0
    %v5020 = vadd.f32 %v4844, %v5014
    %v5021 = vadd.f32 %v4845, %v5017
    %s5022 = scalar_lea.vmem %s14, 1
    %v5023 = vld [vmem:[%s5022] sm:$0x1]
    %s5024 = scalar_lea.vmem %s15, 1
    %v5025 = vld [vmem:[%s5024] sm:$0x1]
    %v5026 = vsel %vm71, %v5020, 0.0
    %5027 = vadd.xlane.f32.xlu0 %v5026
    %v5028 = vpop.xlane.xlu0 %5027
    %v5029 = vsel %vm71, %v5021, 0.0
    %5030 = vadd.xlane.f32.xlu0 %v5029
    %v5031 = vpop.xlane.xlu0 %5030
    %v5032 = vmul.f32 %v5028, %v78
    %v5033 = vmul.f32 %v5031, %v78
    %v5034 = vsub.f32 %v5020, %v5032
    %v5035 = vsub.f32 %v5021, %v5033
    %v5036 = vmul.f32 %v5034, %v5034
    %v5037 = vmul.f32 %v5035, %v5035
    %v5038 = vsel %vm71, %v5036, 0.0
    %5039 = vadd.xlane.f32.xlu0 %v5038
    %v5040 = vpop.xlane.xlu0 %5039
    %v5041 = vsel %vm71, %v5037, 0.0
    %5042 = vadd.xlane.f32.xlu0 %v5041
    %v5043 = vpop.xlane.xlu0 %5042
    %v5044 = vmul.f32 %v5040, %v78
    %v5045 = vmul.f32 %v5043, %v78
    %v5046 = vadd.f32 %v5044, 1e-12
    %v5047 = vadd.f32 %v5045, 1e-12
    %v5048 = vrsqrt.pop %v5046
    %v5049 = vrsqrt.pop %v5047
    %v5050 = vmul.f32 %v5034, %v5048
    %v5051 = vmul.f32 %v5035, %v5049
    %v5053 = vlaneseq
    %v5054 = vshrl.u32 %v5053, 7
    %v5055 = vsub.s32 0, %v5054
    %v5056 = vrot.slane %v5023, %v5055
    %v5058 = vmul.f32 %v5050, %v5056
    %v5059 = vmul.f32 %v5051, %v5056
    %v5061 = vlaneseq
    %v5062 = vshrl.u32 %v5061, 7
    %v5063 = vsub.s32 0, %v5062
    %v5064 = vrot.slane %v5025, %v5063
    %v5066 = vadd.f32 %v5058, %v5064
    %v5067 = vadd.f32 %v5059, %v5064
    %v5068 = vld [vmem:[%s16] sm:$0xf]
    %v5069 = vld [vmem:[%s16 + $0x4] sm:$0xf]
    %v5070 = vld [vmem:[%s16 + $0x8] sm:$0xf]
    %v5071 = vld [vmem:[%s16 + $0xc] sm:$0xf]
    %v5072 = vpack.c.bf16 %v5066, %v5066
    %v5073 = vpack.c.bf16 %v5067, %v5067
    %v5074 = vld [vmem:[%s17] sm:$0x1]
    %v5076 = vlaneseq
    %v5077 = vshrl.u32 %v5076, 7
    %v5078 = vsub.s32 0, %v5077
    %v5079 = vrot.slane %v5074, %v5078
    %v5083 = vunpack.c.l.b16 %v5072
    %v5084 = vunpack.c.l.b16 %v5073
    %v5085 = vrot.slane %v5084, 7
    %vm5086 = vcmask 1041409
    %v5087 = vsel %vm5086, %v5085, %v5083
    %v5088 = vpack.c.b16 %v5087, %v5087
    %v5093 = vunpack.c.l.b16 %v5068
    %v5094 = vunpack.c.l.b16 %v5069
    %v5095 = vunpack.c.l.b16 %v5070
    %v5096 = vunpack.c.l.b16 %v5071
    %v5097 = vpack.c.b16 %v5094, %v5093
    %v5098 = vpack.c.b16 %v5096, %v5095
    %v5102 = vsel %vm71, %v5088, 0
    %5104 = vmatprep.subr.bf16.mxu0 0
    %5105 = vmatpush1.bf16.msra.mxu0 %v5097
    %5106 = vmatprep.subr.bf16.mxu0 0
    %5107 = vmatpush1.bf16.msra.mxu0 %v5098
    %5108 = vmatprep.subr.bf16.mxu0 0
    %5109 = vmatpush1.bf16.msra.mxu0 0
    %5110 = vmatprep.subr.bf16.mxu0 0
    %5111 = vmatpush1.bf16.msra.mxu0 0
    %5112 = vmatprep.subr.bf16.mxu0 0
    %5113 = vmatpush1.bf16.msra.mxu0 0
    %5114 = vmatprep.subr.bf16.mxu0 0
    %5115 = vmatpush1.bf16.msra.mxu0 0
    %5116 = vmatprep.subr.bf16.mxu0 0
    %5117 = vmatpush1.bf16.msra.mxu0 0
    %5118 = vmatprep.subr.bf16.mxu0 0
    %5119 = vmatpush1.bf16.msra.mxu0 0
    %5120 = vmatprep.subr.bf16.mxu0 0
    %5121 = vmatpush1.bf16.msra.mxu0 0
    %5122 = vmatprep.subr.bf16.mxu0 0
    %5123 = vmatpush1.bf16.msra.mxu0 0
    %5124 = vmatprep.subr.bf16.mxu0 0
    %5125 = vmatpush1.bf16.msra.mxu0 0
    %5126 = vmatprep.subr.bf16.mxu0 0
    %5127 = vmatpush1.bf16.msra.mxu0 0
    %5128 = vmatprep.subr.bf16.mxu0 0
    %5129 = vmatpush1.bf16.msra.mxu0 0
    %5130 = vmatprep.subr.bf16.mxu0 0
    %5131 = vmatpush1.bf16.msra.mxu0 0
    %5132 = vmatprep.subr.bf16.mxu0 0
    %5133 = vmatpush1.bf16.msra.mxu0 0
    %5134 = vmatprep.subr.bf16.mxu0 0
    %5135 = vmatpush1.bf16.msra.mxu0 0
    %5136 = vmatprep.mubr.bf16.mxu0 0
    %5137 = vmatmul.mubr.bf16.gmra.mrb[0].mxu0 %v5102
    %v5138 = vpop.f32.mrb[0].mxu0
    %v5139 = vadd.f32 %v5079, %v5138
    %v5140 = vpop.f32.mrb[0].mxu0
    %v5141 = vpop.f32.mrb[0].mxu0
    %v5142 = vpop.f32.mrb[0].mxu0
    %5143 = vdwg.mxu0
    %v5144 = vtanh.pop %v5139
    %v5145 = vld [vmem:[%s18] sm:$0xf]
    %v5146 = vld [vmem:[%s18 + $0x4] sm:$0xf]
    %v5147 = vld [vmem:[%s18 + $0x8] sm:$0xf]
    %v5148 = vld [vmem:[%s18 + $0xc] sm:$0xf]
    %v5149 = vpack.c.bf16 %v5144, %v5144
    %v5150 = vld [vmem:[%s19] sm:$0x1]
    %v5152 = vlaneseq
    %v5153 = vshrl.u32 %v5152, 7
    %v5154 = vsub.s32 0, %v5153
    %v5155 = vrot.slane %v5150, %v5154
    %v5161 = vunpack.c.l.b16 %v5145
    %v5162 = vunpack.c.l.b16 %v5146
    %v5163 = vunpack.c.l.b16 %v5147
    %v5164 = vunpack.c.l.b16 %v5148
    %v5165 = vpack.c.b16 %v5162, %v5161
    %v5166 = vpack.c.b16 %v5164, %v5163
    %v5170 = vsel %vm71, %v5149, 0
    %5172 = vmatprep.subr.bf16.mxu0 0
    %5173 = vmatpush1.bf16.msra.mxu0 %v5165
    %5174 = vmatprep.subr.bf16.mxu0 0
    %5175 = vmatpush1.bf16.msra.mxu0 %v5166
    %5176 = vmatprep.subr.bf16.mxu0 0
    %5177 = vmatpush1.bf16.msra.mxu0 0
    %5178 = vmatprep.subr.bf16.mxu0 0
    %5179 = vmatpush1.bf16.msra.mxu0 0
    %5180 = vmatprep.subr.bf16.mxu0 0
    %5181 = vmatpush1.bf16.msra.mxu0 0
    %5182 = vmatprep.subr.bf16.mxu0 0
    %5183 = vmatpush1.bf16.msra.mxu0 0
    %5184 = vmatprep.subr.bf16.mxu0 0
    %5185 = vmatpush1.bf16.msra.mxu0 0
    %5186 = vmatprep.subr.bf16.mxu0 0
    %5187 = vmatpush1.bf16.msra.mxu0 0
    %5188 = vmatprep.subr.bf16.mxu0 0
    %5189 = vmatpush1.bf16.msra.mxu0 0
    %5190 = vmatprep.subr.bf16.mxu0 0
    %5191 = vmatpush1.bf16.msra.mxu0 0
    %5192 = vmatprep.subr.bf16.mxu0 0
    %5193 = vmatpush1.bf16.msra.mxu0 0
    %5194 = vmatprep.subr.bf16.mxu0 0
    %5195 = vmatpush1.bf16.msra.mxu0 0
    %5196 = vmatprep.subr.bf16.mxu0 0
    %5197 = vmatpush1.bf16.msra.mxu0 0
    %5198 = vmatprep.subr.bf16.mxu0 0
    %5199 = vmatpush1.bf16.msra.mxu0 0
    %5200 = vmatprep.subr.bf16.mxu0 0
    %5201 = vmatpush1.bf16.msra.mxu0 0
    %5202 = vmatprep.subr.bf16.mxu0 0
    %5203 = vmatpush1.bf16.msra.mxu0 0
    %5204 = vmatprep.mubr.bf16.mxu0 0
    %5205 = vmatmul.mubr.bf16.gmra.mrb[0].mxu0 %v5170
    %v5206 = vpop.f32.mrb[0].mxu0
    %v5207 = vadd.f32 %v5155, %v5206
    %v5208 = vpop.f32.mrb[0].mxu0
    %v5209 = vpop.f32.mrb[0].mxu0
    %v5210 = vpop.f32.mrb[0].mxu0
    %5211 = vdwg.mxu0
    %vm5212 = vcmask 156672
    %5213 = vst.msk [vmem:[#allocation2] sm:$0x3] %vm5212, %v5207
    // Predicated region
    $region82: #{topic_model_forward.1} parent=1 // pred_check
      _
    $region83: #{topic_model_forward.1} parent=1 // pred_check_branch
      %5215 = sbr.rel (0) target = $region85
    $region84: #{topic_model_forward.1} parent=1 // pred_region
      %s5217 = ssub.s32 32, 32
      %5218 = vsyncadd [#allocation3], %s5217
      %s5220 = sshll.u32 [#allocation2], 4
      %s5221 = int_to_ptr.vmem [resolvable:$true] %s5220
      %5223 = dma.vmem_to_hbm [thread:$0]  %s5221, 32, %s20, [#allocation3]
    $region85: #{topic_model_forward.1} parent=1 // pred_fallthru
      _
    // Predicated region
    $region86: #{topic_model_forward.1} parent=1 // pred_check
      _
    $region87: #{topic_model_forward.1} parent=1 // pred_check_branch
      %5225 = sbr.rel (0) target = $region89
    $region88: #{topic_model_forward.1} parent=1 // pred_region
      %5226 = dma.done [#allocation3], 32
    $region89: #{topic_model_forward.1} parent=1 // pred_fallthru
      _
    %5227 = vsyncpa [#allocation3], 1

</llo_original>
